<compile_context>
chip_gen: v7x
topology: tpu7x:2x2x1
jax: 0.10.0
libtpu: 0.0.40
codegen_flags: <defaults>
</compile_context>

<pallas_src>
import math
import functools

import jax
import jax.numpy as jnp
from jax.experimental import pallas as pl
from jax.experimental.pallas import tpu as pltpu


# ----------------------------- in-kernel helpers -----------------------------

def _layer_norm(x, gamma, beta, eps=1e-6):        # nn.LayerNorm(d_model, eps=1e-06)
    mean = jnp.mean(x, axis=-1, keepdims=True)
    var = jnp.mean((x - mean) ** 2, axis=-1, keepdims=True)
    return (x - mean) * jax.lax.rsqrt(var + eps) * gamma + beta


def _gelu(x):                                      # tanh form, matches model.py::gelu
    return 0.5 * x * (1.0 + jnp.tanh(math.sqrt(2.0 / math.pi)
                                     * (x + 0.044715 * x ** 3)))


# --------------------------------- kernel ------------------------------------
#
# Packed small-parameter layout (pvec rows, all length D):
#   0: bq  1: bk  2: bv  3: bo  4: ga  5: ba  6: gf  7: bf  8: b2
# b1 (length d_ff) is passed separately as (1, d_ff).

def _encoder_layer_kernel(*refs, heads, apply_ln, self_case, d_ff_chunk):
    if self_case:
        (xb_ref, wqkv_ref, wo_ref, w1_ref, w2_ref, pvec_ref, b1_ref, out_ref) = refs
    else:
        (xb_ref, xa_ref, wqkv_ref, wo_ref, w1_ref, w2_ref,
         pvec_ref, b1_ref, out_ref) = refs

    bf16 = jnp.bfloat16
    Bt, S, D = xb_ref.shape
    M = Bt * S
    dh = D // heads
    d_ff = w1_ref.shape[1]

    bq = pvec_ref[0]; bk = pvec_ref[1]; bv = pvec_ref[2]; bo = pvec_ref[3]
    ga = pvec_ref[4]; ba = pvec_ref[5]; gf = pvec_ref[6]; bff = pvec_ref[7]
    b2 = pvec_ref[8]

    # Flatten (Bt, S, D) -> (Bt*S, D): every matmul below sees M = Bt*S rows.
    xb = xb_ref[...].reshape(M, D)
    b_proc = _layer_norm(xb, ga, ba) if apply_ln else xb   # iter != 0 -> LayerNorm

    # Static branch (resolved on the host); fused QKV projection, bf16 MXU, f32 acc.
    if self_case:
        qkv = jnp.dot(b_proc.astype(bf16), wqkv_ref[...],
                      preferred_element_type=jnp.float32)          # (M, 3D)
        q = qkv[:, 0 * D:1 * D] + bq
        k = qkv[:, 1 * D:2 * D] + bk
        v = qkv[:, 2 * D:3 * D] + bv
        res = b_proc
    else:
        xa = xa_ref[...].reshape(M, D)
        q = jnp.dot(b_proc.astype(bf16), wqkv_ref[:, 0 * D:1 * D],
                    preferred_element_type=jnp.float32) + bq
        kv = jnp.dot(xa.astype(bf16), wqkv_ref[:, 1 * D:3 * D],
                     preferred_element_type=jnp.float32)            # (M, 2D)
        k = kv[:, 0 * D:1 * D] + bk
        v = kv[:, 1 * D:2 * D] + bv
        res = xa

    q = q * (1.0 / math.sqrt(dh))

    # Attention: static loop over heads with lane-aligned slices (dh multiple of 128
    # -> free slices, no transposes).  Scores stay in f32; softmax denominator via
    # EUP approximate reciprocal (separate issue slot).
    # TODO(synk): for production S (>=1k) replace the materialized (Bt, S, S) scores
    # with a kv-tiled online-softmax (flash) loop so VMEM stays O(S*dh).
    q3 = q.reshape(Bt, S, D)
    k3 = k.reshape(Bt, S, D)
    v3 = v.reshape(Bt, S, D)
    ctx_heads = []
    for h in range(heads):
        sl = slice(h * dh, (h + 1) * dh)
        qh = q3[:, :, sl].astype(bf16)
        kh = k3[:, :, sl].astype(bf16)
        vh = v3[:, :, sl].astype(bf16)
        s = jnp.einsum('bqd,bkd->bqk', qh, kh,
                       preferred_element_type=jnp.float32)          # (Bt, S, S) f32
        s = s - jnp.max(s, axis=-1, keepdims=True)
        p = jnp.exp(s)
        attn = p * pl.reciprocal(jnp.sum(p, axis=-1, keepdims=True), approx=True)
        ctx_heads.append(jnp.einsum('bqk,bkd->bqd', attn.astype(bf16), vh,
                                    preferred_element_type=jnp.float32))
    context = (ctx_heads[0] if heads == 1
               else jnp.concatenate(ctx_heads, axis=-1)).reshape(M, D)

    attn_out = jnp.dot(context.astype(bf16), wo_ref[...],
                       preferred_element_type=jnp.float32) + bo
    out = attn_out + res                  # dropout(context) == context in eval mode

    # Positionwise feed-forward: w_2(gelu(w_1(LN(out)))) + out, chunked along d_ff so
    # the f32 GELU intermediate is bounded (<= M * d_ff_chunk * 4 bytes).
    ln_out = _layer_norm(out, gf, bff).astype(bf16)
    acc = out + b2
    n_chunks = (d_ff + d_ff_chunk - 1) // d_ff_chunk
    for c in range(n_chunks):
        c0 = c * d_ff_chunk
        c1 = min(d_ff, c0 + d_ff_chunk)
        h1 = jnp.dot(ln_out, w1_ref[:, c0:c1],
                     preferred_element_type=jnp.float32) + b1_ref[:, c0:c1]
        acc = acc + jnp.dot(_gelu(h1).astype(bf16), w2_ref[c0:c1, :],
                            preferred_element_type=jnp.float32)
    out_ref[...] = acc.reshape(Bt, S, D).astype(out_ref.dtype)


# --------------------------------- wrapper ------------------------------------

def prepare_weights(params):
    """Hoisted (call-once) weight prep: transpose to (in,out), fuse QKV, cast bf16."""
    bf16 = jnp.bfloat16
    wqkv = jnp.concatenate([params["wq"].T, params["wk"].T, params["wv"].T],
                           axis=1).astype(bf16)                      # (D, 3D)
    pvec = jnp.stack([params["bq"], params["bk"], params["bv"], params["bo"],
                      params["ga"], params["ba"], params["gf"], params["bf"],
                      params["b2"]], axis=0).astype(jnp.float32)     # (9, D)
    return dict(
        wqkv=wqkv,
        wo=params["wo"].T.astype(bf16),
        w1=params["w1"].T.astype(bf16),
        w2=params["w2"].T.astype(bf16),
        pvec=pvec,
        b1=params["b1"].reshape(1, -1).astype(jnp.float32),
    )


def _choose_block_b(B, S):
    """Largest divisor of B s.t. block_b*S feeds the MXU, while keeping >=2 grid
    steps when B >= 2 (v7x has 2 TensorCores)."""
    target = max(1, -(-256 // S))
    divisors = [d for d in range(1, B + 1) if B % d == 0]
    block_b = max(d for d in divisors if d <= min(max(target, 1), B))
    if B // block_b < 2 and B >= 2:
        block_b = max(d for d in divisors if d <= max(1, B // 2))
    return block_b


def _vmem_limit_bytes(block_b, S, D, d_ff, d_ff_chunk, single_buffer_weights):
    bf, f32 = 2, 4
    M = block_b * S
    w = bf * (3 * D * D + D * D + 2 * D * d_ff)
    w *= 1 if single_buffer_weights else 2
    acts = 6 * f32 * block_b * S * D                       # in/out (double-buffered)
    inter = f32 * (4 * M * D + 2 * M * d_ff_chunk + 2 * block_b * S * S)
    est = int(1.5 * (w + acts + inter)) + (2 << 20)
    # Stay under v7x's 64 MiB physical VMEM; v5e/v6e (128 MiB) could go higher.
    return min(max(est, 32 << 20), 64 << 20)


def encoder_layer_forward(prep, it, inputs_a, inputs_b, heads, self_case=None,
                          block_b=None, d_ff_chunk=None, out_dtype=jnp.float32):
    """Forward of TransformerEncoderLayer.

    `it` must be a Python int (static).  `self_case` replaces the PyTorch
    `inputs_a.equal(inputs_b)` branch; if None a host-side comparison is used
    (device sync, breaks jit — prefer passing the flag).  `prep` comes from
    prepare_weights() and should be reused across calls.
    """
    B, S, D = inputs_b.shape
    d_ff = prep["w1"].shape[1]

    if self_case is None:
        self_case = bool(jnp.array_equal(inputs_a, inputs_b))
    self_case = bool(self_case)
    apply_ln = bool(it != 0)

    if block_b is None:
        block_b = _choose_block_b(B, S)
    if d_ff_chunk is None:
        d_ff_chunk = min(d_ff, 2048)
    grid = (B // block_b,)

    kernel = functools.partial(_encoder_layer_kernel, heads=heads, apply_ln=apply_ln,
                               self_case=self_case, d_ff_chunk=d_ff_chunk)

    act_spec = pl.BlockSpec((block_b, S, D), lambda b: (b, 0, 0))

    def run(single_buffer_weights):
        def wspec(shape):
            kwargs = {}
            if single_buffer_weights:
                # resident constant-index weights: no double buffering (halves weight VMEM)
                kwargs["pipeline_mode"] = pl.Buffered(1)
            return pl.BlockSpec(shape, lambda *_: (0,) * len(shape), **kwargs)

        weight_specs = [wspec((D, 3 * D)), wspec((D, D)),
                        wspec((D, d_ff)), wspec((d_ff, D)),
                        wspec((9, D)), wspec((1, d_ff))]

        if self_case:
            in_specs = [act_spec] + weight_specs       # inputs_a never read -> no DMA
            args = (inputs_b, prep["wqkv"], prep["wo"], prep["w1"], prep["w2"],
                    prep["pvec"], prep["b1"])
        else:
            in_specs = [act_spec, act_spec] + weight_specs
            args = (inputs_b, inputs_a, prep["wqkv"], prep["wo"], prep["w1"],
                    prep["w2"], prep["pvec"], prep["b1"])

        return pl.pallas_call(
            kernel,
            out_shape=jax.ShapeDtypeStruct((B, S, D), out_dtype),
            grid_spec=pltpu.PrefetchScalarGridSpec(
                num_scalar_prefetch=0,
                grid=grid,
                in_specs=in_specs,
                out_specs=act_spec,
            ),
            compiler_params=pltpu.CompilerParams(
                dimension_semantics=("parallel",),     # batch blocks independent (2 TCs on v7x)
                vmem_limit_bytes=_vmem_limit_bytes(block_b, S, D, d_ff, d_ff_chunk,
                                                   single_buffer_weights)),
        )(*args)

    try:
        return run(single_buffer_weights=True)
    except Exception:
        # TODO(synk): pipeline_mode=pl.Buffered(1) not supported on this JAX build;
        # fall back to default double-buffered weights (only matters for VMEM at
        # production D/d_ff on v7x).
        return run(single_buffer_weights=False)


# ------------------------- deterministic parameter init ------------------------

def make_params(key, d_model, d_ff):
    ks = jax.random.split(key, 6)

    def linear(k, d_in, d_out):
        bound = 1.0 / math.sqrt(d_in)
        kw, kb = jax.random.split(k)
        w = jax.random.uniform(kw, (d_out, d_in), jnp.float32, -bound, bound)
        b = jax.random.uniform(kb, (d_out,), jnp.float32, -bound, bound)
        return w, b

    wq, bq = linear(ks[0], d_model, d_model)
    wk, bk = linear(ks[1], d_model, d_model)
    wv, bv = linear(ks[2], d_model, d_model)
    wo, bo = linear(ks[3], d_model, d_model)
    w1, b1 = linear(ks[4], d_model, d_ff)
    w2, b2 = linear(ks[5], d_ff, d_model)
    return dict(
        wq=wq, bq=bq, wk=wk, bk=bk, wv=wv, bv=bv, wo=wo, bo=bo,
        w1=w1, b1=b1, w2=w2, b2=b2,
        ga=jnp.ones((d_model,), jnp.float32), ba=jnp.zeros((d_model,), jnp.float32),
        gf=jnp.ones((d_model,), jnp.float32), bf=jnp.zeros((d_model,), jnp.float32),
    )


# ------------------------------ pure-JAX reference -----------------------------
# Mirrors the kernel's mixed precision (bf16 matmul operands, f32 accumulation) so
# the comparison isolates kernel correctness rather than bf16 rounding.

def reference_forward(params, it, inputs_a, inputs_b, heads, self_case=None):
    B, S, D = inputs_b.shape
    dh = D // heads
    bf16 = jnp.bfloat16

    def lin(x, w, b):
        return jnp.einsum("...i,oi->...o", x.astype(bf16), w.astype(bf16),
                          preferred_element_type=jnp.float32) + b

    def ln(x, g, bta, eps=1e-6):
        m = x.mean(-1, keepdims=True)
        v = ((x - m) ** 2).mean(-1, keepdims=True)
        return (x - m) * jax.lax.rsqrt(v + eps) * g + bta

    if self_case is None:
        self_case = bool(jnp.array_equal(inputs_a, inputs_b))
    b_n = ln(inputs_b, params["ga"], params["ba"]) if it != 0 else inputs_b
    if self_case:
        kv_in, q_in, res = b_n, b_n, b_n
    else:
        kv_in, q_in, res = inputs_a, b_n, inputs_a

    def split(x):
        return x.reshape(B, S, heads, dh).transpose(0, 2, 1, 3)

    K = split(lin(kv_in, params["wk"], params["bk"]))
    V = split(lin(kv_in, params["wv"], params["bv"]))
    Q = split(lin(q_in, params["wq"], params["bq"])) / math.sqrt(dh)
    scores = jnp.einsum("bhqd,bhkd->bhqk", Q.astype(bf16), K.astype(bf16),
                        preferred_element_type=jnp.float32)
    attn = jax.nn.softmax(scores, axis=-1)
    ctx = jnp.einsum("bhqk,bhkd->bhqd", attn.astype(bf16), V.astype(bf16),
                     preferred_element_type=jnp.float32)
    ctx = ctx.transpose(0, 2, 1, 3).reshape(B, S, D)
    out = lin(ctx, params["wo"], params["bo"]) + res

    ln_out = ln(out, params["gf"], params["bf"])
    h1 = lin(ln_out, params["w1"], params["b1"])
    inter = 0.5 * h1 * (1.0 + jnp.tanh(math.sqrt(2.0 / math.pi)
                                       * (h1 + 0.044715 * h1 ** 3)))
    ffn = lin(inter, params["w2"], params["b2"])
    return ffn + out


# ------------------------------------ main --------------------------------------

if __name__ == "__main__":
    B, S, D, HEADS, D_FF = 2, 16, 256, 2, 512   # dim_per_head = 128 (lane-aligned)

    key = jax.random.PRNGKey(0)
    kp, ka, kb = jax.random.split(key, 3)
    params = make_params(kp, D, D_FF)
    prep = prepare_weights(params)              # hoisted transpose / fuse / bf16 cast

    inputs_a = jax.random.normal(ka, (B, S, D), jnp.float32)

    # case 1: inputs_a == inputs_b (self branch), iter != 0 -> layer_norm applied
    out_self = encoder_layer_forward(prep, 1, inputs_a, inputs_a, HEADS, self_case=True)
    jax.block_until_ready(out_self)
    ref_self = reference_forward(params, 1, inputs_a, inputs_a, HEADS, self_case=True)
    assert jnp.allclose(out_self, ref_self, atol=3e-2, rtol=3e-2), "self-branch mismatch"

    # case 2: inputs_a != inputs_b (cross branch), iter == 0 -> no layer_norm
    inputs_b = jax.random.normal(kb, (B, S, D), jnp.float32)
    out_cross = encoder_layer_forward(prep, 0, inputs_a, inputs_b, HEADS, self_case=False)
    jax.block_until_ready(out_cross)
    ref_cross = reference_forward(params, 0, inputs_a, inputs_b, HEADS, self_case=False)
    assert jnp.allclose(out_cross, ref_cross, atol=3e-2, rtol=3e-2), "cross-branch mismatch"

    print("KERNEL_OK")
</pallas_src>

<mosaic_0001>
module attributes {stable_mosaic.version = 11 : i64} {
  func.func @_encoder_layer_kernel(%arg0: i32, %arg1: memref<1x16x256xf32, #tpu.memory_space<vmem>>, %arg2: memref<256x768xbf16, #tpu.memory_space<vmem>>, %arg3: memref<256x256xbf16, #tpu.memory_space<vmem>>, %arg4: memref<256x512xbf16, #tpu.memory_space<vmem>>, %arg5: memref<512x256xbf16, #tpu.memory_space<vmem>>, %arg6: memref<9x256xf32, #tpu.memory_space<vmem>>, %arg7: memref<1x512xf32, #tpu.memory_space<vmem>>, %arg8: memref<1x16x256xf32, #tpu.memory_space<vmem>>) attributes {dimension_semantics = [#tpu.dimension_semantics<parallel>], iteration_bounds = array<i64: 2>, scalar_prefetch = 0 : i64, scratch_operands = 0 : i64, tpu.core_type = #tpu.core_type<tc>, window_params = [{transform_indices = @transform_0, window_bounds = array<i64: 1, 16, 256>}, {pipeline_mode = #tpu.pipeline_mode<synchronous>, transform_indices = @transform_1, window_bounds = array<i64: 256, 768>}, {pipeline_mode = #tpu.pipeline_mode<synchronous>, transform_indices = @transform_2, window_bounds = array<i64: 256, 256>}, {pipeline_mode = #tpu.pipeline_mode<synchronous>, transform_indices = @transform_3, window_bounds = array<i64: 256, 512>}, {pipeline_mode = #tpu.pipeline_mode<synchronous>, transform_indices = @transform_4, window_bounds = array<i64: 512, 256>}, {pipeline_mode = #tpu.pipeline_mode<synchronous>, transform_indices = @transform_5, window_bounds = array<i64: 9, 256>}, {pipeline_mode = #tpu.pipeline_mode<synchronous>, transform_indices = @transform_6, window_bounds = array<i64: 1, 512>}, {transform_indices = @transform_7, window_bounds = array<i64: 1, 16, 256>}]} {
    %c0 = arith.constant 0 : index
    %c0_0 = arith.constant 0 : index
    %0 = vector.load %arg6[%c0, %c0_0] : memref<9x256xf32, #tpu.memory_space<vmem>>, vector<1x256xf32>
    %1 = vector.shape_cast %0 : vector<1x256xf32> to vector<256xf32>
    %c1 = arith.constant 1 : index
    %c0_1 = arith.constant 0 : index
    %2 = vector.load %arg6[%c1, %c0_1] : memref<9x256xf32, #tpu.memory_space<vmem>>, vector<1x256xf32>
    %3 = vector.shape_cast %2 : vector<1x256xf32> to vector<256xf32>
    %c2 = arith.constant 2 : index
    %c0_2 = arith.constant 0 : index
    %4 = vector.load %arg6[%c2, %c0_2] : memref<9x256xf32, #tpu.memory_space<vmem>>, vector<1x256xf32>
    %5 = vector.shape_cast %4 : vector<1x256xf32> to vector<256xf32>
    %c3 = arith.constant 3 : index
    %c0_3 = arith.constant 0 : index
    %6 = vector.load %arg6[%c3, %c0_3] : memref<9x256xf32, #tpu.memory_space<vmem>>, vector<1x256xf32>
    %7 = vector.shape_cast %6 : vector<1x256xf32> to vector<256xf32>
    %c4 = arith.constant 4 : index
    %c0_4 = arith.constant 0 : index
    %8 = vector.load %arg6[%c4, %c0_4] : memref<9x256xf32, #tpu.memory_space<vmem>>, vector<1x256xf32>
    %9 = vector.shape_cast %8 : vector<1x256xf32> to vector<256xf32>
    %c5 = arith.constant 5 : index
    %c0_5 = arith.constant 0 : index
    %10 = vector.load %arg6[%c5, %c0_5] : memref<9x256xf32, #tpu.memory_space<vmem>>, vector<1x256xf32>
    %11 = vector.shape_cast %10 : vector<1x256xf32> to vector<256xf32>
    %c6 = arith.constant 6 : index
    %c0_6 = arith.constant 0 : index
    %12 = vector.load %arg6[%c6, %c0_6] : memref<9x256xf32, #tpu.memory_space<vmem>>, vector<1x256xf32>
    %13 = vector.shape_cast %12 : vector<1x256xf32> to vector<256xf32>
    %c7 = arith.constant 7 : index
    %c0_7 = arith.constant 0 : index
    %14 = vector.load %arg6[%c7, %c0_7] : memref<9x256xf32, #tpu.memory_space<vmem>>, vector<1x256xf32>
    %15 = vector.shape_cast %14 : vector<1x256xf32> to vector<256xf32>
    %c8 = arith.constant 8 : index
    %c0_8 = arith.constant 0 : index
    %16 = vector.load %arg6[%c8, %c0_8] : memref<9x256xf32, #tpu.memory_space<vmem>>, vector<1x256xf32>
    %17 = vector.shape_cast %16 : vector<1x256xf32> to vector<256xf32>
    %c0_9 = arith.constant 0 : index
    %c0_10 = arith.constant 0 : index
    %c0_11 = arith.constant 0 : index
    %18 = vector.load %arg1[%c0_9, %c0_10, %c0_11] : memref<1x16x256xf32, #tpu.memory_space<vmem>>, vector<1x16x256xf32>
    %19 = vector.shape_cast %18 : vector<1x16x256xf32> to vector<16x256xf32>
    %cst = arith.constant dense<0.000000e+00> : vector<16xf32>
    %20 = vector.multi_reduction <add>, %19, %cst [1] : vector<16x256xf32> to vector<16xf32>
    %21 = vector.shape_cast %20 : vector<16xf32> to vector<16x1xf32>
    %cst_12 = arith.constant 2.560000e+02 : f32
    %22 = vector.broadcast %cst_12 : f32 to vector<16x1xf32>
    %23 = arith.divf %21, %22 : vector<16x1xf32>
    %24 = vector.broadcast %23 : vector<16x1xf32> to vector<16x256xf32>
    %25 = arith.subf %19, %24 : vector<16x256xf32>
    %26 = arith.mulf %25, %25 : vector<16x256xf32>
    %cst_13 = arith.constant dense<0.000000e+00> : vector<16xf32>
    %27 = vector.multi_reduction <add>, %26, %cst_13 [1] : vector<16x256xf32> to vector<16xf32>
    %28 = vector.shape_cast %27 : vector<16xf32> to vector<16x1xf32>
    %cst_14 = arith.constant 2.560000e+02 : f32
    %29 = vector.broadcast %cst_14 : f32 to vector<16x1xf32>
    %30 = arith.divf %28, %29 : vector<16x1xf32>
    %31 = vector.broadcast %23 : vector<16x1xf32> to vector<16x256xf32>
    %32 = arith.subf %19, %31 : vector<16x256xf32>
    %cst_15 = arith.constant 9.99999997E-7 : f32
    %33 = vector.broadcast %cst_15 : f32 to vector<16x1xf32>
    %34 = arith.addf %30, %33 : vector<16x1xf32>
    %35 = math.rsqrt %34 : vector<16x1xf32>
    %36 = vector.broadcast %35 : vector<16x1xf32> to vector<16x256xf32>
    %37 = arith.mulf %32, %36 : vector<16x256xf32>
    %38 = vector.shape_cast %9 : vector<256xf32> to vector<1x256xf32>
    %39 = vector.broadcast %38 : vector<1x256xf32> to vector<16x256xf32>
    %40 = arith.mulf %37, %39 : vector<16x256xf32>
    %41 = vector.shape_cast %11 : vector<256xf32> to vector<1x256xf32>
    %42 = vector.broadcast %41 : vector<1x256xf32> to vector<16x256xf32>
    %43 = arith.addf %40, %42 : vector<16x256xf32>
    %44 = arith.truncf %43 : vector<16x256xf32> to vector<16x256xbf16>
    %c0_16 = arith.constant 0 : index
    %c0_17 = arith.constant 0 : index
    %45 = vector.load %arg2[%c0_16, %c0_17] : memref<256x768xbf16, #tpu.memory_space<vmem>>, vector<256x768xbf16>
    %cst_18 = arith.constant dense<0.000000e+00> : vector<16x768xf32>
    %46 = tpu.matmul %44, %45, %cst_18 {dimension_numbers = #tpu.dot_dimension_numbers<[1], [0], [0], [1], [0, 0, 1, 1], [], []>} : vector<16x256xbf16>, vector<256x768xbf16>, vector<16x768xf32> -> vector<16x768xf32>
    %47 = vector.extract_strided_slice %46 {offsets = [0, 0], sizes = [16, 256], strides = [1, 1]} : vector<16x768xf32> to vector<16x256xf32>
    %48 = vector.shape_cast %1 : vector<256xf32> to vector<1x256xf32>
    %49 = vector.broadcast %48 : vector<1x256xf32> to vector<16x256xf32>
    %50 = arith.addf %47, %49 : vector<16x256xf32>
    %51 = vector.extract_strided_slice %46 {offsets = [0, 256], sizes = [16, 256], strides = [1, 1]} : vector<16x768xf32> to vector<16x256xf32>
    %52 = vector.shape_cast %3 : vector<256xf32> to vector<1x256xf32>
    %53 = vector.broadcast %52 : vector<1x256xf32> to vector<16x256xf32>
    %54 = arith.addf %51, %53 : vector<16x256xf32>
    %55 = vector.extract_strided_slice %46 {offsets = [0, 512], sizes = [16, 256], strides = [1, 1]} : vector<16x768xf32> to vector<16x256xf32>
    %56 = vector.shape_cast %5 : vector<256xf32> to vector<1x256xf32>
    %57 = vector.broadcast %56 : vector<1x256xf32> to vector<16x256xf32>
    %58 = arith.addf %55, %57 : vector<16x256xf32>
    %cst_19 = arith.constant 0.0883883461 : f32
    %59 = vector.broadcast %cst_19 : f32 to vector<16x256xf32>
    %60 = arith.mulf %50, %59 : vector<16x256xf32>
    %61 = vector.shape_cast %60 : vector<16x256xf32> to vector<1x16x256xf32>
    %62 = vector.shape_cast %54 : vector<16x256xf32> to vector<1x16x256xf32>
    %63 = vector.shape_cast %58 : vector<16x256xf32> to vector<1x16x256xf32>
    %64 = vector.extract_strided_slice %61 {offsets = [0, 0, 0], sizes = [1, 16, 128], strides = [1, 1, 1]} : vector<1x16x256xf32> to vector<1x16x128xf32>
    %65 = arith.truncf %64 : vector<1x16x128xf32> to vector<1x16x128xbf16>
    %66 = vector.extract_strided_slice %62 {offsets = [0, 0, 0], sizes = [1, 16, 128], strides = [1, 1, 1]} : vector<1x16x256xf32> to vector<1x16x128xf32>
    %67 = arith.truncf %66 : vector<1x16x128xf32> to vector<1x16x128xbf16>
    %68 = vector.extract_strided_slice %63 {offsets = [0, 0, 0], sizes = [1, 16, 128], strides = [1, 1, 1]} : vector<1x16x256xf32> to vector<1x16x128xf32>
    %69 = arith.truncf %68 : vector<1x16x128xf32> to vector<1x16x128xbf16>
    "tpu.trace_start"() <{level = 10 : i32, message = "bqd,bkd->bqk"}> : () -> ()
    %cst_20 = arith.constant dense<0.000000e+00> : vector<1x16x16xf32>
    %70 = tpu.matmul %65, %67, %cst_20 {dimension_numbers = #tpu.dot_dimension_numbers<[2], [2], [1], [1], [0, 0, 0, 1, 1, 1], [0], [0]>} : vector<1x16x128xbf16>, vector<1x16x128xbf16>, vector<1x16x16xf32> -> vector<1x16x16xf32>
    "tpu.trace_stop"() : () -> ()
    %cst_21 = arith.constant dense<0xFF800000> : vector<1x16xf32>
    %71 = vector.multi_reduction <maximumf>, %70, %cst_21 [2] : vector<1x16x16xf32> to vector<1x16xf32>
    %72 = vector.shape_cast %71 : vector<1x16xf32> to vector<1x16x1xf32>
    %73 = vector.broadcast %72 : vector<1x16x1xf32> to vector<1x16x16xf32>
    %74 = arith.subf %70, %73 : vector<1x16x16xf32>
    %75 = math.exp %74 : vector<1x16x16xf32>
    %cst_22 = arith.constant dense<0.000000e+00> : vector<1x16xf32>
    %76 = vector.multi_reduction <add>, %75, %cst_22 [2] : vector<1x16x16xf32> to vector<1x16xf32>
    %77 = vector.shape_cast %76 : vector<1x16xf32> to vector<1x16x1xf32>
    %78 = tpu.reciprocal %77 {approx = true} : vector<1x16x1xf32> -> vector<1x16x1xf32>
    %79 = vector.broadcast %78 : vector<1x16x1xf32> to vector<1x16x16xf32>
    %80 = arith.mulf %75, %79 : vector<1x16x16xf32>
    %81 = arith.truncf %80 : vector<1x16x16xf32> to vector<1x16x16xbf16>
    "tpu.trace_start"() <{level = 10 : i32, message = "bqk,bkd->bqd"}> : () -> ()
    %cst_23 = arith.constant dense<0.000000e+00> : vector<1x16x128xf32>
    %82 = tpu.matmul %81, %69, %cst_23 {dimension_numbers = #tpu.dot_dimension_numbers<[2], [1], [1], [2], [0, 0, 0, 1, 1, 2], [0], [0]>} : vector<1x16x16xbf16>, vector<1x16x128xbf16>, vector<1x16x128xf32> -> vector<1x16x128xf32>
    "tpu.trace_stop"() : () -> ()
    %83 = vector.extract_strided_slice %61 {offsets = [0, 0, 128], sizes = [1, 16, 128], strides = [1, 1, 1]} : vector<1x16x256xf32> to vector<1x16x128xf32>
    %84 = arith.truncf %83 : vector<1x16x128xf32> to vector<1x16x128xbf16>
    %85 = vector.extract_strided_slice %62 {offsets = [0, 0, 128], sizes = [1, 16, 128], strides = [1, 1, 1]} : vector<1x16x256xf32> to vector<1x16x128xf32>
    %86 = arith.truncf %85 : vector<1x16x128xf32> to vector<1x16x128xbf16>
    %87 = vector.extract_strided_slice %63 {offsets = [0, 0, 128], sizes = [1, 16, 128], strides = [1, 1, 1]} : vector<1x16x256xf32> to vector<1x16x128xf32>
    %88 = arith.truncf %87 : vector<1x16x128xf32> to vector<1x16x128xbf16>
    "tpu.trace_start"() <{level = 10 : i32, message = "bqd,bkd->bqk"}> : () -> ()
    %cst_24 = arith.constant dense<0.000000e+00> : vector<1x16x16xf32>
    %89 = tpu.matmul %84, %86, %cst_24 {dimension_numbers = #tpu.dot_dimension_numbers<[2], [2], [1], [1], [0, 0, 0, 1, 1, 1], [0], [0]>} : vector<1x16x128xbf16>, vector<1x16x128xbf16>, vector<1x16x16xf32> -> vector<1x16x16xf32>
    "tpu.trace_stop"() : () -> ()
    %cst_25 = arith.constant dense<0xFF800000> : vector<1x16xf32>
    %90 = vector.multi_reduction <maximumf>, %89, %cst_25 [2] : vector<1x16x16xf32> to vector<1x16xf32>
    %91 = vector.shape_cast %90 : vector<1x16xf32> to vector<1x16x1xf32>
    %92 = vector.broadcast %91 : vector<1x16x1xf32> to vector<1x16x16xf32>
    %93 = arith.subf %89, %92 : vector<1x16x16xf32>
    %94 = math.exp %93 : vector<1x16x16xf32>
    %cst_26 = arith.constant dense<0.000000e+00> : vector<1x16xf32>
    %95 = vector.multi_reduction <add>, %94, %cst_26 [2] : vector<1x16x16xf32> to vector<1x16xf32>
    %96 = vector.shape_cast %95 : vector<1x16xf32> to vector<1x16x1xf32>
    %97 = tpu.reciprocal %96 {approx = true} : vector<1x16x1xf32> -> vector<1x16x1xf32>
    %98 = vector.broadcast %97 : vector<1x16x1xf32> to vector<1x16x16xf32>
    %99 = arith.mulf %94, %98 : vector<1x16x16xf32>
    %100 = arith.truncf %99 : vector<1x16x16xf32> to vector<1x16x16xbf16>
    "tpu.trace_start"() <{level = 10 : i32, message = "bqk,bkd->bqd"}> : () -> ()
    %cst_27 = arith.constant dense<0.000000e+00> : vector<1x16x128xf32>
    %101 = tpu.matmul %100, %88, %cst_27 {dimension_numbers = #tpu.dot_dimension_numbers<[2], [1], [1], [2], [0, 0, 0, 1, 1, 2], [0], [0]>} : vector<1x16x16xbf16>, vector<1x16x128xbf16>, vector<1x16x128xf32> -> vector<1x16x128xf32>
    "tpu.trace_stop"() : () -> ()
    %102 = tpu.concatenate %82, %101 in 2 : vector<1x16x128xf32>, vector<1x16x128xf32> -> vector<1x16x256xf32>
    %103 = vector.shape_cast %102 : vector<1x16x256xf32> to vector<16x256xf32>
    %104 = arith.truncf %103 : vector<16x256xf32> to vector<16x256xbf16>
    %c0_28 = arith.constant 0 : index
    %c0_29 = arith.constant 0 : index
    %105 = vector.load %arg3[%c0_28, %c0_29] : memref<256x256xbf16, #tpu.memory_space<vmem>>, vector<256x256xbf16>
    %cst_30 = arith.constant dense<0.000000e+00> : vector<16x256xf32>
    %106 = tpu.matmul %104, %105, %cst_30 {dimension_numbers = #tpu.dot_dimension_numbers<[1], [0], [0], [1], [0, 0, 1, 1], [], []>} : vector<16x256xbf16>, vector<256x256xbf16>, vector<16x256xf32> -> vector<16x256xf32>
    %107 = vector.shape_cast %7 : vector<256xf32> to vector<1x256xf32>
    %108 = vector.broadcast %107 : vector<1x256xf32> to vector<16x256xf32>
    %109 = arith.addf %106, %108 : vector<16x256xf32>
    %110 = arith.addf %109, %43 : vector<16x256xf32>
    %cst_31 = arith.constant dense<0.000000e+00> : vector<16xf32>
    %111 = vector.multi_reduction <add>, %110, %cst_31 [1] : vector<16x256xf32> to vector<16xf32>
    %112 = vector.shape_cast %111 : vector<16xf32> to vector<16x1xf32>
    %cst_32 = arith.constant 2.560000e+02 : f32
    %113 = vector.broadcast %cst_32 : f32 to vector<16x1xf32>
    %114 = arith.divf %112, %113 : vector<16x1xf32>
    %115 = vector.broadcast %114 : vector<16x1xf32> to vector<16x256xf32>
    %116 = arith.subf %110, %115 : vector<16x256xf32>
    %117 = arith.mulf %116, %116 : vector<16x256xf32>
    %cst_33 = arith.constant dense<0.000000e+00> : vector<16xf32>
    %118 = vector.multi_reduction <add>, %117, %cst_33 [1] : vector<16x256xf32> to vector<16xf32>
    %119 = vector.shape_cast %118 : vector<16xf32> to vector<16x1xf32>
    %cst_34 = arith.constant 2.560000e+02 : f32
    %120 = vector.broadcast %cst_34 : f32 to vector<16x1xf32>
    %121 = arith.divf %119, %120 : vector<16x1xf32>
    %122 = vector.broadcast %114 : vector<16x1xf32> to vector<16x256xf32>
    %123 = arith.subf %110, %122 : vector<16x256xf32>
    %cst_35 = arith.constant 9.99999997E-7 : f32
    %124 = vector.broadcast %cst_35 : f32 to vector<16x1xf32>
    %125 = arith.addf %121, %124 : vector<16x1xf32>
    %126 = math.rsqrt %125 : vector<16x1xf32>
    %127 = vector.broadcast %126 : vector<16x1xf32> to vector<16x256xf32>
    %128 = arith.mulf %123, %127 : vector<16x256xf32>
    %129 = vector.shape_cast %13 : vector<256xf32> to vector<1x256xf32>
    %130 = vector.broadcast %129 : vector<1x256xf32> to vector<16x256xf32>
    %131 = arith.mulf %128, %130 : vector<16x256xf32>
    %132 = vector.shape_cast %15 : vector<256xf32> to vector<1x256xf32>
    %133 = vector.broadcast %132 : vector<1x256xf32> to vector<16x256xf32>
    %134 = arith.addf %131, %133 : vector<16x256xf32>
    %135 = arith.truncf %134 : vector<16x256xf32> to vector<16x256xbf16>
    %136 = vector.shape_cast %17 : vector<256xf32> to vector<1x256xf32>
    %137 = vector.broadcast %136 : vector<1x256xf32> to vector<16x256xf32>
    %138 = arith.addf %110, %137 : vector<16x256xf32>
    %c0_36 = arith.constant 0 : index
    %c0_37 = arith.constant 0 : index
    %139 = vector.load %arg4[%c0_36, %c0_37] : memref<256x512xbf16, #tpu.memory_space<vmem>>, vector<256x512xbf16>
    %cst_38 = arith.constant dense<0.000000e+00> : vector<16x512xf32>
    %140 = tpu.matmul %135, %139, %cst_38 {dimension_numbers = #tpu.dot_dimension_numbers<[1], [0], [0], [1], [0, 0, 1, 1], [], []>} : vector<16x256xbf16>, vector<256x512xbf16>, vector<16x512xf32> -> vector<16x512xf32>
    %c0_39 = arith.constant 0 : index
    %c0_40 = arith.constant 0 : index
    %141 = vector.load %arg7[%c0_39, %c0_40] : memref<1x512xf32, #tpu.memory_space<vmem>>, vector<1x512xf32>
    %142 = vector.broadcast %141 : vector<1x512xf32> to vector<16x512xf32>
    %143 = arith.addf %140, %142 : vector<16x512xf32>
    %cst_41 = arith.constant 5.000000e-01 : f32
    %144 = vector.broadcast %cst_41 : f32 to vector<16x512xf32>
    %145 = arith.mulf %144, %143 : vector<16x512xf32>
    %146 = arith.mulf %143, %143 : vector<16x512xf32>
    %147 = arith.mulf %143, %146 : vector<16x512xf32>
    %cst_42 = arith.constant 4.471500e-02 : f32
    %148 = vector.broadcast %cst_42 : f32 to vector<16x512xf32>
    %149 = arith.mulf %148, %147 : vector<16x512xf32>
    %150 = arith.addf %143, %149 : vector<16x512xf32>
    %cst_43 = arith.constant 0.797884583 : f32
    %151 = vector.broadcast %cst_43 : f32 to vector<16x512xf32>
    %152 = arith.mulf %151, %150 : vector<16x512xf32>
    %153 = math.tanh %152 : vector<16x512xf32>
    %cst_44 = arith.constant 1.000000e+00 : f32
    %154 = vector.broadcast %cst_44 : f32 to vector<16x512xf32>
    %155 = arith.addf %154, %153 : vector<16x512xf32>
    %156 = arith.mulf %145, %155 : vector<16x512xf32>
    %157 = arith.truncf %156 : vector<16x512xf32> to vector<16x512xbf16>
    %c0_45 = arith.constant 0 : index
    %c0_46 = arith.constant 0 : index
    %158 = vector.load %arg5[%c0_45, %c0_46] : memref<512x256xbf16, #tpu.memory_space<vmem>>, vector<512x256xbf16>
    %cst_47 = arith.constant dense<0.000000e+00> : vector<16x256xf32>
    %159 = tpu.matmul %157, %158, %cst_47 {dimension_numbers = #tpu.dot_dimension_numbers<[1], [0], [0], [1], [0, 0, 1, 1], [], []>} : vector<16x512xbf16>, vector<512x256xbf16>, vector<16x256xf32> -> vector<16x256xf32>
    %160 = arith.addf %138, %159 : vector<16x256xf32>
    %161 = vector.shape_cast %160 : vector<16x256xf32> to vector<1x16x256xf32>
    %c0_48 = arith.constant 0 : index
    %c0_49 = arith.constant 0 : index
    %c0_50 = arith.constant 0 : index
    %162 = vector.load %arg8[%c0_48, %c0_49, %c0_50] : memref<1x16x256xf32, #tpu.memory_space<vmem>>, vector<1x16x256xf32>
    tpu.vector_store %arg8[%c0_48, %c0_49, %c0_50], %161 {strides = array<i32>} : memref<1x16x256xf32, #tpu.memory_space<vmem>>, vector<1x16x256xf32>,
    return
  }
  func.func @transform_0(%arg0: i32) -> (i32, i32, i32) {
    %c0_i32 = arith.constant 0 : i32
    %c0_i32_0 = arith.constant 0 : i32
    %c0_i32_1 = arith.constant 0 : i32
    return %arg0, %c0_i32, %c0_i32_0 : i32, i32, i32
  }
  func.func @transform_1(%arg0: i32) -> (i32, i32) {
    %c0_i32 = arith.constant 0 : i32
    %c0_i32_0 = arith.constant 0 : i32
    %c0_i32_1 = arith.constant 0 : i32
    return %c0_i32, %c0_i32_0 : i32, i32
  }
  func.func @transform_2(%arg0: i32) -> (i32, i32) {
    %c0_i32 = arith.constant 0 : i32
    %c0_i32_0 = arith.constant 0 : i32
    %c0_i32_1 = arith.constant 0 : i32
    return %c0_i32, %c0_i32_0 : i32, i32
  }
  func.func @transform_3(%arg0: i32) -> (i32, i32) {
    %c0_i32 = arith.constant 0 : i32
    %c0_i32_0 = arith.constant 0 : i32
    %c0_i32_1 = arith.constant 0 : i32
    return %c0_i32, %c0_i32_0 : i32, i32
  }
  func.func @transform_4(%arg0: i32) -> (i32, i32) {
    %c0_i32 = arith.constant 0 : i32
    %c0_i32_0 = arith.constant 0 : i32
    %c0_i32_1 = arith.constant 0 : i32
    return %c0_i32, %c0_i32_0 : i32, i32
  }
  func.func @transform_5(%arg0: i32) -> (i32, i32) {
    %c0_i32 = arith.constant 0 : i32
    %c0_i32_0 = arith.constant 0 : i32
    %c0_i32_1 = arith.constant 0 : i32
    return %c0_i32, %c0_i32_0 : i32, i32
  }
  func.func @transform_6(%arg0: i32) -> (i32, i32) {
    %c0_i32 = arith.constant 0 : i32
    %c0_i32_0 = arith.constant 0 : i32
    %c0_i32_1 = arith.constant 0 : i32
    return %c0_i32, %c0_i32_0 : i32, i32
  }
  func.func @transform_7(%arg0: i32) -> (i32, i32, i32) {
    %c0_i32 = arith.constant 0 : i32
    %c0_i32_0 = arith.constant 0 : i32
    %c0_i32_1 = arith.constant 0 : i32
    return %arg0, %c0_i32, %c0_i32_0 : i32, i32, i32
  }
}

module attributes {stable_mosaic.version = 11 : i64} {
  func.func @_encoder_layer_kernel(%arg0: i32, %arg1: memref<1x16x256xf32, #tpu.memory_space<vmem>>, %arg2: memref<256x768xbf16, #tpu.memory_space<vmem>>, %arg3: memref<256x256xbf16, #tpu.memory_space<vmem>>, %arg4: memref<256x512xbf16, #tpu.memory_space<vmem>>, %arg5: memref<512x256xbf16, #tpu.memory_space<vmem>>, %arg6: memref<9x256xf32, #tpu.memory_space<vmem>>, %arg7: memref<1x512xf32, #tpu.memory_space<vmem>>, %arg8: memref<1x16x256xf32, #tpu.memory_space<vmem>>) attributes {dimension_semantics = [#tpu.dimension_semantics<parallel>], iteration_bounds = array<i64: 2>, scalar_prefetch = 0 : i64, scratch_operands = 0 : i64, tpu.core_type = #tpu.core_type<tc>, window_params = [{transform_indices = @transform_0, window_bounds = array<i64: 1, 16, 256>}, {pipeline_mode = #tpu.pipeline_mode<synchronous>, transform_indices = @transform_1, window_bounds = array<i64: 256, 768>}, {pipeline_mode = #tpu.pipeline_mode<synchronous>, transform_indices = @transform_2, window_bounds = array<i64: 256, 256>}, {pipeline_mode = #tpu.pipeline_mode<synchronous>, transform_indices = @transform_3, window_bounds = array<i64: 256, 512>}, {pipeline_mode = #tpu.pipeline_mode<synchronous>, transform_indices = @transform_4, window_bounds = array<i64: 512, 256>}, {pipeline_mode = #tpu.pipeline_mode<synchronous>, transform_indices = @transform_5, window_bounds = array<i64: 9, 256>}, {pipeline_mode = #tpu.pipeline_mode<synchronous>, transform_indices = @transform_6, window_bounds = array<i64: 1, 512>}, {transform_indices = @transform_7, window_bounds = array<i64: 1, 16, 256>}]} {
    %c0 = arith.constant 0 : index
    %c0_0 = arith.constant 0 : index
    %0 = vector.load %arg6[%c0, %c0_0] : memref<9x256xf32, #tpu.memory_space<vmem>>, vector<1x256xf32>
    %1 = vector.shape_cast %0 : vector<1x256xf32> to vector<256xf32>
    %c1 = arith.constant 1 : index
    %c0_1 = arith.constant 0 : index
    %2 = vector.load %arg6[%c1, %c0_1] : memref<9x256xf32, #tpu.memory_space<vmem>>, vector<1x256xf32>
    %3 = vector.shape_cast %2 : vector<1x256xf32> to vector<256xf32>
    %c2 = arith.constant 2 : index
    %c0_2 = arith.constant 0 : index
    %4 = vector.load %arg6[%c2, %c0_2] : memref<9x256xf32, #tpu.memory_space<vmem>>, vector<1x256xf32>
    %5 = vector.shape_cast %4 : vector<1x256xf32> to vector<256xf32>
    %c3 = arith.constant 3 : index
    %c0_3 = arith.constant 0 : index
    %6 = vector.load %arg6[%c3, %c0_3] : memref<9x256xf32, #tpu.memory_space<vmem>>, vector<1x256xf32>
    %7 = vector.shape_cast %6 : vector<1x256xf32> to vector<256xf32>
    %c4 = arith.constant 4 : index
    %c0_4 = arith.constant 0 : index
    %8 = vector.load %arg6[%c4, %c0_4] : memref<9x256xf32, #tpu.memory_space<vmem>>, vector<1x256xf32>
    %9 = vector.shape_cast %8 : vector<1x256xf32> to vector<256xf32>
    %c5 = arith.constant 5 : index
    %c0_5 = arith.constant 0 : index
    %10 = vector.load %arg6[%c5, %c0_5] : memref<9x256xf32, #tpu.memory_space<vmem>>, vector<1x256xf32>
    %11 = vector.shape_cast %10 : vector<1x256xf32> to vector<256xf32>
    %c6 = arith.constant 6 : index
    %c0_6 = arith.constant 0 : index
    %12 = vector.load %arg6[%c6, %c0_6] : memref<9x256xf32, #tpu.memory_space<vmem>>, vector<1x256xf32>
    %13 = vector.shape_cast %12 : vector<1x256xf32> to vector<256xf32>
    %c7 = arith.constant 7 : index
    %c0_7 = arith.constant 0 : index
    %14 = vector.load %arg6[%c7, %c0_7] : memref<9x256xf32, #tpu.memory_space<vmem>>, vector<1x256xf32>
    %15 = vector.shape_cast %14 : vector<1x256xf32> to vector<256xf32>
    %c8 = arith.constant 8 : index
    %c0_8 = arith.constant 0 : index
    %16 = vector.load %arg6[%c8, %c0_8] : memref<9x256xf32, #tpu.memory_space<vmem>>, vector<1x256xf32>
    %17 = vector.shape_cast %16 : vector<1x256xf32> to vector<256xf32>
    %c0_9 = arith.constant 0 : index
    %c0_10 = arith.constant 0 : index
    %c0_11 = arith.constant 0 : index
    %18 = vector.load %arg1[%c0_9, %c0_10, %c0_11] : memref<1x16x256xf32, #tpu.memory_space<vmem>>, vector<1x16x256xf32>
    %19 = vector.shape_cast %18 : vector<1x16x256xf32> to vector<16x256xf32>
    %cst = arith.constant dense<0.000000e+00> : vector<16xf32>
    %20 = vector.multi_reduction <add>, %19, %cst [1] : vector<16x256xf32> to vector<16xf32>
    %21 = vector.shape_cast %20 : vector<16xf32> to vector<16x1xf32>
    %cst_12 = arith.constant 2.560000e+02 : f32
    %22 = vector.broadcast %cst_12 : f32 to vector<16x1xf32>
    %23 = arith.divf %21, %22 : vector<16x1xf32>
    %24 = vector.broadcast %23 : vector<16x1xf32> to vector<16x256xf32>
    %25 = arith.subf %19, %24 : vector<16x256xf32>
    %26 = arith.mulf %25, %25 : vector<16x256xf32>
    %cst_13 = arith.constant dense<0.000000e+00> : vector<16xf32>
    %27 = vector.multi_reduction <add>, %26, %cst_13 [1] : vector<16x256xf32> to vector<16xf32>
    %28 = vector.shape_cast %27 : vector<16xf32> to vector<16x1xf32>
    %cst_14 = arith.constant 2.560000e+02 : f32
    %29 = vector.broadcast %cst_14 : f32 to vector<16x1xf32>
    %30 = arith.divf %28, %29 : vector<16x1xf32>
    %31 = vector.broadcast %23 : vector<16x1xf32> to vector<16x256xf32>
    %32 = arith.subf %19, %31 : vector<16x256xf32>
    %cst_15 = arith.constant 9.99999997E-7 : f32
    %33 = vector.broadcast %cst_15 : f32 to vector<16x1xf32>
    %34 = arith.addf %30, %33 : vector<16x1xf32>
    %35 = math.rsqrt %34 : vector<16x1xf32>
    %36 = vector.broadcast %35 : vector<16x1xf32> to vector<16x256xf32>
    %37 = arith.mulf %32, %36 : vector<16x256xf32>
    %38 = vector.shape_cast %9 : vector<256xf32> to vector<1x256xf32>
    %39 = vector.broadcast %38 : vector<1x256xf32> to vector<16x256xf32>
    %40 = arith.mulf %37, %39 : vector<16x256xf32>
    %41 = vector.shape_cast %11 : vector<256xf32> to vector<1x256xf32>
    %42 = vector.broadcast %41 : vector<1x256xf32> to vector<16x256xf32>
    %43 = arith.addf %40, %42 : vector<16x256xf32>
    %44 = arith.truncf %43 : vector<16x256xf32> to vector<16x256xbf16>
    %c0_16 = arith.constant 0 : index
    %c0_17 = arith.constant 0 : index
    %45 = vector.load %arg2[%c0_16, %c0_17] : memref<256x768xbf16, #tpu.memory_space<vmem>>, vector<256x768xbf16>
    %cst_18 = arith.constant dense<0.000000e+00> : vector<16x768xf32>
    %46 = tpu.matmul %44, %45, %cst_18 {dimension_numbers = #tpu.dot_dimension_numbers<[1], [0], [0], [1], [0, 0, 1, 1], [], []>} : vector<16x256xbf16>, vector<256x768xbf16>, vector<16x768xf32> -> vector<16x768xf32>
    %47 = vector.extract_strided_slice %46 {offsets = [0, 0], sizes = [16, 256], strides = [1, 1]} : vector<16x768xf32> to vector<16x256xf32>
    %48 = vector.shape_cast %1 : vector<256xf32> to vector<1x256xf32>
    %49 = vector.broadcast %48 : vector<1x256xf32> to vector<16x256xf32>
    %50 = arith.addf %47, %49 : vector<16x256xf32>
    %51 = vector.extract_strided_slice %46 {offsets = [0, 256], sizes = [16, 256], strides = [1, 1]} : vector<16x768xf32> to vector<16x256xf32>
    %52 = vector.shape_cast %3 : vector<256xf32> to vector<1x256xf32>
    %53 = vector.broadcast %52 : vector<1x256xf32> to vector<16x256xf32>
    %54 = arith.addf %51, %53 : vector<16x256xf32>
    %55 = vector.extract_strided_slice %46 {offsets = [0, 512], sizes = [16, 256], strides = [1, 1]} : vector<16x768xf32> to vector<16x256xf32>
    %56 = vector.shape_cast %5 : vector<256xf32> to vector<1x256xf32>
    %57 = vector.broadcast %56 : vector<1x256xf32> to vector<16x256xf32>
    %58 = arith.addf %55, %57 : vector<16x256xf32>
    %cst_19 = arith.constant 0.0883883461 : f32
    %59 = vector.broadcast %cst_19 : f32 to vector<16x256xf32>
    %60 = arith.mulf %50, %59 : vector<16x256xf32>
    %61 = vector.shape_cast %60 : vector<16x256xf32> to vector<1x16x256xf32>
    %62 = vector.shape_cast %54 : vector<16x256xf32> to vector<1x16x256xf32>
    %63 = vector.shape_cast %58 : vector<16x256xf32> to vector<1x16x256xf32>
    %64 = vector.extract_strided_slice %61 {offsets = [0, 0, 0], sizes = [1, 16, 128], strides = [1, 1, 1]} : vector<1x16x256xf32> to vector<1x16x128xf32>
    %65 = arith.truncf %64 : vector<1x16x128xf32> to vector<1x16x128xbf16>
    %66 = vector.extract_strided_slice %62 {offsets = [0, 0, 0], sizes = [1, 16, 128], strides = [1, 1, 1]} : vector<1x16x256xf32> to vector<1x16x128xf32>
    %67 = arith.truncf %66 : vector<1x16x128xf32> to vector<1x16x128xbf16>
    %68 = vector.extract_strided_slice %63 {offsets = [0, 0, 0], sizes = [1, 16, 128], strides = [1, 1, 1]} : vector<1x16x256xf32> to vector<1x16x128xf32>
    %69 = arith.truncf %68 : vector<1x16x128xf32> to vector<1x16x128xbf16>
    "tpu.trace_start"() <{level = 10 : i32, message = "bqd,bkd->bqk"}> : () -> ()
    %cst_20 = arith.constant dense<0.000000e+00> : vector<1x16x16xf32>
    %70 = tpu.matmul %65, %67, %cst_20 {dimension_numbers = #tpu.dot_dimension_numbers<[2], [2], [1], [1], [0, 0, 0, 1, 1, 1], [0], [0]>} : vector<1x16x128xbf16>, vector<1x16x128xbf16>, vector<1x16x16xf32> -> vector<1x16x16xf32>
    "tpu.trace_stop"() : () -> ()
    %cst_21 = arith.constant dense<0xFF800000> : vector<1x16xf32>
    %71 = vector.multi_reduction <maximumf>, %70, %cst_21 [2] : vector<1x16x16xf32> to vector<1x16xf32>
    %72 = vector.shape_cast %71 : vector<1x16xf32> to vector<1x16x1xf32>
    %73 = vector.broadcast %72 : vector<1x16x1xf32> to vector<1x16x16xf32>
    %74 = arith.subf %70, %73 : vector<1x16x16xf32>
    %75 = math.exp %74 : vector<1x16x16xf32>
    %cst_22 = arith.constant dense<0.000000e+00> : vector<1x16xf32>
    %76 = vector.multi_reduction <add>, %75, %cst_22 [2] : vector<1x16x16xf32> to vector<1x16xf32>
    %77 = vector.shape_cast %76 : vector<1x16xf32> to vector<1x16x1xf32>
    %78 = tpu.reciprocal %77 {approx = true} : vector<1x16x1xf32> -> vector<1x16x1xf32>
    %79 = vector.broadcast %78 : vector<1x16x1xf32> to vector<1x16x16xf32>
    %80 = arith.mulf %75, %79 : vector<1x16x16xf32>
    %81 = arith.truncf %80 : vector<1x16x16xf32> to vector<1x16x16xbf16>
    "tpu.trace_start"() <{level = 10 : i32, message = "bqk,bkd->bqd"}> : () -> ()
    %cst_23 = arith.constant dense<0.000000e+00> : vector<1x16x128xf32>
    %82 = tpu.matmul %81, %69, %cst_23 {dimension_numbers = #tpu.dot_dimension_numbers<[2], [1], [1], [2], [0, 0, 0, 1, 1, 2], [0], [0]>} : vector<1x16x16xbf16>, vector<1x16x128xbf16>, vector<1x16x128xf32> -> vector<1x16x128xf32>
    "tpu.trace_stop"() : () -> ()
    %83 = vector.extract_strided_slice %61 {offsets = [0, 0, 128], sizes = [1, 16, 128], strides = [1, 1, 1]} : vector<1x16x256xf32> to vector<1x16x128xf32>
    %84 = arith.truncf %83 : vector<1x16x128xf32> to vector<1x16x128xbf16>
    %85 = vector.extract_strided_slice %62 {offsets = [0, 0, 128], sizes = [1, 16, 128], strides = [1, 1, 1]} : vector<1x16x256xf32> to vector<1x16x128xf32>
    %86 = arith.truncf %85 : vector<1x16x128xf32> to vector<1x16x128xbf16>
    %87 = vector.extract_strided_slice %63 {offsets = [0, 0, 128], sizes = [1, 16, 128], strides = [1, 1, 1]} : vector<1x16x256xf32> to vector<1x16x128xf32>
    %88 = arith.truncf %87 : vector<1x16x128xf32> to vector<1x16x128xbf16>
    "tpu.trace_start"() <{level = 10 : i32, message = "bqd,bkd->bqk"}> : () -> ()
    %cst_24 = arith.constant dense<0.000000e+00> : vector<1x16x16xf32>
    %89 = tpu.matmul %84, %86, %cst_24 {dimension_numbers = #tpu.dot_dimension_numbers<[2], [2], [1], [1], [0, 0, 0, 1, 1, 1], [0], [0]>} : vector<1x16x128xbf16>, vector<1x16x128xbf16>, vector<1x16x16xf32> -> vector<1x16x16xf32>
    "tpu.trace_stop"() : () -> ()
    %cst_25 = arith.constant dense<0xFF800000> : vector<1x16xf32>
    %90 = vector.multi_reduction <maximumf>, %89, %cst_25 [2] : vector<1x16x16xf32> to vector<1x16xf32>
    %91 = vector.shape_cast %90 : vector<1x16xf32> to vector<1x16x1xf32>
    %92 = vector.broadcast %91 : vector<1x16x1xf32> to vector<1x16x16xf32>
    %93 = arith.subf %89, %92 : vector<1x16x16xf32>
    %94 = math.exp %93 : vector<1x16x16xf32>
    %cst_26 = arith.constant dense<0.000000e+00> : vector<1x16xf32>
    %95 = vector.multi_reduction <add>, %94, %cst_26 [2] : vector<1x16x16xf32> to vector<1x16xf32>
    %96 = vector.shape_cast %95 : vector<1x16xf32> to vector<1x16x1xf32>
    %97 = tpu.reciprocal %96 {approx = true} : vector<1x16x1xf32> -> vector<1x16x1xf32>
    %98 = vector.broadcast %97 : vector<1x16x1xf32> to vector<1x16x16xf32>
    %99 = arith.mulf %94, %98 : vector<1x16x16xf32>
    %100 = arith.truncf %99 : vector<1x16x16xf32> to vector<1x16x16xbf16>
    "tpu.trace_start"() <{level = 10 : i32, message = "bqk,bkd->bqd"}> : () -> ()
    %cst_27 = arith.constant dense<0.000000e+00> : vector<1x16x128xf32>
    %101 = tpu.matmul %100, %88, %cst_27 {dimension_numbers = #tpu.dot_dimension_numbers<[2], [1], [1], [2], [0, 0, 0, 1, 1, 2], [0], [0]>} : vector<1x16x16xbf16>, vector<1x16x128xbf16>, vector<1x16x128xf32> -> vector<1x16x128xf32>
    "tpu.trace_stop"() : () -> ()
    %102 = tpu.concatenate %82, %101 in 2 : vector<1x16x128xf32>, vector<1x16x128xf32> -> vector<1x16x256xf32>
    %103 = vector.shape_cast %102 : vector<1x16x256xf32> to vector<16x256xf32>
    %104 = arith.truncf %103 : vector<16x256xf32> to vector<16x256xbf16>
    %c0_28 = arith.constant 0 : index
    %c0_29 = arith.constant 0 : index
    %105 = vector.load %arg3[%c0_28, %c0_29] : memref<256x256xbf16, #tpu.memory_space<vmem>>, vector<256x256xbf16>
    %cst_30 = arith.constant dense<0.000000e+00> : vector<16x256xf32>
    %106 = tpu.matmul %104, %105, %cst_30 {dimension_numbers = #tpu.dot_dimension_numbers<[1], [0], [0], [1], [0, 0, 1, 1], [], []>} : vector<16x256xbf16>, vector<256x256xbf16>, vector<16x256xf32> -> vector<16x256xf32>
    %107 = vector.shape_cast %7 : vector<256xf32> to vector<1x256xf32>
    %108 = vector.broadcast %107 : vector<1x256xf32> to vector<16x256xf32>
    %109 = arith.addf %106, %108 : vector<16x256xf32>
    %110 = arith.addf %109, %43 : vector<16x256xf32>
    %cst_31 = arith.constant dense<0.000000e+00> : vector<16xf32>
    %111 = vector.multi_reduction <add>, %110, %cst_31 [1] : vector<16x256xf32> to vector<16xf32>
    %112 = vector.shape_cast %111 : vector<16xf32> to vector<16x1xf32>
    %cst_32 = arith.constant 2.560000e+02 : f32
    %113 = vector.broadcast %cst_32 : f32 to vector<16x1xf32>
    %114 = arith.divf %112, %113 : vector<16x1xf32>
    %115 = vector.broadcast %114 : vector<16x1xf32> to vector<16x256xf32>
    %116 = arith.subf %110, %115 : vector<16x256xf32>
    %117 = arith.mulf %116, %116 : vector<16x256xf32>
    %cst_33 = arith.constant dense<0.000000e+00> : vector<16xf32>
    %118 = vector.multi_reduction <add>, %117, %cst_33 [1] : vector<16x256xf32> to vector<16xf32>
    %119 = vector.shape_cast %118 : vector<16xf32> to vector<16x1xf32>
    %cst_34 = arith.constant 2.560000e+02 : f32
    %120 = vector.broadcast %cst_34 : f32 to vector<16x1xf32>
    %121 = arith.divf %119, %120 : vector<16x1xf32>
    %122 = vector.broadcast %114 : vector<16x1xf32> to vector<16x256xf32>
    %123 = arith.subf %110, %122 : vector<16x256xf32>
    %cst_35 = arith.constant 9.99999997E-7 : f32
    %124 = vector.broadcast %cst_35 : f32 to vector<16x1xf32>
    %125 = arith.addf %121, %124 : vector<16x1xf32>
    %126 = math.rsqrt %125 : vector<16x1xf32>
    %127 = vector.broadcast %126 : vector<16x1xf32> to vector<16x256xf32>
    %128 = arith.mulf %123, %127 : vector<16x256xf32>
    %129 = vector.shape_cast %13 : vector<256xf32> to vector<1x256xf32>
    %130 = vector.broadcast %129 : vector<1x256xf32> to vector<16x256xf32>
    %131 = arith.mulf %128, %130 : vector<16x256xf32>
    %132 = vector.shape_cast %15 : vector<256xf32> to vector<1x256xf32>
    %133 = vector.broadcast %132 : vector<1x256xf32> to vector<16x256xf32>
    %134 = arith.addf %131, %133 : vector<16x256xf32>
    %135 = arith.truncf %134 : vector<16x256xf32> to vector<16x256xbf16>
    %136 = vector.shape_cast %17 : vector<256xf32> to vector<1x256xf32>
    %137 = vector.broadcast %136 : vector<1x256xf32> to vector<16x256xf32>
    %138 = arith.addf %110, %137 : vector<16x256xf32>
    %c0_36 = arith.constant 0 : index
    %c0_37 = arith.constant 0 : index
    %139 = vector.load %arg4[%c0_36, %c0_37] : memref<256x512xbf16, #tpu.memory_space<vmem>>, vector<256x512xbf16>
    %cst_38 = arith.constant dense<0.000000e+00> : vector<16x512xf32>
    %140 = tpu.matmul %135, %139, %cst_38 {dimension_numbers = #tpu.dot_dimension_numbers<[1], [0], [0], [1], [0, 0, 1, 1], [], []>} : vector<16x256xbf16>, vector<256x512xbf16>, vector<16x512xf32> -> vector<16x512xf32>
    %c0_39 = arith.constant 0 : index
    %c0_40 = arith.constant 0 : index
    %141 = vector.load %arg7[%c0_39, %c0_40] : memref<1x512xf32, #tpu.memory_space<vmem>>, vector<1x512xf32>
    %142 = vector.broadcast %141 : vector<1x512xf32> to vector<16x512xf32>
    %143 = arith.addf %140, %142 : vector<16x512xf32>
    %cst_41 = arith.constant 5.000000e-01 : f32
    %144 = vector.broadcast %cst_41 : f32 to vector<16x512xf32>
    %145 = arith.mulf %144, %143 : vector<16x512xf32>
    %146 = arith.mulf %143, %143 : vector<16x512xf32>
    %147 = arith.mulf %143, %146 : vector<16x512xf32>
    %cst_42 = arith.constant 4.471500e-02 : f32
    %148 = vector.broadcast %cst_42 : f32 to vector<16x512xf32>
    %149 = arith.mulf %148, %147 : vector<16x512xf32>
    %150 = arith.addf %143, %149 : vector<16x512xf32>
    %cst_43 = arith.constant 0.797884583 : f32
    %151 = vector.broadcast %cst_43 : f32 to vector<16x512xf32>
    %152 = arith.mulf %151, %150 : vector<16x512xf32>
    %153 = math.tanh %152 : vector<16x512xf32>
    %cst_44 = arith.constant 1.000000e+00 : f32
    %154 = vector.broadcast %cst_44 : f32 to vector<16x512xf32>
    %155 = arith.addf %154, %153 : vector<16x512xf32>
    %156 = arith.mulf %145, %155 : vector<16x512xf32>
    %157 = arith.truncf %156 : vector<16x512xf32> to vector<16x512xbf16>
    %c0_45 = arith.constant 0 : index
    %c0_46 = arith.constant 0 : index
    %158 = vector.load %arg5[%c0_45, %c0_46] : memref<512x256xbf16, #tpu.memory_space<vmem>>, vector<512x256xbf16>
    %cst_47 = arith.constant dense<0.000000e+00> : vector<16x256xf32>
    %159 = tpu.matmul %157, %158, %cst_47 {dimension_numbers = #tpu.dot_dimension_numbers<[1], [0], [0], [1], [0, 0, 1, 1], [], []>} : vector<16x512xbf16>, vector<512x256xbf16>, vector<16x256xf32> -> vector<16x256xf32>
    %160 = arith.addf %138, %159 : vector<16x256xf32>
    %161 = vector.shape_cast %160 : vector<16x256xf32> to vector<1x16x256xf32>
    %c0_48 = arith.constant 0 : index
    %c0_49 = arith.constant 0 : index
    %c0_50 = arith.constant 0 : index
    %162 = vector.load %arg8[%c0_48, %c0_49, %c0_50] : memref<1x16x256xf32, #tpu.memory_space<vmem>>, vector<1x16x256xf32>
    tpu.vector_store %arg8[%c0_48, %c0_49, %c0_50], %161 {strides = array<i32>} : memref<1x16x256xf32, #tpu.memory_space<vmem>>, vector<1x16x256xf32>,
    return
  }
  func.func @transform_0(%arg0: i32) -> (i32, i32, i32) {
    %c0_i32 = arith.constant 0 : i32
    %c0_i32_0 = arith.constant 0 : i32
    %c0_i32_1 = arith.constant 0 : i32
    return %arg0, %c0_i32, %c0_i32_0 : i32, i32, i32
  }
  func.func @transform_1(%arg0: i32) -> (i32, i32) {
    %c0_i32 = arith.constant 0 : i32
    %c0_i32_0 = arith.constant 0 : i32
    %c0_i32_1 = arith.constant 0 : i32
    return %c0_i32, %c0_i32_0 : i32, i32
  }
  func.func @transform_2(%arg0: i32) -> (i32, i32) {
    %c0_i32 = arith.constant 0 : i32
    %c0_i32_0 = arith.constant 0 : i32
    %c0_i32_1 = arith.constant 0 : i32
    return %c0_i32, %c0_i32_0 : i32, i32
  }
  func.func @transform_3(%arg0: i32) -> (i32, i32) {
    %c0_i32 = arith.constant 0 : i32
    %c0_i32_0 = arith.constant 0 : i32
    %c0_i32_1 = arith.constant 0 : i32
    return %c0_i32, %c0_i32_0 : i32, i32
  }
  func.func @transform_4(%arg0: i32) -> (i32, i32) {
    %c0_i32 = arith.constant 0 : i32
    %c0_i32_0 = arith.constant 0 : i32
    %c0_i32_1 = arith.constant 0 : i32
    return %c0_i32, %c0_i32_0 : i32, i32
  }
  func.func @transform_5(%arg0: i32) -> (i32, i32) {
    %c0_i32 = arith.constant 0 : i32
    %c0_i32_0 = arith.constant 0 : i32
    %c0_i32_1 = arith.constant 0 : i32
    return %c0_i32, %c0_i32_0 : i32, i32
  }
  func.func @transform_6(%arg0: i32) -> (i32, i32) {
    %c0_i32 = arith.constant 0 : i32
    %c0_i32_0 = arith.constant 0 : i32
    %c0_i32_1 = arith.constant 0 : i32
    return %c0_i32, %c0_i32_0 : i32, i32
  }
  func.func @transform_7(%arg0: i32) -> (i32, i32, i32) {
    %c0_i32 = arith.constant 0 : i32
    %c0_i32_0 = arith.constant 0 : i32
    %c0_i32_1 = arith.constant 0 : i32
    return %arg0, %c0_i32, %c0_i32_0 : i32, i32, i32
  }
}

</mosaic_0001>

<llo_original>
// kernel: tpu_custom_call.1
$region0: #{tpu_custom_call.1}
  #allocation0 [shape = 'u32[]', space=smem, size = 0x4, offset = 0x4, fixed_abs, tag = 'smem constant byte address 0x4 - core index']
  #allocation1 [shape = 'u32[144,128]{1,0:T(1,128)}', space=vmem, size = 0x12000, scoped, tag = 'internal scratch']
  %s0 = inlined_call_operand.hbm [shape: f32[2,16,256], index: 0, kind: input, shape index: {}]
  %s1 = inlined_call_operand.hbm [shape: bf16[256,768], index: 1, kind: input, shape index: {}]
  %s2 = inlined_call_operand.hbm [shape: bf16[256,256], index: 2, kind: input, shape index: {}]
  %s3 = inlined_call_operand.hbm [shape: bf16[256,512], index: 3, kind: input, shape index: {}]
  %s4 = inlined_call_operand.hbm [shape: bf16[512,256], index: 4, kind: input, shape index: {}]
  %s5 = inlined_call_operand.hbm [shape: f32[9,256], index: 5, kind: input, shape index: {}]
  %s6 = inlined_call_operand.vmem [shape: f32[1,512], index: 6, kind: input, shape index: {}]
  %s7 = inlined_call_operand.hbm [shape: f32[2,16,256], index: 7, kind: output, shape index: {}]
  %s8 = sld [smem:[#allocation0]]
  $region85: #{tpu_custom_call.1} parent=0
    _
  %s10 = ssub.s32 1, %s8
  %s11 = scalar_select 0, %s10, %s8
  $region1: #{tpu_custom_call.1} parent=0
    #allocation2 [shape = 'u8[32768]{0}', space=vmem, size = 0x8000, scoped, tag = 'input window, operand 0']
    #allocation3 [shape = 's32[2]{0}', space=sflag, size = 0x8, scoped, tag = 'scoped memory for tpu_custom_call.1']
    #allocation4 [shape = 's32[2]{0}', space=sflag, size = 0x8, scoped, tag = 'scoped memory for tpu_custom_call.1']
    #allocation5 [shape = 'u8[393216]{0}', space=vmem, size = 0x60000, scoped, tag = 'input window, operand 1, single buffered']
    #allocation6 [shape = 's32[1]{0}', space=sflag, size = 0x4, scoped, tag = 'scoped memory for tpu_custom_call.1']
    #allocation7 [shape = 'u8[131072]{0}', space=vmem, size = 0x20000, scoped, tag = 'input window, operand 2, single buffered']
    #allocation8 [shape = 'u8[262144]{0}', space=vmem, size = 0x40000, scoped, tag = 'input window, operand 3, single buffered']
    #allocation9 [shape = 's32[1]{0}', space=sflag, size = 0x4, scoped, tag = 'scoped memory for tpu_custom_call.1']
    #allocation10 [shape = 'u8[262144]{0}', space=vmem, size = 0x40000, scoped, tag = 'input window, operand 4, single buffered']
    #allocation11 [shape = 'u8[16384]{0}', space=vmem, size = 0x4000, scoped, tag = 'input window, operand 5, single buffered']
    #allocation12 [shape = 's32[1]{0}', space=sflag, size = 0x4, scoped, tag = 'scoped memory for tpu_custom_call.1']
    #allocation13 [shape = 'u8[32768]{0}', space=vmem, size = 0x8000, scoped, tag = 'output window, operand 0']
    %12 = vsyncpa [#allocation3], 0
    %s13 = scalar_lea.sflag [#allocation3], 1
    %14 = vsyncpa %s13, 0
    %15 = vsyncpa [#allocation6], 0
    %16 = vsyncpa [#allocation9], 0
    %17 = vsyncpa [#allocation12], 0
    %18 = vsyncpa [#allocation4], 0
    %s19 = scalar_lea.sflag [#allocation4], 1
    %20 = vsyncpa %s19, 0
    loop: start=0, step=1, limit=4
    $region2: #{tpu_custom_call.1} parent=1 // loop_pre_header
      _
    $region3: #{tpu_custom_call.1} parent=1 // loop_header
      %s22 = sphi 0, %s26
      %p23 = scmp.ge.s32.totalorder %s22, 4
      %s32 = sphi 0, %s34
      %s35 = sphi 0, %s32
      %s36 = sphi 0, %s35
      %s52 = sphi 0, %s36
      %s56 = sphi 0, %s56
      %s58 = sphi 0, %s56
      %s59 = sphi 0, %s58
      %s73 = sphi 0, %s59
      %s77 = sphi 0, %s77
      %s79 = sphi 0, %s77
      %s80 = sphi 0, %s79
      %s94 = sphi 0, %s80
      %s98 = sphi 0, %s98
      %s100 = sphi 0, %s98
      %s101 = sphi 0, %s100
      %s115 = sphi 0, %s101
      %s119 = sphi 0, %s119
      %s121 = sphi 0, %s119
      %s122 = sphi 0, %s121
      %s136 = sphi 0, %s122
      %s140 = sphi 0, %s140
      %s142 = sphi 0, %s140
      %s143 = sphi 0, %s142
      %s157 = sphi 0, %s143
      %s161 = sphi 0, %s161
      %s163 = sphi 0, %s161
      %s164 = sphi 0, %s163
      %s178 = sphi 0, %s164
      %s184 = sphi 0, %s186
      %s187 = sphi 0, %s184
      %s188 = sphi 0, %s187
      %s204 = sphi 0, %s188
    $region4: #{tpu_custom_call.1} parent=1 // loop_header_branch
      %25 = sbr.rel (%p23) target = $region8
    $region5: #{tpu_custom_call.1} parent=1 // loop_body
      %s27 = ssub.s32 %s22, 1
      %s28 = ssub.s32 %s22, 2
      %s29 = sadd.s32 %s22, 1
      %s30 = ssub.s32 %s22, %s29
      %p31 = scmp.eq.s32.totalorder %s30, 0
      %s33 = sadd.s32 %s32, 1
      %s34 = scalar_select %p31, %s32, %s33
      %p37 = pneg %p31
      %p38 = scmp.eq.s32.totalorder %s22, 1
      %p39 = por %p37, %p38
      %p40 = scmp.ne.s32.totalorder %s32, %s35
      %p41 = scmp.eq.s32.totalorder %s22, 0
      %p42 = por %p40, %p41
      %p43 = scmp.ne.s32.totalorder %s32, %s35
      %p44 = scmp.eq.s32.totalorder %s27, 1
      %p45 = por %p43, %p44
      %p46 = scmp.ne.s32.totalorder %s35, %s36
      %p47 = scmp.eq.s32.totalorder %s27, 0
      %p48 = por %p46, %p47
      %p49 = scmp.ne.s32.totalorder %s35, %s36
      %p50 = scmp.eq.s32.totalorder %s28, 1
      %p51 = por %p49, %p50
      %p53 = scmp.ne.s32.totalorder %s36, %s52
      %p54 = scmp.eq.s32.totalorder %s28, 0
      %p55 = por %p53, %p54
      %s57 = sadd.s32 %s56, 1
      %p60 = scmp.eq.s32.totalorder %s22, 1
      %p61 = scmp.ne.s32.totalorder %s56, %s58
      %p62 = scmp.eq.s32.totalorder %s22, 0
      %p63 = por %p61, %p62
      %p64 = scmp.ne.s32.totalorder %s56, %s58
      %p65 = scmp.eq.s32.totalorder %s27, 1
      %p66 = por %p64, %p65
      %p67 = scmp.ne.s32.totalorder %s58, %s59
      %p68 = scmp.eq.s32.totalorder %s27, 0
      %p69 = por %p67, %p68
      %p70 = scmp.ne.s32.totalorder %s58, %s59
      %p71 = scmp.eq.s32.totalorder %s28, 1
      %p72 = por %p70, %p71
      %p74 = scmp.ne.s32.totalorder %s59, %s73
      %p75 = scmp.eq.s32.totalorder %s28, 0
      %p76 = por %p74, %p75
      %s78 = sadd.s32 %s77, 1
      %p81 = scmp.eq.s32.totalorder %s22, 1
      %p82 = scmp.ne.s32.totalorder %s77, %s79
      %p83 = scmp.eq.s32.totalorder %s22, 0
      %p84 = por %p82, %p83
      %p85 = scmp.ne.s32.totalorder %s77, %s79
      %p86 = scmp.eq.s32.totalorder %s27, 1
      %p87 = por %p85, %p86
      %p88 = scmp.ne.s32.totalorder %s79, %s80
      %p89 = scmp.eq.s32.totalorder %s27, 0
      %p90 = por %p88, %p89
      %p91 = scmp.ne.s32.totalorder %s79, %s80
      %p92 = scmp.eq.s32.totalorder %s28, 1
      %p93 = por %p91, %p92
      %p95 = scmp.ne.s32.totalorder %s80, %s94
      %p96 = scmp.eq.s32.totalorder %s28, 0
      %p97 = por %p95, %p96
      %s99 = sadd.s32 %s98, 1
      %p102 = scmp.eq.s32.totalorder %s22, 1
      %p103 = scmp.ne.s32.totalorder %s98, %s100
      %p104 = scmp.eq.s32.totalorder %s22, 0
      %p105 = por %p103, %p104
      %p106 = scmp.ne.s32.totalorder %s98, %s100
      %p107 = scmp.eq.s32.totalorder %s27, 1
      %p108 = por %p106, %p107
      %p109 = scmp.ne.s32.totalorder %s100, %s101
      %p110 = scmp.eq.s32.totalorder %s27, 0
      %p111 = por %p109, %p110
      %p112 = scmp.ne.s32.totalorder %s100, %s101
      %p113 = scmp.eq.s32.totalorder %s28, 1
      %p114 = por %p112, %p113
      %p116 = scmp.ne.s32.totalorder %s101, %s115
      %p117 = scmp.eq.s32.totalorder %s28, 0
      %p118 = por %p116, %p117
      %s120 = sadd.s32 %s119, 1
      %p123 = scmp.eq.s32.totalorder %s22, 1
      %p124 = scmp.ne.s32.totalorder %s119, %s121
      %p125 = scmp.eq.s32.totalorder %s22, 0
      %p126 = por %p124, %p125
      %p127 = scmp.ne.s32.totalorder %s119, %s121
      %p128 = scmp.eq.s32.totalorder %s27, 1
      %p129 = por %p127, %p128
      %p130 = scmp.ne.s32.totalorder %s121, %s122
      %p131 = scmp.eq.s32.totalorder %s27, 0
      %p132 = por %p130, %p131
      %p133 = scmp.ne.s32.totalorder %s121, %s122
      %p134 = scmp.eq.s32.totalorder %s28, 1
      %p135 = por %p133, %p134
      %p137 = scmp.ne.s32.totalorder %s122, %s136
      %p138 = scmp.eq.s32.totalorder %s28, 0
      %p139 = por %p137, %p138
      %s141 = sadd.s32 %s140, 1
      %p144 = scmp.eq.s32.totalorder %s22, 1
      %p145 = scmp.ne.s32.totalorder %s140, %s142
      %p146 = scmp.eq.s32.totalorder %s22, 0
      %p147 = por %p145, %p146
      %p148 = scmp.ne.s32.totalorder %s140, %s142
      %p149 = scmp.eq.s32.totalorder %s27, 1
      %p150 = por %p148, %p149
      %p151 = scmp.ne.s32.totalorder %s142, %s143
      %p152 = scmp.eq.s32.totalorder %s27, 0
      %p153 = por %p151, %p152
      %p154 = scmp.ne.s32.totalorder %s142, %s143
      %p155 = scmp.eq.s32.totalorder %s28, 1
      %p156 = por %p154, %p155
      %p158 = scmp.ne.s32.totalorder %s143, %s157
      %p159 = scmp.eq.s32.totalorder %s28, 0
      %p160 = por %p158, %p159
      %s162 = sadd.s32 %s161, 1
      %p165 = scmp.eq.s32.totalorder %s22, 1
      %p166 = scmp.ne.s32.totalorder %s161, %s163
      %p167 = scmp.eq.s32.totalorder %s22, 0
      %p168 = por %p166, %p167
      %p169 = scmp.ne.s32.totalorder %s161, %s163
      %p170 = scmp.eq.s32.totalorder %s27, 1
      %p171 = por %p169, %p170
      %p172 = scmp.ne.s32.totalorder %s163, %s164
      %p173 = scmp.eq.s32.totalorder %s27, 0
      %p174 = por %p172, %p173
      %p175 = scmp.ne.s32.totalorder %s163, %s164
      %p176 = scmp.eq.s32.totalorder %s28, 1
      %p177 = por %p175, %p176
      %p179 = scmp.ne.s32.totalorder %s164, %s178
      %p180 = scmp.eq.s32.totalorder %s28, 0
      %p181 = por %p179, %p180
      %s182 = ssub.s32 %s22, %s29
      %p183 = scmp.eq.s32.totalorder %s182, 0
      %s185 = sadd.s32 %s184, 1
      %s186 = scalar_select %p183, %s184, %s185
      %p189 = pneg %p183
      %p190 = scmp.eq.s32.totalorder %s22, 1
      %p191 = por %p189, %p190
      %p192 = scmp.ne.s32.totalorder %s184, %s187
      %p193 = scmp.eq.s32.totalorder %s22, 0
      %p194 = por %p192, %p193
      %p195 = scmp.ne.s32.totalorder %s184, %s187
      %p196 = scmp.eq.s32.totalorder %s27, 1
      %p197 = por %p195, %p196
      %p198 = scmp.ne.s32.totalorder %s187, %s188
      %p199 = scmp.eq.s32.totalorder %s27, 0
      %p200 = por %p198, %p199
      %p201 = scmp.ne.s32.totalorder %s187, %s188
      %p202 = scmp.eq.s32.totalorder %s28, 1
      %p203 = por %p201, %p202
      %p205 = scmp.ne.s32.totalorder %s188, %s204
      %p206 = scmp.eq.s32.totalorder %s28, 0
      %p207 = por %p205, %p206
      %p208 = scmp.le.s32.totalorder 1, %s22
      %p209 = scmp.lt.s32.totalorder %s22, 3
      %p210 = pnand %p208, %p209
      %p211 = pneg %p210
      // Predicated region
      $region9: #{tpu_custom_call.1} parent=5 // pred_check
        _
      $region10: #{tpu_custom_call.1} parent=5 // pred_check_branch
        %213 = sbr.rel (%p210) target = $region12
      $region11: #{tpu_custom_call.1} parent=5 // pred_region
        %s214 = ssub.s32 %s22, 1
        // Predicated region
        $region13: #{tpu_custom_call.1} parent=11 // pred_check
          %p215 = pneg %p69
        $region14: #{tpu_custom_call.1} parent=11 // pred_check_branch
          %217 = sbr.rel (%p215) target = $region16
        $region15: #{tpu_custom_call.1} parent=11 // pred_region
          %s219 = ssub.s32 12288, 12288
          %220 = vsyncadd [#allocation6], %s219
          %s221 = sshll.u32 [#allocation5], 4
          %s222 = int_to_ptr.vmem [resolvable:$true] %s221
          %227 = dma.hbm_to_vmem [thread:$0]  %s1, 12288, %s222, [#allocation6], 384, 384, 24
        $region16: #{tpu_custom_call.1} parent=11 // pred_fallthru
          _
        // Predicated region
        $region17: #{tpu_custom_call.1} parent=11 // pred_check
          %p228 = pneg %p90
        $region18: #{tpu_custom_call.1} parent=11 // pred_check_branch
          %230 = sbr.rel (%p228) target = $region20
        $region19: #{tpu_custom_call.1} parent=11 // pred_region
          %s232 = ssub.s32 4096, 4096
          %233 = vsyncadd [#allocation6], %s232
          %s234 = sshll.u32 [#allocation7], 4
          %s235 = int_to_ptr.vmem [resolvable:$true] %s234
          %240 = dma.hbm_to_vmem [thread:$0]  %s2, 4096, %s235, [#allocation6], 128, 128, 8
        $region20: #{tpu_custom_call.1} parent=11 // pred_fallthru
          _
        // Predicated region
        $region21: #{tpu_custom_call.1} parent=11 // pred_check
          %p241 = pneg %p111
        $region22: #{tpu_custom_call.1} parent=11 // pred_check_branch
          %243 = sbr.rel (%p241) target = $region24
        $region23: #{tpu_custom_call.1} parent=11 // pred_region
          %s245 = ssub.s32 8192, 8192
          %246 = vsyncadd [#allocation9], %s245
          %s247 = sshll.u32 [#allocation8], 4
          %s248 = int_to_ptr.vmem [resolvable:$true] %s247
          %253 = dma.hbm_to_vmem [thread:$0]  %s3, 8192, %s248, [#allocation9], 256, 256, 16
        $region24: #{tpu_custom_call.1} parent=11 // pred_fallthru
          _
        // Predicated region
        $region25: #{tpu_custom_call.1} parent=11 // pred_check
          %p254 = pneg %p132
        $region26: #{tpu_custom_call.1} parent=11 // pred_check_branch
          %256 = sbr.rel (%p254) target = $region28
        $region27: #{tpu_custom_call.1} parent=11 // pred_region
          %s258 = ssub.s32 8192, 8192
          %259 = vsyncadd [#allocation9], %s258
          %s260 = sshll.u32 [#allocation10], 4
          %s261 = int_to_ptr.vmem [resolvable:$true] %s260
          %266 = dma.hbm_to_vmem [thread:$0]  %s4, 8192, %s261, [#allocation9], 128, 128, 8
        $region28: #{tpu_custom_call.1} parent=11 // pred_fallthru
          _
        // Predicated region
        $region29: #{tpu_custom_call.1} parent=11 // pred_check
          %p267 = pneg %p153
        $region30: #{tpu_custom_call.1} parent=11 // pred_check_branch
          %269 = sbr.rel (%p267) target = $region32
        $region31: #{tpu_custom_call.1} parent=11 // pred_region
          %s271 = ssub.s32 512, 512
          %272 = vsyncadd [#allocation12], %s271
          %s273 = sshll.u32 [#allocation11], 4
          %s274 = int_to_ptr.vmem [resolvable:$true] %s273
          %279 = dma.hbm_to_vmem [thread:$0]  %s5, 512, %s274, [#allocation12], 256, 256, 16
        $region32: #{tpu_custom_call.1} parent=11 // pred_fallthru
          _
        // Predicated region
        $region33: #{tpu_custom_call.1} parent=11 // pred_check
          %p280 = pneg %p174
        $region34: #{tpu_custom_call.1} parent=11 // pred_check_branch
          %282 = sbr.rel (%p280) target = $region36
        $region35: #{tpu_custom_call.1} parent=11 // pred_region
          _
        $region36: #{tpu_custom_call.1} parent=11 // pred_fallthru
          _
      $region12: #{tpu_custom_call.1} parent=5 // pred_fallthru
        _
      %p283 = scmp.lt.s32.totalorder %s22, 2
      // Predicated region
      $region37: #{tpu_custom_call.1} parent=5 // pred_check
        %p284 = pneg %p283
      $region38: #{tpu_custom_call.1} parent=5 // pred_check_branch
        %286 = sbr.rel (%p284) target = $region40
      $region39: #{tpu_custom_call.1} parent=5 // pred_region
        // Predicated region
        $region41: #{tpu_custom_call.1} parent=39 // pred_check
          %p287 = pneg %p42
        $region42: #{tpu_custom_call.1} parent=39 // pred_check_branch
          %289 = sbr.rel (%p287) target = $region44
        $region43: #{tpu_custom_call.1} parent=39 // pred_region
          %s290 = sand.u32 %s32, 1
          %s291 = scalar_lea.sflag [#allocation3], %s290
          %s292 = sand.u32 %s32, 1
          %s293 = smul.addr %s292, 32
          %s294 = scalar_lea.vmem [#allocation2], %s293
          %s296 = ssub.s32 512, 512
          %297 = vsyncadd %s291, %s296
          %s298 = smul.addr %s22, 4
          %s299 = smul.addr %s298, 128
          %s300 = scalar_lea.hbm %s0, %s299
          %s301 = sshll.u32 %s294, 4
          %s302 = int_to_ptr.vmem [resolvable:$true] %s301
          %307 = dma.hbm_to_vmem [thread:$0]  %s300, 512, %s302, %s291, 256, 256, 16
        $region44: #{tpu_custom_call.1} parent=39 // pred_fallthru
          _
      $region40: #{tpu_custom_call.1} parent=5 // pred_fallthru
        _
      %p308 = scmp.le.s32.totalorder 1, %s22
      %p309 = scmp.lt.s32.totalorder %s22, 3
      %p310 = pnand %p308, %p309
      %p311 = pneg %p310
      // Predicated region
      $region45: #{tpu_custom_call.1} parent=5 // pred_check
        _
      $region46: #{tpu_custom_call.1} parent=5 // pred_check_branch
        %313 = sbr.rel (%p310) target = $region48
      $region47: #{tpu_custom_call.1} parent=5 // pred_region
        %s314 = ssub.s32 %s22, 1
        %s315 = sand.u32 %s35, 1
        %s316 = scalar_lea.sflag [#allocation3], %s315
        %s317 = sand.u32 %s35, 1
        %s318 = smul.addr %s317, 32
        %s319 = scalar_lea.vmem [#allocation2], %s318
        // Predicated region
        $region49: #{tpu_custom_call.1} parent=47 // pred_check
          %p320 = pneg %p48
        $region50: #{tpu_custom_call.1} parent=47 // pred_check_branch
          %322 = sbr.rel (%p320) target = $region52
        $region51: #{tpu_custom_call.1} parent=47 // pred_region
          %323 = dma.done %s316, 512
        $region52: #{tpu_custom_call.1} parent=47 // pred_fallthru
          _
        // Predicated region
        $region53: #{tpu_custom_call.1} parent=47 // pred_check
          %p324 = pneg %p69
        $region54: #{tpu_custom_call.1} parent=47 // pred_check_branch
          %326 = sbr.rel (%p324) target = $region56
        $region55: #{tpu_custom_call.1} parent=47 // pred_region
          %327 = dma.done [#allocation6], 12288
        $region56: #{tpu_custom_call.1} parent=47 // pred_fallthru
          _
        // Predicated region
        $region57: #{tpu_custom_call.1} parent=47 // pred_check
          %p328 = pneg %p90
        $region58: #{tpu_custom_call.1} parent=47 // pred_check_branch
          %330 = sbr.rel (%p328) target = $region60
        $region59: #{tpu_custom_call.1} parent=47 // pred_region
          %331 = dma.done [#allocation6], 4096
        $region60: #{tpu_custom_call.1} parent=47 // pred_fallthru
          _
        // Predicated region
        $region61: #{tpu_custom_call.1} parent=47 // pred_check
          %p332 = pneg %p111
        $region62: #{tpu_custom_call.1} parent=47 // pred_check_branch
          %334 = sbr.rel (%p332) target = $region64
        $region63: #{tpu_custom_call.1} parent=47 // pred_region
          %335 = dma.done [#allocation9], 8192
        $region64: #{tpu_custom_call.1} parent=47 // pred_fallthru
          _
        // Predicated region
        $region65: #{tpu_custom_call.1} parent=47 // pred_check
          %p336 = pneg %p132
        $region66: #{tpu_custom_call.1} parent=47 // pred_check_branch
          %338 = sbr.rel (%p336) target = $region68
        $region67: #{tpu_custom_call.1} parent=47 // pred_region
          %339 = dma.done [#allocation9], 8192
        $region68: #{tpu_custom_call.1} parent=47 // pred_fallthru
          _
        // Predicated region
        $region69: #{tpu_custom_call.1} parent=47 // pred_check
          %p340 = pneg %p153
        $region70: #{tpu_custom_call.1} parent=47 // pred_check_branch
          %342 = sbr.rel (%p340) target = $region72
        $region71: #{tpu_custom_call.1} parent=47 // pred_region
          %343 = dma.done [#allocation12], 512
        $region72: #{tpu_custom_call.1} parent=47 // pred_fallthru
          _
        %s344 = sand.u32 %s35, 1
        %s345 = scalar_lea.sflag [#allocation3], %s344
        %s346 = sand.u32 %s35, 1
        %s347 = smul.addr %s346, 32
        %s348 = scalar_lea.vmem [#allocation2], %s347
        %p349 = pneg %p48
        %p350 = pneg %p45
        %p351 = pneg %p69
        %p352 = pneg %p66
        %p353 = pneg %p90
        %p354 = pneg %p87
        %p355 = pneg %p111
        %p356 = pneg %p108
        %p357 = pneg %p132
        %p358 = pneg %p129
        %p359 = pneg %p153
        %p360 = pneg %p150
        %p361 = pneg %p174
        %p362 = pneg %p171
        %p363 = pneg %p200
        %p364 = pneg %p197
        %s365 = sand.u32 %s187, 1
        %s366 = scalar_lea.sflag [#allocation4], %s365
        %s367 = sand.u32 %s187, 1
        %s368 = smul.addr %s367, 32
        %s369 = scalar_lea.vmem [#allocation13], %s368
        %v371 = vld [vmem:[#allocation11] ss:$8 sm:$0x3]
        %s372 = scalar_lea.vmem [#allocation11], 1
        %v373 = vld [vmem:[%s372] ss:$8 sm:$0x3]
        %s374 = scalar_lea.vmem [#allocation11], 2
        %v375 = vld [vmem:[%s374] ss:$8 sm:$0x3]
        %s376 = scalar_lea.vmem [#allocation11], 3
        %v377 = vld [vmem:[%s376] ss:$8 sm:$0x3]
        %s378 = scalar_lea.vmem [#allocation11], 4
        %v379 = vld [vmem:[%s378] ss:$8 sm:$0x3]
        %s380 = scalar_lea.vmem [#allocation11], 5
        %v381 = vld [vmem:[%s380] ss:$8 sm:$0x3]
        %s382 = scalar_lea.vmem [#allocation11], 6
        %v383 = vld [vmem:[%s382] ss:$8 sm:$0x3]
        %s384 = scalar_lea.vmem [#allocation11], 7
        %v385 = vld [vmem:[%s384] ss:$8 sm:$0x3]
        %s386 = scalar_lea.vmem [#allocation11], 16
        %v387 = vld [vmem:[%s386] ss:$8 sm:$0x3]
        %v388 = vld [vmem:[%s319] sm:$0xff]
        %v389 = vld [vmem:[%s319 + $0x8] sm:$0xff]
        %v390 = vld [vmem:[%s319 + $0x10] sm:$0xff]
        %v391 = vld [vmem:[%s319 + $0x18] sm:$0xff]
        %v392 = vadd.f32 %v388, %v389
        %393 = vadd.xlane.f32.xlu0 %v392
        %v394 = vpop.xlane.xlu0 %393
        %v395 = vadd.f32 %v390, %v391
        %396 = vadd.xlane.f32.xlu0 %v395
        %v397 = vpop.xlane.xlu0 %396
        %v398 = vrcp.pop 256.0
        %v399 = vmul.f32 %v394, %v398
        %v400 = vmul.f32 %v397, %v398
        %v401 = vsub.f32 %v388, %v399
        %v402 = vsub.f32 %v389, %v399
        %v403 = vsub.f32 %v390, %v400
        %v404 = vsub.f32 %v391, %v400
        %v405 = vmul.f32 %v401, %v401
        %v406 = vmul.f32 %v402, %v402
        %v407 = vmul.f32 %v403, %v403
        %v408 = vmul.f32 %v404, %v404
        %v409 = vadd.f32 %v405, %v406
        %410 = vadd.xlane.f32.xlu0 %v409
        %v411 = vpop.xlane.xlu0 %410
        %v412 = vadd.f32 %v407, %v408
        %413 = vadd.xlane.f32.xlu0 %v412
        %v414 = vpop.xlane.xlu0 %413
        %v415 = vmul.f32 %v411, %v398
        %v416 = vmul.f32 %v414, %v398
        %v417 = vadd.f32 %v415, 1e-06
        %v418 = vadd.f32 %v416, 1e-06
        %v419 = vrsqrt.pop %v417
        %v420 = vrsqrt.pop %v418
        %v421 = vmul.f32 %v401, %v419
        %v422 = vmul.f32 %v402, %v419
        %v423 = vmul.f32 %v403, %v420
        %v424 = vmul.f32 %v404, %v420
        %v426 = vlaneseq
        %v427 = vshrl.u32 %v426, 7
        %v428 = vsub.s32 0, %v427
        %v429 = vrot.slane %v379, %v428
        %v430 = vlaneseq
        %v431 = vshrl.u32 %v430, 7
        %v432 = vsub.s32 1, %v431
        %v433 = vrot.slane %v379, %v432
        %v436 = vmul.f32 %v421, %v429
        %v437 = vmul.f32 %v422, %v433
        %v438 = vmul.f32 %v423, %v429
        %v439 = vmul.f32 %v424, %v433
        %v441 = vlaneseq
        %v442 = vshrl.u32 %v441, 7
        %v443 = vsub.s32 0, %v442
        %v444 = vrot.slane %v381, %v443
        %v445 = vlaneseq
        %v446 = vshrl.u32 %v445, 7
        %v447 = vsub.s32 1, %v446
        %v448 = vrot.slane %v381, %v447
        %v451 = vadd.f32 %v436, %v444
        %v452 = vadd.f32 %v437, %v448
        %v453 = vadd.f32 %v438, %v444
        %v454 = vadd.f32 %v439, %v448
        %v455 = vpack.c.bf16 %v453, %v451
        %v456 = vpack.c.bf16 %v454, %v452
        %v457 = vld [vmem:[#allocation5] sm:$0xff]
        %v458 = vld [vmem:[#allocation5 + $0x8] sm:$0xff]
        %v459 = vld [vmem:[#allocation5 + $0x10] sm:$0xff]
        %v460 = vld [vmem:[#allocation5 + $0x18] sm:$0xff]
        %v461 = vld [vmem:[#allocation5 + $0x20] sm:$0xff]
        %v462 = vld [vmem:[#allocation5 + $0x28] sm:$0xff]
        %v463 = vld [vmem:[#allocation5 + $0x30] sm:$0xff]
        %v464 = vld [vmem:[#allocation5 + $0x38] sm:$0xff]
        %v465 = vld [vmem:[#allocation5 + $0x40] sm:$0xff]
        %v466 = vld [vmem:[#allocation5 + $0x48] sm:$0xff]
        %v467 = vld [vmem:[#allocation5 + $0x50] sm:$0xff]
        %v468 = vld [vmem:[#allocation5 + $0x58] sm:$0xff]
        %v469 = vld [vmem:[#allocation5 + $0x60] sm:$0xff]
        %v470 = vld [vmem:[#allocation5 + $0x68] sm:$0xff]
        %v471 = vld [vmem:[#allocation5 + $0x70] sm:$0xff]
        %v472 = vld [vmem:[#allocation5 + $0x78] sm:$0xff]
        %v473 = vld [vmem:[#allocation5 + $0x80] sm:$0xff]
        %v474 = vld [vmem:[#allocation5 + $0x88] sm:$0xff]
        %v475 = vld [vmem:[#allocation5 + $0x90] sm:$0xff]
        %v476 = vld [vmem:[#allocation5 + $0x98] sm:$0xff]
        %v477 = vld [vmem:[#allocation5 + $0xa0] sm:$0xff]
        %v478 = vld [vmem:[#allocation5 + $0xa8] sm:$0xff]
        %v479 = vld [vmem:[#allocation5 + $0xb0] sm:$0xff]
        %v480 = vld [vmem:[#allocation5 + $0xb8] sm:$0xff]
        %v481 = vld [vmem:[#allocation5 + $0xc0] sm:$0xff]
        %v482 = vld [vmem:[#allocation5 + $0xc8] sm:$0xff]
        %v483 = vld [vmem:[#allocation5 + $0xd0] sm:$0xff]
        %v484 = vld [vmem:[#allocation5 + $0xd8] sm:$0xff]
        %v485 = vld [vmem:[#allocation5 + $0xe0] sm:$0xff]
        %v486 = vld [vmem:[#allocation5 + $0xe8] sm:$0xff]
        %v487 = vld [vmem:[#allocation5 + $0xf0] sm:$0xff]
        %v488 = vld [vmem:[#allocation5 + $0xf8] sm:$0xff]
        %v489 = vld [vmem:[#allocation5 + $0x100] sm:$0xff]
        %v490 = vld [vmem:[#allocation5 + $0x108] sm:$0xff]
        %v491 = vld [vmem:[#allocation5 + $0x110] sm:$0xff]
        %v492 = vld [vmem:[#allocation5 + $0x118] sm:$0xff]
        %v493 = vld [vmem:[#allocation5 + $0x120] sm:$0xff]
        %v494 = vld [vmem:[#allocation5 + $0x128] sm:$0xff]
        %v495 = vld [vmem:[#allocation5 + $0x130] sm:$0xff]
        %v496 = vld [vmem:[#allocation5 + $0x138] sm:$0xff]
        %v497 = vld [vmem:[#allocation5 + $0x140] sm:$0xff]
        %v498 = vld [vmem:[#allocation5 + $0x148] sm:$0xff]
        %v499 = vld [vmem:[#allocation5 + $0x150] sm:$0xff]
        %v500 = vld [vmem:[#allocation5 + $0x158] sm:$0xff]
        %v501 = vld [vmem:[#allocation5 + $0x160] sm:$0xff]
        %v502 = vld [vmem:[#allocation5 + $0x168] sm:$0xff]
        %v503 = vld [vmem:[#allocation5 + $0x170] sm:$0xff]
        %v504 = vld [vmem:[#allocation5 + $0x178] sm:$0xff]
        %v505 = vld [vmem:[#allocation5 + $0x180] sm:$0xff]
        %v506 = vld [vmem:[#allocation5 + $0x188] sm:$0xff]
        %v507 = vld [vmem:[#allocation5 + $0x190] sm:$0xff]
        %v508 = vld [vmem:[#allocation5 + $0x198] sm:$0xff]
        %v509 = vld [vmem:[#allocation5 + $0x1a0] sm:$0xff]
        %v510 = vld [vmem:[#allocation5 + $0x1a8] sm:$0xff]
        %v511 = vld [vmem:[#allocation5 + $0x1b0] sm:$0xff]
        %v512 = vld [vmem:[#allocation5 + $0x1b8] sm:$0xff]
        %v513 = vld [vmem:[#allocation5 + $0x1c0] sm:$0xff]
        %v514 = vld [vmem:[#allocation5 + $0x1c8] sm:$0xff]
        %v515 = vld [vmem:[#allocation5 + $0x1d0] sm:$0xff]
        %v516 = vld [vmem:[#allocation5 + $0x1d8] sm:$0xff]
        %v517 = vld [vmem:[#allocation5 + $0x1e0] sm:$0xff]
        %v518 = vld [vmem:[#allocation5 + $0x1e8] sm:$0xff]
        %v519 = vld [vmem:[#allocation5 + $0x1f0] sm:$0xff]
        %v520 = vld [vmem:[#allocation5 + $0x1f8] sm:$0xff]
        %v521 = vld [vmem:[#allocation5 + $0x200] sm:$0xff]
        %v522 = vld [vmem:[#allocation5 + $0x208] sm:$0xff]
        %v523 = vld [vmem:[#allocation5 + $0x210] sm:$0xff]
        %v524 = vld [vmem:[#allocation5 + $0x218] sm:$0xff]
        %v525 = vld [vmem:[#allocation5 + $0x220] sm:$0xff]
        %v526 = vld [vmem:[#allocation5 + $0x228] sm:$0xff]
        %v527 = vld [vmem:[#allocation5 + $0x230] sm:$0xff]
        %v528 = vld [vmem:[#allocation5 + $0x238] sm:$0xff]
        %v529 = vld [vmem:[#allocation5 + $0x240] sm:$0xff]
        %v530 = vld [vmem:[#allocation5 + $0x248] sm:$0xff]
        %v531 = vld [vmem:[#allocation5 + $0x250] sm:$0xff]
        %v532 = vld [vmem:[#allocation5 + $0x258] sm:$0xff]
        %v533 = vld [vmem:[#allocation5 + $0x260] sm:$0xff]
        %v534 = vld [vmem:[#allocation5 + $0x268] sm:$0xff]
        %v535 = vld [vmem:[#allocation5 + $0x270] sm:$0xff]
        %v536 = vld [vmem:[#allocation5 + $0x278] sm:$0xff]
        %v537 = vld [vmem:[#allocation5 + $0x280] sm:$0xff]
        %v538 = vld [vmem:[#allocation5 + $0x288] sm:$0xff]
        %v539 = vld [vmem:[#allocation5 + $0x290] sm:$0xff]
        %v540 = vld [vmem:[#allocation5 + $0x298] sm:$0xff]
        %v541 = vld [vmem:[#allocation5 + $0x2a0] sm:$0xff]
        %v542 = vld [vmem:[#allocation5 + $0x2a8] sm:$0xff]
        %v543 = vld [vmem:[#allocation5 + $0x2b0] sm:$0xff]
        %v544 = vld [vmem:[#allocation5 + $0x2b8] sm:$0xff]
        %v545 = vld [vmem:[#allocation5 + $0x2c0] sm:$0xff]
        %v546 = vld [vmem:[#allocation5 + $0x2c8] sm:$0xff]
        %v547 = vld [vmem:[#allocation5 + $0x2d0] sm:$0xff]
        %v548 = vld [vmem:[#allocation5 + $0x2d8] sm:$0xff]
        %v549 = vld [vmem:[#allocation5 + $0x2e0] sm:$0xff]
        %v550 = vld [vmem:[#allocation5 + $0x2e8] sm:$0xff]
        %v551 = vld [vmem:[#allocation5 + $0x2f0] sm:$0xff]
        %v552 = vld [vmem:[#allocation5 + $0x2f8] sm:$0xff]
        %v649 = vunpack.c.l.b16 %v457
        %v650 = vunpack.c.h.b16 %v457
        %v651 = vunpack.c.l.b16 %v458
        %v652 = vunpack.c.h.b16 %v458
        %v653 = vunpack.c.l.b16 %v459
        %v654 = vunpack.c.h.b16 %v459
        %v655 = vunpack.c.l.b16 %v460
        %v656 = vunpack.c.h.b16 %v460
        %v657 = vunpack.c.l.b16 %v461
        %v658 = vunpack.c.h.b16 %v461
        %v659 = vunpack.c.l.b16 %v462
        %v660 = vunpack.c.h.b16 %v462
        %v661 = vunpack.c.l.b16 %v463
        %v662 = vunpack.c.h.b16 %v463
        %v663 = vunpack.c.l.b16 %v464
        %v664 = vunpack.c.h.b16 %v464
        %v665 = vunpack.c.l.b16 %v465
        %v666 = vunpack.c.h.b16 %v465
        %v667 = vunpack.c.l.b16 %v466
        %v668 = vunpack.c.h.b16 %v466
        %v669 = vunpack.c.l.b16 %v467
        %v670 = vunpack.c.h.b16 %v467
        %v671 = vunpack.c.l.b16 %v468
        %v672 = vunpack.c.h.b16 %v468
        %v673 = vunpack.c.l.b16 %v469
        %v674 = vunpack.c.h.b16 %v469
        %v675 = vunpack.c.l.b16 %v470
        %v676 = vunpack.c.h.b16 %v470
        %v677 = vunpack.c.l.b16 %v471
        %v678 = vunpack.c.h.b16 %v471
        %v679 = vunpack.c.l.b16 %v472
        %v680 = vunpack.c.h.b16 %v472
        %v681 = vunpack.c.l.b16 %v473
        %v682 = vunpack.c.h.b16 %v473
        %v683 = vunpack.c.l.b16 %v474
        %v684 = vunpack.c.h.b16 %v474
        %v685 = vunpack.c.l.b16 %v475
        %v686 = vunpack.c.h.b16 %v475
        %v687 = vunpack.c.l.b16 %v476
        %v688 = vunpack.c.h.b16 %v476
        %v689 = vunpack.c.l.b16 %v477
        %v690 = vunpack.c.h.b16 %v477
        %v691 = vunpack.c.l.b16 %v478
        %v692 = vunpack.c.h.b16 %v478
        %v693 = vunpack.c.l.b16 %v479
        %v694 = vunpack.c.h.b16 %v479
        %v695 = vunpack.c.l.b16 %v480
        %v696 = vunpack.c.h.b16 %v480
        %v697 = vunpack.c.l.b16 %v481
        %v698 = vunpack.c.h.b16 %v481
        %v699 = vunpack.c.l.b16 %v482
        %v700 = vunpack.c.h.b16 %v482
        %v701 = vunpack.c.l.b16 %v483
        %v702 = vunpack.c.h.b16 %v483
        %v703 = vunpack.c.l.b16 %v484
        %v704 = vunpack.c.h.b16 %v484
        %v705 = vunpack.c.l.b16 %v485
        %v706 = vunpack.c.h.b16 %v485
        %v707 = vunpack.c.l.b16 %v486
        %v708 = vunpack.c.h.b16 %v486
        %v709 = vunpack.c.l.b16 %v487
        %v710 = vunpack.c.h.b16 %v487
        %v711 = vunpack.c.l.b16 %v488
        %v712 = vunpack.c.h.b16 %v488
        %v713 = vunpack.c.l.b16 %v489
        %v714 = vunpack.c.h.b16 %v489
        %v715 = vunpack.c.l.b16 %v490
        %v716 = vunpack.c.h.b16 %v490
        %v717 = vunpack.c.l.b16 %v491
        %v718 = vunpack.c.h.b16 %v491
        %v719 = vunpack.c.l.b16 %v492
        %v720 = vunpack.c.h.b16 %v492
        %v721 = vunpack.c.l.b16 %v493
        %v722 = vunpack.c.h.b16 %v493
        %v723 = vunpack.c.l.b16 %v494
        %v724 = vunpack.c.h.b16 %v494
        %v725 = vunpack.c.l.b16 %v495
        %v726 = vunpack.c.h.b16 %v495
        %v727 = vunpack.c.l.b16 %v496
        %v728 = vunpack.c.h.b16 %v496
        %v729 = vunpack.c.l.b16 %v497
        %v730 = vunpack.c.h.b16 %v497
        %v731 = vunpack.c.l.b16 %v498
        %v732 = vunpack.c.h.b16 %v498
        %v733 = vunpack.c.l.b16 %v499
        %v734 = vunpack.c.h.b16 %v499
        %v735 = vunpack.c.l.b16 %v500
        %v736 = vunpack.c.h.b16 %v500
        %v737 = vunpack.c.l.b16 %v501
        %v738 = vunpack.c.h.b16 %v501
        %v739 = vunpack.c.l.b16 %v502
        %v740 = vunpack.c.h.b16 %v502
        %v741 = vunpack.c.l.b16 %v503
        %v742 = vunpack.c.h.b16 %v503
        %v743 = vunpack.c.l.b16 %v504
        %v744 = vunpack.c.h.b16 %v504
        %v745 = vunpack.c.l.b16 %v505
        %v746 = vunpack.c.h.b16 %v505
        %v747 = vunpack.c.l.b16 %v506
        %v748 = vunpack.c.h.b16 %v506
        %v749 = vunpack.c.l.b16 %v507
        %v750 = vunpack.c.h.b16 %v507
        %v751 = vunpack.c.l.b16 %v508
        %v752 = vunpack.c.h.b16 %v508
        %v753 = vunpack.c.l.b16 %v509
        %v754 = vunpack.c.h.b16 %v509
        %v755 = vunpack.c.l.b16 %v510
        %v756 = vunpack.c.h.b16 %v510
        %v757 = vunpack.c.l.b16 %v511
        %v758 = vunpack.c.h.b16 %v511
        %v759 = vunpack.c.l.b16 %v512
        %v760 = vunpack.c.h.b16 %v512
        %v761 = vunpack.c.l.b16 %v513
        %v762 = vunpack.c.h.b16 %v513
        %v763 = vunpack.c.l.b16 %v514
        %v764 = vunpack.c.h.b16 %v514
        %v765 = vunpack.c.l.b16 %v515
        %v766 = vunpack.c.h.b16 %v515
        %v767 = vunpack.c.l.b16 %v516
        %v768 = vunpack.c.h.b16 %v516
        %v769 = vunpack.c.l.b16 %v517
        %v770 = vunpack.c.h.b16 %v517
        %v771 = vunpack.c.l.b16 %v518
        %v772 = vunpack.c.h.b16 %v518
        %v773 = vunpack.c.l.b16 %v519
        %v774 = vunpack.c.h.b16 %v519
        %v775 = vunpack.c.l.b16 %v520
        %v776 = vunpack.c.h.b16 %v520
        %v777 = vunpack.c.l.b16 %v521
        %v778 = vunpack.c.h.b16 %v521
        %v779 = vunpack.c.l.b16 %v522
        %v780 = vunpack.c.h.b16 %v522
        %v781 = vunpack.c.l.b16 %v523
        %v782 = vunpack.c.h.b16 %v523
        %v783 = vunpack.c.l.b16 %v524
        %v784 = vunpack.c.h.b16 %v524
        %v785 = vunpack.c.l.b16 %v525
        %v786 = vunpack.c.h.b16 %v525
        %v787 = vunpack.c.l.b16 %v526
        %v788 = vunpack.c.h.b16 %v526
        %v789 = vunpack.c.l.b16 %v527
        %v790 = vunpack.c.h.b16 %v527
        %v791 = vunpack.c.l.b16 %v528
        %v792 = vunpack.c.h.b16 %v528
        %v793 = vunpack.c.l.b16 %v529
        %v794 = vunpack.c.h.b16 %v529
        %v795 = vunpack.c.l.b16 %v530
        %v796 = vunpack.c.h.b16 %v530
        %v797 = vunpack.c.l.b16 %v531
        %v798 = vunpack.c.h.b16 %v531
        %v799 = vunpack.c.l.b16 %v532
        %v800 = vunpack.c.h.b16 %v532
        %v801 = vunpack.c.l.b16 %v533
        %v802 = vunpack.c.h.b16 %v533
        %v803 = vunpack.c.l.b16 %v534
        %v804 = vunpack.c.h.b16 %v534
        %v805 = vunpack.c.l.b16 %v535
        %v806 = vunpack.c.h.b16 %v535
        %v807 = vunpack.c.l.b16 %v536
        %v808 = vunpack.c.h.b16 %v536
        %v809 = vunpack.c.l.b16 %v537
        %v810 = vunpack.c.h.b16 %v537
        %v811 = vunpack.c.l.b16 %v538
        %v812 = vunpack.c.h.b16 %v538
        %v813 = vunpack.c.l.b16 %v539
        %v814 = vunpack.c.h.b16 %v539
        %v815 = vunpack.c.l.b16 %v540
        %v816 = vunpack.c.h.b16 %v540
        %v817 = vunpack.c.l.b16 %v541
        %v818 = vunpack.c.h.b16 %v541
        %v819 = vunpack.c.l.b16 %v542
        %v820 = vunpack.c.h.b16 %v542
        %v821 = vunpack.c.l.b16 %v543
        %v822 = vunpack.c.h.b16 %v543
        %v823 = vunpack.c.l.b16 %v544
        %v824 = vunpack.c.h.b16 %v544
        %v825 = vunpack.c.l.b16 %v545
        %v826 = vunpack.c.h.b16 %v545
        %v827 = vunpack.c.l.b16 %v546
        %v828 = vunpack.c.h.b16 %v546
        %v829 = vunpack.c.l.b16 %v547
        %v830 = vunpack.c.h.b16 %v547
        %v831 = vunpack.c.l.b16 %v548
        %v832 = vunpack.c.h.b16 %v548
        %v833 = vunpack.c.l.b16 %v549
        %v834 = vunpack.c.h.b16 %v549
        %v835 = vunpack.c.l.b16 %v550
        %v836 = vunpack.c.h.b16 %v550
        %v837 = vunpack.c.l.b16 %v551
        %v838 = vunpack.c.h.b16 %v551
        %v839 = vunpack.c.l.b16 %v552
        %v840 = vunpack.c.h.b16 %v552
        %v841 = vpack.c.b16 %v655, %v649
        %v842 = vpack.c.b16 %v656, %v650
        %v843 = vpack.c.b16 %v657, %v651
        %v844 = vpack.c.b16 %v658, %v652
        %v845 = vpack.c.b16 %v659, %v653
        %v846 = vpack.c.b16 %v660, %v654
        %v847 = vpack.c.b16 %v667, %v661
        %v848 = vpack.c.b16 %v668, %v662
        %v849 = vpack.c.b16 %v669, %v663
        %v850 = vpack.c.b16 %v670, %v664
        %v851 = vpack.c.b16 %v671, %v665
        %v852 = vpack.c.b16 %v672, %v666
        %v853 = vpack.c.b16 %v679, %v673
        %v854 = vpack.c.b16 %v680, %v674
        %v855 = vpack.c.b16 %v681, %v675
        %v856 = vpack.c.b16 %v682, %v676
        %v857 = vpack.c.b16 %v683, %v677
        %v858 = vpack.c.b16 %v684, %v678
        %v859 = vpack.c.b16 %v691, %v685
        %v860 = vpack.c.b16 %v692, %v686
        %v861 = vpack.c.b16 %v693, %v687
        %v862 = vpack.c.b16 %v694, %v688
        %v863 = vpack.c.b16 %v695, %v689
        %v864 = vpack.c.b16 %v696, %v690
        %v865 = vpack.c.b16 %v703, %v697
        %v866 = vpack.c.b16 %v704, %v698
        %v867 = vpack.c.b16 %v705, %v699
        %v868 = vpack.c.b16 %v706, %v700
        %v869 = vpack.c.b16 %v707, %v701
        %v870 = vpack.c.b16 %v708, %v702
        %v871 = vpack.c.b16 %v715, %v709
        %v872 = vpack.c.b16 %v716, %v710
        %v873 = vpack.c.b16 %v717, %v711
        %v874 = vpack.c.b16 %v718, %v712
        %v875 = vpack.c.b16 %v719, %v713
        %v876 = vpack.c.b16 %v720, %v714
        %v877 = vpack.c.b16 %v727, %v721
        %v878 = vpack.c.b16 %v728, %v722
        %v879 = vpack.c.b16 %v729, %v723
        %v880 = vpack.c.b16 %v730, %v724
        %v881 = vpack.c.b16 %v731, %v725
        %v882 = vpack.c.b16 %v732, %v726
        %v883 = vpack.c.b16 %v739, %v733
        %v884 = vpack.c.b16 %v740, %v734
        %v885 = vpack.c.b16 %v741, %v735
        %v886 = vpack.c.b16 %v742, %v736
        %v887 = vpack.c.b16 %v743, %v737
        %v888 = vpack.c.b16 %v744, %v738
        %v889 = vpack.c.b16 %v751, %v745
        %v890 = vpack.c.b16 %v752, %v746
        %v891 = vpack.c.b16 %v753, %v747
        %v892 = vpack.c.b16 %v754, %v748
        %v893 = vpack.c.b16 %v755, %v749
        %v894 = vpack.c.b16 %v756, %v750
        %v895 = vpack.c.b16 %v763, %v757
        %v896 = vpack.c.b16 %v764, %v758
        %v897 = vpack.c.b16 %v765, %v759
        %v898 = vpack.c.b16 %v766, %v760
        %v899 = vpack.c.b16 %v767, %v761
        %v900 = vpack.c.b16 %v768, %v762
        %v901 = vpack.c.b16 %v775, %v769
        %v902 = vpack.c.b16 %v776, %v770
        %v903 = vpack.c.b16 %v777, %v771
        %v904 = vpack.c.b16 %v778, %v772
        %v905 = vpack.c.b16 %v779, %v773
        %v906 = vpack.c.b16 %v780, %v774
        %v907 = vpack.c.b16 %v787, %v781
        %v908 = vpack.c.b16 %v788, %v782
        %v909 = vpack.c.b16 %v789, %v783
        %v910 = vpack.c.b16 %v790, %v784
        %v911 = vpack.c.b16 %v791, %v785
        %v912 = vpack.c.b16 %v792, %v786
        %v913 = vpack.c.b16 %v799, %v793
        %v914 = vpack.c.b16 %v800, %v794
        %v915 = vpack.c.b16 %v801, %v795
        %v916 = vpack.c.b16 %v802, %v796
        %v917 = vpack.c.b16 %v803, %v797
        %v918 = vpack.c.b16 %v804, %v798
        %v919 = vpack.c.b16 %v811, %v805
        %v920 = vpack.c.b16 %v812, %v806
        %v921 = vpack.c.b16 %v813, %v807
        %v922 = vpack.c.b16 %v814, %v808
        %v923 = vpack.c.b16 %v815, %v809
        %v924 = vpack.c.b16 %v816, %v810
        %v925 = vpack.c.b16 %v823, %v817
        %v926 = vpack.c.b16 %v824, %v818
        %v927 = vpack.c.b16 %v825, %v819
        %v928 = vpack.c.b16 %v826, %v820
        %v929 = vpack.c.b16 %v827, %v821
        %v930 = vpack.c.b16 %v828, %v822
        %v931 = vpack.c.b16 %v835, %v829
        %v932 = vpack.c.b16 %v836, %v830
        %v933 = vpack.c.b16 %v837, %v831
        %v934 = vpack.c.b16 %v838, %v832
        %v935 = vpack.c.b16 %v839, %v833
        %v936 = vpack.c.b16 %v840, %v834
        %1033 = vmatprep.subr.bf16.mxu0 %v842
        %1034 = vmatpush1.bf16.msra.mxu0 %v841
        %1035 = vmatprep.subr.bf16.mxu0 %v848
        %1036 = vmatpush1.bf16.msra.mxu0 %v847
        %1037 = vmatprep.subr.bf16.mxu0 %v854
        %1038 = vmatpush1.bf16.msra.mxu0 %v853
        %1039 = vmatprep.subr.bf16.mxu0 %v860
        %1040 = vmatpush1.bf16.msra.mxu0 %v859
        %1041 = vmatprep.subr.bf16.mxu0 %v866
        %1042 = vmatpush1.bf16.msra.mxu0 %v865
        %1043 = vmatprep.subr.bf16.mxu0 %v872
        %1044 = vmatpush1.bf16.msra.mxu0 %v871
        %1045 = vmatprep.subr.bf16.mxu0 %v878
        %1046 = vmatpush1.bf16.msra.mxu0 %v877
        %1047 = vmatprep.subr.bf16.mxu0 %v884
        %1048 = vmatpush1.bf16.msra.mxu0 %v883
        %1049 = vmatprep.subr.bf16.mxu0 %v890
        %1050 = vmatpush1.bf16.msra.mxu0 %v889
        %1051 = vmatprep.subr.bf16.mxu0 %v896
        %1052 = vmatpush1.bf16.msra.mxu0 %v895
        %1053 = vmatprep.subr.bf16.mxu0 %v902
        %1054 = vmatpush1.bf16.msra.mxu0 %v901
        %1055 = vmatprep.subr.bf16.mxu0 %v908
        %1056 = vmatpush1.bf16.msra.mxu0 %v907
        %1057 = vmatprep.subr.bf16.mxu0 %v914
        %1058 = vmatpush1.bf16.msra.mxu0 %v913
        %1059 = vmatprep.subr.bf16.mxu0 %v920
        %1060 = vmatpush1.bf16.msra.mxu0 %v919
        %1061 = vmatprep.subr.bf16.mxu0 %v926
        %1062 = vmatpush1.bf16.msra.mxu0 %v925
        %1063 = vmatprep.subr.bf16.mxu0 %v932
        %1064 = vmatpush1.bf16.msra.mxu0 %v931
        %1065 = vmatprep.mubr.bf16.mxu0 %v456
        %1066 = vmatmul.mubr.bf16.gmra.mrb[0].mxu0 %v455
        %v1067 = vpop.f32.mrb[0].mxu0
        %v1068 = vadd.f32 0.0, %v1067
        %v1069 = vpop.f32.mrb[0].mxu0
        %v1070 = vadd.f32 0.0, %v1069
        %v1071 = vpop.f32.mrb[0].mxu0
        %v1072 = vadd.f32 0.0, %v1071
        %v1073 = vpop.f32.mrb[0].mxu0
        %v1074 = vadd.f32 0.0, %v1073
        %1075 = vdwg.mxu0
        %1076 = vmatprep.subr.bf16.mxu0 %v844
        %1077 = vmatpush1.bf16.msra.mxu0 %v843
        %1078 = vmatprep.subr.bf16.mxu0 %v850
        %1079 = vmatpush1.bf16.msra.mxu0 %v849
        %1080 = vmatprep.subr.bf16.mxu0 %v856
        %1081 = vmatpush1.bf16.msra.mxu0 %v855
        %1082 = vmatprep.subr.bf16.mxu0 %v862
        %1083 = vmatpush1.bf16.msra.mxu0 %v861
        %1084 = vmatprep.subr.bf16.mxu0 %v868
        %1085 = vmatpush1.bf16.msra.mxu0 %v867
        %1086 = vmatprep.subr.bf16.mxu0 %v874
        %1087 = vmatpush1.bf16.msra.mxu0 %v873
        %1088 = vmatprep.subr.bf16.mxu0 %v880
        %1089 = vmatpush1.bf16.msra.mxu0 %v879
        %1090 = vmatprep.subr.bf16.mxu0 %v886
        %1091 = vmatpush1.bf16.msra.mxu0 %v885
        %1092 = vmatprep.subr.bf16.mxu0 %v892
        %1093 = vmatpush1.bf16.msra.mxu0 %v891
        %1094 = vmatprep.subr.bf16.mxu0 %v898
        %1095 = vmatpush1.bf16.msra.mxu0 %v897
        %1096 = vmatprep.subr.bf16.mxu0 %v904
        %1097 = vmatpush1.bf16.msra.mxu0 %v903
        %1098 = vmatprep.subr.bf16.mxu0 %v910
        %1099 = vmatpush1.bf16.msra.mxu0 %v909
        %1100 = vmatprep.subr.bf16.mxu0 %v916
        %1101 = vmatpush1.bf16.msra.mxu0 %v915
        %1102 = vmatprep.subr.bf16.mxu0 %v922
        %1103 = vmatpush1.bf16.msra.mxu0 %v921
        %1104 = vmatprep.subr.bf16.mxu0 %v928
        %1105 = vmatpush1.bf16.msra.mxu0 %v927
        %1106 = vmatprep.subr.bf16.mxu0 %v934
        %1107 = vmatpush1.bf16.msra.mxu0 %v933
        %1108 = vmatprep.mubr.bf16.mxu0 %v456
        %1109 = vmatmul.mubr.bf16.gmra.mrb[0].mxu0 %v455
        %v1110 = vpop.f32.mrb[0].mxu0
        %v1111 = vadd.f32 0.0, %v1110
        %v1112 = vpop.f32.mrb[0].mxu0
        %v1113 = vadd.f32 0.0, %v1112
        %v1114 = vpop.f32.mrb[0].mxu0
        %v1115 = vadd.f32 0.0, %v1114
        %v1116 = vpop.f32.mrb[0].mxu0
        %v1117 = vadd.f32 0.0, %v1116
        %1118 = vdwg.mxu0
        %1119 = vmatprep.subr.bf16.mxu0 %v846
        %1120 = vmatpush1.bf16.msra.mxu0 %v845
        %1121 = vmatprep.subr.bf16.mxu0 %v852
        %1122 = vmatpush1.bf16.msra.mxu0 %v851
        %1123 = vmatprep.subr.bf16.mxu0 %v858
        %1124 = vmatpush1.bf16.msra.mxu0 %v857
        %1125 = vmatprep.subr.bf16.mxu0 %v864
        %1126 = vmatpush1.bf16.msra.mxu0 %v863
        %1127 = vmatprep.subr.bf16.mxu0 %v870
        %1128 = vmatpush1.bf16.msra.mxu0 %v869
        %1129 = vmatprep.subr.bf16.mxu0 %v876
        %1130 = vmatpush1.bf16.msra.mxu0 %v875
        %1131 = vmatprep.subr.bf16.mxu0 %v882
        %1132 = vmatpush1.bf16.msra.mxu0 %v881
        %1133 = vmatprep.subr.bf16.mxu0 %v888
        %1134 = vmatpush1.bf16.msra.mxu0 %v887
        %1135 = vmatprep.subr.bf16.mxu0 %v894
        %1136 = vmatpush1.bf16.msra.mxu0 %v893
        %1137 = vmatprep.subr.bf16.mxu0 %v900
        %1138 = vmatpush1.bf16.msra.mxu0 %v899
        %1139 = vmatprep.subr.bf16.mxu0 %v906
        %1140 = vmatpush1.bf16.msra.mxu0 %v905
        %1141 = vmatprep.subr.bf16.mxu0 %v912
        %1142 = vmatpush1.bf16.msra.mxu0 %v911
        %1143 = vmatprep.subr.bf16.mxu0 %v918
        %1144 = vmatpush1.bf16.msra.mxu0 %v917
        %1145 = vmatprep.subr.bf16.mxu0 %v924
        %1146 = vmatpush1.bf16.msra.mxu0 %v923
        %1147 = vmatprep.subr.bf16.mxu0 %v930
        %1148 = vmatpush1.bf16.msra.mxu0 %v929
        %1149 = vmatprep.subr.bf16.mxu0 %v936
        %1150 = vmatpush1.bf16.msra.mxu0 %v935
        %1151 = vmatprep.mubr.bf16.mxu0 %v456
        %1152 = vmatmul.mubr.bf16.gmra.mrb[0].mxu0 %v455
        %v1153 = vpop.f32.mrb[0].mxu0
        %v1154 = vadd.f32 0.0, %v1153
        %v1155 = vpop.f32.mrb[0].mxu0
        %v1156 = vadd.f32 0.0, %v1155
        %v1157 = vpop.f32.mrb[0].mxu0
        %v1158 = vadd.f32 0.0, %v1157
        %v1159 = vpop.f32.mrb[0].mxu0
        %v1160 = vadd.f32 0.0, %v1159
        %1161 = vdwg.mxu0
        %v1163 = vlaneseq
        %v1164 = vshrl.u32 %v1163, 7
        %v1165 = vsub.s32 0, %v1164
        %v1166 = vrot.slane %v371, %v1165
        %v1167 = vlaneseq
        %v1168 = vshrl.u32 %v1167, 7
        %v1169 = vsub.s32 1, %v1168
        %v1170 = vrot.slane %v371, %v1169
        %v1173 = vadd.f32 %v1068, %v1166
        %v1174 = vadd.f32 %v1070, %v1170
        %v1175 = vadd.f32 %v1072, %v1166
        %v1176 = vadd.f32 %v1074, %v1170
        %v1178 = vlaneseq
        %v1179 = vshrl.u32 %v1178, 7
        %v1180 = vsub.s32 0, %v1179
        %v1181 = vrot.slane %v373, %v1180
        %v1182 = vlaneseq
        %v1183 = vshrl.u32 %v1182, 7
        %v1184 = vsub.s32 1, %v1183
        %v1185 = vrot.slane %v373, %v1184
        %v1188 = vadd.f32 %v1111, %v1181
        %v1189 = vadd.f32 %v1113, %v1185
        %v1190 = vadd.f32 %v1115, %v1181
        %v1191 = vadd.f32 %v1117, %v1185
        %v1193 = vlaneseq
        %v1194 = vshrl.u32 %v1193, 7
        %v1195 = vsub.s32 0, %v1194
        %v1196 = vrot.slane %v375, %v1195
        %v1197 = vlaneseq
        %v1198 = vshrl.u32 %v1197, 7
        %v1199 = vsub.s32 1, %v1198
        %v1200 = vrot.slane %v375, %v1199
        %v1203 = vadd.f32 %v1154, %v1196
        %v1204 = vadd.f32 %v1156, %v1200
        %v1205 = vadd.f32 %v1158, %v1196
        %v1206 = vadd.f32 %v1160, %v1200
        %v1207 = vmul.f32 %v1173, 0.088388346
        %v1208 = vmul.f32 %v1174, 0.088388346
        %v1209 = vmul.f32 %v1175, 0.088388346
        %v1210 = vmul.f32 %v1176, 0.088388346
        %v1211 = vpack.c.bf16 %v1209, %v1207
        %v1212 = vpack.c.bf16 %v1190, %v1188
        %v1213 = vpack.c.bf16 %v1205, %v1203
        %1214 = vmatprep.subr.bf16.mxu0 0
        %1215 = vmatpush1.bf16.xpose.msra.mxu0 %v1212
        %1216 = vmatprep.subr.bf16.mxu0 0
        %1217 = vmatpush1.bf16.xpose.msra.mxu0 0
        %1218 = vmatprep.subr.bf16.mxu0 0
        %1219 = vmatpush1.bf16.xpose.msra.mxu0 0
        %1220 = vmatprep.subr.bf16.mxu0 0
        %1221 = vmatpush1.bf16.xpose.msra.mxu0 0
        %1222 = vmatprep.subr.bf16.mxu0 0
        %1223 = vmatpush1.bf16.xpose.msra.mxu0 0
        %1224 = vmatprep.subr.bf16.mxu0 0
        %1225 = vmatpush1.bf16.xpose.msra.mxu0 0
        %1226 = vmatprep.subr.bf16.mxu0 0
        %1227 = vmatpush1.bf16.xpose.msra.mxu0 0
        %1228 = vmatprep.subr.bf16.mxu0 0
        %1229 = vmatpush1.bf16.xpose.msra.mxu0 0
        %1230 = vmatprep.subr.bf16.mxu0 0
        %1231 = vmatpush1.bf16.xpose.msra.mxu0 0
        %1232 = vmatprep.subr.bf16.mxu0 0
        %1233 = vmatpush1.bf16.xpose.msra.mxu0 0
        %1234 = vmatprep.subr.bf16.mxu0 0
        %1235 = vmatpush1.bf16.xpose.msra.mxu0 0
        %1236 = vmatprep.subr.bf16.mxu0 0
        %1237 = vmatpush1.bf16.xpose.msra.mxu0 0
        %1238 = vmatprep.subr.bf16.mxu0 0
        %1239 = vmatpush1.bf16.xpose.msra.mxu0 0
        %1240 = vmatprep.subr.bf16.mxu0 0
        %1241 = vmatpush1.bf16.xpose.msra.mxu0 0
        %1242 = vmatprep.subr.bf16.mxu0 0
        %1243 = vmatpush1.bf16.xpose.msra.mxu0 0
        %1244 = vmatprep.subr.bf16.mxu0 0
        %1245 = vmatpush1.bf16.xpose.msra.mxu0 0
        %1246 = vmatprep.mubr.bf16.mxu0 0
        %1247 = vmatmul.mubr.bf16.gmra.mrb[0].mxu0 %v1211
        %v1248 = vpop.f32.mrb[0].mxu0
        %v1249 = vadd.f32 0.0, %v1248
        %v1250 = vpop.f32.mrb[0].mxu0
        %v1251 = vpop.f32.mrb[0].mxu0
        %v1252 = vadd.f32 0.0, %v1251
        %v1253 = vpop.f32.mrb[0].mxu0
        %1254 = vdwg.mxu0
        %vm1255 = vcmask 130048
        %v1256 = vsel %vm1255, %v1249, -inf
        %1257 = vmax.xlane.f32.xlu0 %v1256
        %v1258 = vpop.xlane.xlu0 %1257
        %v1259 = vsel %vm1255, %v1252, -inf
        %1260 = vmax.xlane.f32.xlu0 %v1259
        %v1261 = vpop.xlane.xlu0 %1260
        %v1262 = vsub.f32 %v1249, %v1258
        %v1263 = vsub.f32 %v1252, %v1261
        %v1264 = vmul.f32 %v1262, 1.442695
        %v1265 = vpow.pop %v1264
        %v1266 = vmul.f32 %v1263, 1.442695
        %v1267 = vpow.pop %v1266
        %v1268 = vsel %vm1255, %v1265, 0.0
        %1269 = vadd.xlane.f32.xlu0 %v1268
        %v1270 = vpop.xlane.xlu0 %1269
        %v1271 = vsel %vm1255, %v1267, 0.0
        %1272 = vadd.xlane.f32.xlu0 %v1271
        %v1273 = vpop.xlane.xlu0 %1272
        %v1274 = vrcp.pop %v1270
        %v1275 = vrcp.pop %v1273
        %v1276 = vmul.f32 %v1265, %v1274
        %v1277 = vmul.f32 %v1267, %v1275
        %v1278 = vpack.c.bf16 %v1277, %v1276
        %v1280 = vsel %vm1255, %v1278, 0
        %1282 = vmatprep.subr.bf16.mxu0 0
        %1283 = vmatpush1.bf16.msra.mxu0 %v1213
        %1284 = vmatprep.subr.bf16.mxu0 0
        %1285 = vmatpush1.bf16.msra.mxu0 0
        %1286 = vmatprep.subr.bf16.mxu0 0
        %1287 = vmatpush1.bf16.msra.mxu0 0
        %1288 = vmatprep.subr.bf16.mxu0 0
        %1289 = vmatpush1.bf16.msra.mxu0 0
        %1290 = vmatprep.subr.bf16.mxu0 0
        %1291 = vmatpush1.bf16.msra.mxu0 0
        %1292 = vmatprep.subr.bf16.mxu0 0
        %1293 = vmatpush1.bf16.msra.mxu0 0
        %1294 = vmatprep.subr.bf16.mxu0 0
        %1295 = vmatpush1.bf16.msra.mxu0 0
        %1296 = vmatprep.subr.bf16.mxu0 0
        %1297 = vmatpush1.bf16.msra.mxu0 0
        %1298 = vmatprep.subr.bf16.mxu0 0
        %1299 = vmatpush1.bf16.msra.mxu0 0
        %1300 = vmatprep.subr.bf16.mxu0 0
        %1301 = vmatpush1.bf16.msra.mxu0 0
        %1302 = vmatprep.subr.bf16.mxu0 0
        %1303 = vmatpush1.bf16.msra.mxu0 0
        %1304 = vmatprep.subr.bf16.mxu0 0
        %1305 = vmatpush1.bf16.msra.mxu0 0
        %1306 = vmatprep.subr.bf16.mxu0 0
        %1307 = vmatpush1.bf16.msra.mxu0 0
        %1308 = vmatprep.subr.bf16.mxu0 0
        %1309 = vmatpush1.bf16.msra.mxu0 0
        %1310 = vmatprep.subr.bf16.mxu0 0
        %1311 = vmatpush1.bf16.msra.mxu0 0
        %1312 = vmatprep.subr.bf16.mxu0 0
        %1313 = vmatpush1.bf16.msra.mxu0 0
        %1314 = vmatprep.mubr.bf16.mxu0 0
        %1315 = vmatmul.mubr.bf16.gmra.mrb[0].mxu0 %v1280
        %v1316 = vpop.f32.mrb[0].mxu0
        %v1317 = vadd.f32 0.0, %v1316
        %v1318 = vpop.f32.mrb[0].mxu0
        %v1319 = vpop.f32.mrb[0].mxu0
        %v1320 = vadd.f32 0.0, %v1319
        %v1321 = vpop.f32.mrb[0].mxu0
        %1322 = vdwg.mxu0
        %v1323 = vpack.c.bf16 %v1210, %v1208
        %v1324 = vpack.c.bf16 %v1191, %v1189
        %v1325 = vpack.c.bf16 %v1206, %v1204
        %1326 = vmatprep.subr.bf16.mxu0 0
        %1327 = vmatpush1.bf16.xpose.msra.mxu0 %v1324
        %1328 = vmatprep.subr.bf16.mxu0 0
        %1329 = vmatpush1.bf16.xpose.msra.mxu0 0
        %1330 = vmatprep.subr.bf16.mxu0 0
        %1331 = vmatpush1.bf16.xpose.msra.mxu0 0
        %1332 = vmatprep.subr.bf16.mxu0 0
        %1333 = vmatpush1.bf16.xpose.msra.mxu0 0
        %1334 = vmatprep.subr.bf16.mxu0 0
        %1335 = vmatpush1.bf16.xpose.msra.mxu0 0
        %1336 = vmatprep.subr.bf16.mxu0 0
        %1337 = vmatpush1.bf16.xpose.msra.mxu0 0
        %1338 = vmatprep.subr.bf16.mxu0 0
        %1339 = vmatpush1.bf16.xpose.msra.mxu0 0
        %1340 = vmatprep.subr.bf16.mxu0 0
        %1341 = vmatpush1.bf16.xpose.msra.mxu0 0
        %1342 = vmatprep.subr.bf16.mxu0 0
        %1343 = vmatpush1.bf16.xpose.msra.mxu0 0
        %1344 = vmatprep.subr.bf16.mxu0 0
        %1345 = vmatpush1.bf16.xpose.msra.mxu0 0
        %1346 = vmatprep.subr.bf16.mxu0 0
        %1347 = vmatpush1.bf16.xpose.msra.mxu0 0
        %1348 = vmatprep.subr.bf16.mxu0 0
        %1349 = vmatpush1.bf16.xpose.msra.mxu0 0
        %1350 = vmatprep.subr.bf16.mxu0 0
        %1351 = vmatpush1.bf16.xpose.msra.mxu0 0
        %1352 = vmatprep.subr.bf16.mxu0 0
        %1353 = vmatpush1.bf16.xpose.msra.mxu0 0
        %1354 = vmatprep.subr.bf16.mxu0 0
        %1355 = vmatpush1.bf16.xpose.msra.mxu0 0
        %1356 = vmatprep.subr.bf16.mxu0 0
        %1357 = vmatpush1.bf16.xpose.msra.mxu0 0
        %1358 = vmatprep.mubr.bf16.mxu0 0
        %1359 = vmatmul.mubr.bf16.gmra.mrb[0].mxu0 %v1323
        %v1360 = vpop.f32.mrb[0].mxu0
        %v1361 = vadd.f32 0.0, %v1360
        %v1362 = vpop.f32.mrb[0].mxu0
        %v1363 = vpop.f32.mrb[0].mxu0
        %v1364 = vadd.f32 0.0, %v1363
        %v1365 = vpop.f32.mrb[0].mxu0
        %1366 = vdwg.mxu0
        %v1367 = vsel %vm1255, %v1361, -inf
        %1368 = vmax.xlane.f32.xlu0 %v1367
        %v1369 = vpop.xlane.xlu0 %1368
        %v1370 = vsel %vm1255, %v1364, -inf
        %1371 = vmax.xlane.f32.xlu0 %v1370
        %v1372 = vpop.xlane.xlu0 %1371
        %v1373 = vsub.f32 %v1361, %v1369
        %v1374 = vsub.f32 %v1364, %v1372
        %v1375 = vmul.f32 %v1373, 1.442695
        %v1376 = vpow.pop %v1375
        %v1377 = vmul.f32 %v1374, 1.442695
        %v1378 = vpow.pop %v1377
        %v1379 = vsel %vm1255, %v1376, 0.0
        %1380 = vadd.xlane.f32.xlu0 %v1379
        %v1381 = vpop.xlane.xlu0 %1380
        %v1382 = vsel %vm1255, %v1378, 0.0
        %1383 = vadd.xlane.f32.xlu0 %v1382
        %v1384 = vpop.xlane.xlu0 %1383
        %v1385 = vrcp.pop %v1381
        %v1386 = vrcp.pop %v1384
        %v1387 = vmul.f32 %v1376, %v1385
        %v1388 = vmul.f32 %v1378, %v1386
        %v1389 = vpack.c.bf16 %v1388, %v1387
        %v1391 = vsel %vm1255, %v1389, 0
        %1393 = vmatprep.subr.bf16.mxu0 0
        %1394 = vmatpush1.bf16.msra.mxu0 %v1325
        %1395 = vmatprep.subr.bf16.mxu0 0
        %1396 = vmatpush1.bf16.msra.mxu0 0
        %1397 = vmatprep.subr.bf16.mxu0 0
        %1398 = vmatpush1.bf16.msra.mxu0 0
        %1399 = vmatprep.subr.bf16.mxu0 0
        %1400 = vmatpush1.bf16.msra.mxu0 0
        %1401 = vmatprep.subr.bf16.mxu0 0
        %1402 = vmatpush1.bf16.msra.mxu0 0
        %1403 = vmatprep.subr.bf16.mxu0 0
        %1404 = vmatpush1.bf16.msra.mxu0 0
        %1405 = vmatprep.subr.bf16.mxu0 0
        %1406 = vmatpush1.bf16.msra.mxu0 0
        %1407 = vmatprep.subr.bf16.mxu0 0
        %1408 = vmatpush1.bf16.msra.mxu0 0
        %1409 = vmatprep.subr.bf16.mxu0 0
        %1410 = vmatpush1.bf16.msra.mxu0 0
        %1411 = vmatprep.subr.bf16.mxu0 0
        %1412 = vmatpush1.bf16.msra.mxu0 0
        %1413 = vmatprep.subr.bf16.mxu0 0
        %1414 = vmatpush1.bf16.msra.mxu0 0
        %1415 = vmatprep.subr.bf16.mxu0 0
        %1416 = vmatpush1.bf16.msra.mxu0 0
        %1417 = vmatprep.subr.bf16.mxu0 0
        %1418 = vmatpush1.bf16.msra.mxu0 0
        %1419 = vmatprep.subr.bf16.mxu0 0
        %1420 = vmatpush1.bf16.msra.mxu0 0
        %1421 = vmatprep.subr.bf16.mxu0 0
        %1422 = vmatpush1.bf16.msra.mxu0 0
        %1423 = vmatprep.subr.bf16.mxu0 0
        %1424 = vmatpush1.bf16.msra.mxu0 0
        %1425 = vmatprep.mubr.bf16.mxu0 0
        %1426 = vmatmul.mubr.bf16.gmra.mrb[0].mxu0 %v1391
        %v1427 = vpop.f32.mrb[0].mxu0
        %v1428 = vadd.f32 0.0, %v1427
        %v1429 = vpop.f32.mrb[0].mxu0
        %v1430 = vpop.f32.mrb[0].mxu0
        %v1431 = vadd.f32 0.0, %v1430
        %v1432 = vpop.f32.mrb[0].mxu0
        %1433 = vdwg.mxu0
        %v1434 = vpack.c.bf16 %v1320, %v1317
        %v1435 = vpack.c.bf16 %v1431, %v1428
        %v1436 = vld [vmem:[#allocation7] sm:$0xff]
        %v1437 = vld [vmem:[#allocation7 + $0x8] sm:$0xff]
        %v1438 = vld [vmem:[#allocation7 + $0x10] sm:$0xff]
        %v1439 = vld [vmem:[#allocation7 + $0x18] sm:$0xff]
        %v1440 = vld [vmem:[#allocation7 + $0x20] sm:$0xff]
        %v1441 = vld [vmem:[#allocation7 + $0x28] sm:$0xff]
        %v1442 = vld [vmem:[#allocation7 + $0x30] sm:$0xff]
        %v1443 = vld [vmem:[#allocation7 + $0x38] sm:$0xff]
        %v1444 = vld [vmem:[#allocation7 + $0x40] sm:$0xff]
        %v1445 = vld [vmem:[#allocation7 + $0x48] sm:$0xff]
        %v1446 = vld [vmem:[#allocation7 + $0x50] sm:$0xff]
        %v1447 = vld [vmem:[#allocation7 + $0x58] sm:$0xff]
        %v1448 = vld [vmem:[#allocation7 + $0x60] sm:$0xff]
        %v1449 = vld [vmem:[#allocation7 + $0x68] sm:$0xff]
        %v1450 = vld [vmem:[#allocation7 + $0x70] sm:$0xff]
        %v1451 = vld [vmem:[#allocation7 + $0x78] sm:$0xff]
        %v1452 = vld [vmem:[#allocation7 + $0x80] sm:$0xff]
        %v1453 = vld [vmem:[#allocation7 + $0x88] sm:$0xff]
        %v1454 = vld [vmem:[#allocation7 + $0x90] sm:$0xff]
        %v1455 = vld [vmem:[#allocation7 + $0x98] sm:$0xff]
        %v1456 = vld [vmem:[#allocation7 + $0xa0] sm:$0xff]
        %v1457 = vld [vmem:[#allocation7 + $0xa8] sm:$0xff]
        %v1458 = vld [vmem:[#allocation7 + $0xb0] sm:$0xff]
        %v1459 = vld [vmem:[#allocation7 + $0xb8] sm:$0xff]
        %v1460 = vld [vmem:[#allocation7 + $0xc0] sm:$0xff]
        %v1461 = vld [vmem:[#allocation7 + $0xc8] sm:$0xff]
        %v1462 = vld [vmem:[#allocation7 + $0xd0] sm:$0xff]
        %v1463 = vld [vmem:[#allocation7 + $0xd8] sm:$0xff]
        %v1464 = vld [vmem:[#allocation7 + $0xe0] sm:$0xff]
        %v1465 = vld [vmem:[#allocation7 + $0xe8] sm:$0xff]
        %v1466 = vld [vmem:[#allocation7 + $0xf0] sm:$0xff]
        %v1467 = vld [vmem:[#allocation7 + $0xf8] sm:$0xff]
        %v1469 = vlaneseq
        %v1470 = vshrl.u32 %v1469, 7
        %v1471 = vsub.s32 0, %v1470
        %v1472 = vrot.slane %v377, %v1471
        %v1473 = vlaneseq
        %v1474 = vshrl.u32 %v1473, 7
        %v1475 = vsub.s32 1, %v1474
        %v1476 = vrot.slane %v377, %v1475
        %v1511 = vunpack.c.l.b16 %v1436
        %v1512 = vunpack.c.h.b16 %v1436
        %v1513 = vunpack.c.l.b16 %v1437
        %v1514 = vunpack.c.h.b16 %v1437
        %v1515 = vunpack.c.l.b16 %v1438
        %v1516 = vunpack.c.h.b16 %v1438
        %v1517 = vunpack.c.l.b16 %v1439
        %v1518 = vunpack.c.h.b16 %v1439
        %v1519 = vunpack.c.l.b16 %v1440
        %v1520 = vunpack.c.h.b16 %v1440
        %v1521 = vunpack.c.l.b16 %v1441
        %v1522 = vunpack.c.h.b16 %v1441
        %v1523 = vunpack.c.l.b16 %v1442
        %v1524 = vunpack.c.h.b16 %v1442
        %v1525 = vunpack.c.l.b16 %v1443
        %v1526 = vunpack.c.h.b16 %v1443
        %v1527 = vunpack.c.l.b16 %v1444
        %v1528 = vunpack.c.h.b16 %v1444
        %v1529 = vunpack.c.l.b16 %v1445
        %v1530 = vunpack.c.h.b16 %v1445
        %v1531 = vunpack.c.l.b16 %v1446
        %v1532 = vunpack.c.h.b16 %v1446
        %v1533 = vunpack.c.l.b16 %v1447
        %v1534 = vunpack.c.h.b16 %v1447
        %v1535 = vunpack.c.l.b16 %v1448
        %v1536 = vunpack.c.h.b16 %v1448
        %v1537 = vunpack.c.l.b16 %v1449
        %v1538 = vunpack.c.h.b16 %v1449
        %v1539 = vunpack.c.l.b16 %v1450
        %v1540 = vunpack.c.h.b16 %v1450
        %v1541 = vunpack.c.l.b16 %v1451
        %v1542 = vunpack.c.h.b16 %v1451
        %v1543 = vunpack.c.l.b16 %v1452
        %v1544 = vunpack.c.h.b16 %v1452
        %v1545 = vunpack.c.l.b16 %v1453
        %v1546 = vunpack.c.h.b16 %v1453
        %v1547 = vunpack.c.l.b16 %v1454
        %v1548 = vunpack.c.h.b16 %v1454
        %v1549 = vunpack.c.l.b16 %v1455
        %v1550 = vunpack.c.h.b16 %v1455
        %v1551 = vunpack.c.l.b16 %v1456
        %v1552 = vunpack.c.h.b16 %v1456
        %v1553 = vunpack.c.l.b16 %v1457
        %v1554 = vunpack.c.h.b16 %v1457
        %v1555 = vunpack.c.l.b16 %v1458
        %v1556 = vunpack.c.h.b16 %v1458
        %v1557 = vunpack.c.l.b16 %v1459
        %v1558 = vunpack.c.h.b16 %v1459
        %v1559 = vunpack.c.l.b16 %v1460
        %v1560 = vunpack.c.h.b16 %v1460
        %v1561 = vunpack.c.l.b16 %v1461
        %v1562 = vunpack.c.h.b16 %v1461
        %v1563 = vunpack.c.l.b16 %v1462
        %v1564 = vunpack.c.h.b16 %v1462
        %v1565 = vunpack.c.l.b16 %v1463
        %v1566 = vunpack.c.h.b16 %v1463
        %v1567 = vunpack.c.l.b16 %v1464
        %v1568 = vunpack.c.h.b16 %v1464
        %v1569 = vunpack.c.l.b16 %v1465
        %v1570 = vunpack.c.h.b16 %v1465
        %v1571 = vunpack.c.l.b16 %v1466
        %v1572 = vunpack.c.h.b16 %v1466
        %v1573 = vunpack.c.l.b16 %v1467
        %v1574 = vunpack.c.h.b16 %v1467
        %v1575 = vpack.c.b16 %v1513, %v1511
        %v1576 = vpack.c.b16 %v1514, %v1512
        %v1577 = vpack.c.b16 %v1517, %v1515
        %v1578 = vpack.c.b16 %v1518, %v1516
        %v1579 = vpack.c.b16 %v1521, %v1519
        %v1580 = vpack.c.b16 %v1522, %v1520
        %v1581 = vpack.c.b16 %v1525, %v1523
        %v1582 = vpack.c.b16 %v1526, %v1524
        %v1583 = vpack.c.b16 %v1529, %v1527
        %v1584 = vpack.c.b16 %v1530, %v1528
        %v1585 = vpack.c.b16 %v1533, %v1531
        %v1586 = vpack.c.b16 %v1534, %v1532
        %v1587 = vpack.c.b16 %v1537, %v1535
        %v1588 = vpack.c.b16 %v1538, %v1536
        %v1589 = vpack.c.b16 %v1541, %v1539
        %v1590 = vpack.c.b16 %v1542, %v1540
        %v1591 = vpack.c.b16 %v1545, %v1543
        %v1592 = vpack.c.b16 %v1546, %v1544
        %v1593 = vpack.c.b16 %v1549, %v1547
        %v1594 = vpack.c.b16 %v1550, %v1548
        %v1595 = vpack.c.b16 %v1553, %v1551
        %v1596 = vpack.c.b16 %v1554, %v1552
        %v1597 = vpack.c.b16 %v1557, %v1555
        %v1598 = vpack.c.b16 %v1558, %v1556
        %v1599 = vpack.c.b16 %v1561, %v1559
        %v1600 = vpack.c.b16 %v1562, %v1560
        %v1601 = vpack.c.b16 %v1565, %v1563
        %v1602 = vpack.c.b16 %v1566, %v1564
        %v1603 = vpack.c.b16 %v1569, %v1567
        %v1604 = vpack.c.b16 %v1570, %v1568
        %v1605 = vpack.c.b16 %v1573, %v1571
        %v1606 = vpack.c.b16 %v1574, %v1572
        %1639 = vmatprep.subr.bf16.mxu0 %v1576
        %1640 = vmatpush1.bf16.msra.mxu0 %v1575
        %1641 = vmatprep.subr.bf16.mxu0 %v1578
        %1642 = vmatpush1.bf16.msra.mxu0 %v1577
        %1643 = vmatprep.subr.bf16.mxu0 %v1580
        %1644 = vmatpush1.bf16.msra.mxu0 %v1579
        %1645 = vmatprep.subr.bf16.mxu0 %v1582
        %1646 = vmatpush1.bf16.msra.mxu0 %v1581
        %1647 = vmatprep.subr.bf16.mxu0 %v1584
        %1648 = vmatpush1.bf16.msra.mxu0 %v1583
        %1649 = vmatprep.subr.bf16.mxu0 %v1586
        %1650 = vmatpush1.bf16.msra.mxu0 %v1585
        %1651 = vmatprep.subr.bf16.mxu0 %v1588
        %1652 = vmatpush1.bf16.msra.mxu0 %v1587
        %1653 = vmatprep.subr.bf16.mxu0 %v1590
        %1654 = vmatpush1.bf16.msra.mxu0 %v1589
        %1655 = vmatprep.subr.bf16.mxu0 %v1592
        %1656 = vmatpush1.bf16.msra.mxu0 %v1591
        %1657 = vmatprep.subr.bf16.mxu0 %v1594
        %1658 = vmatpush1.bf16.msra.mxu0 %v1593
        %1659 = vmatprep.subr.bf16.mxu0 %v1596
        %1660 = vmatpush1.bf16.msra.mxu0 %v1595
        %1661 = vmatprep.subr.bf16.mxu0 %v1598
        %1662 = vmatpush1.bf16.msra.mxu0 %v1597
        %1663 = vmatprep.subr.bf16.mxu0 %v1600
        %1664 = vmatpush1.bf16.msra.mxu0 %v1599
        %1665 = vmatprep.subr.bf16.mxu0 %v1602
        %1666 = vmatpush1.bf16.msra.mxu0 %v1601
        %1667 = vmatprep.subr.bf16.mxu0 %v1604
        %1668 = vmatpush1.bf16.msra.mxu0 %v1603
        %1669 = vmatprep.subr.bf16.mxu0 %v1606
        %1670 = vmatpush1.bf16.msra.mxu0 %v1605
        %1671 = vmatprep.mubr.bf16.mxu0 %v1435
        %1672 = vmatmul.mubr.bf16.gmra.mrb[0].mxu0 %v1434
        %v1673 = vpop.f32.mrb[0].mxu0
        %v1674 = vadd.f32 %v1472, %v1673
        %v1675 = vpop.f32.mrb[0].mxu0
        %v1676 = vadd.f32 %v1476, %v1675
        %v1677 = vpop.f32.mrb[0].mxu0
        %v1678 = vadd.f32 %v1472, %v1677
        %v1679 = vpop.f32.mrb[0].mxu0
        %v1680 = vadd.f32 %v1476, %v1679
        %1681 = vdwg.mxu0
        %v1682 = vadd.f32 %v1674, %v451
        %v1683 = vadd.f32 %v1676, %v452
        %v1684 = vadd.f32 %v1678, %v453
        %v1685 = vadd.f32 %v1680, %v454
        %v1686 = vadd.f32 %v1682, %v1683
        %1687 = vadd.xlane.f32.xlu0 %v1686
        %v1688 = vpop.xlane.xlu0 %1687
        %v1689 = vadd.f32 %v1684, %v1685
        %1690 = vadd.xlane.f32.xlu0 %v1689
        %v1691 = vpop.xlane.xlu0 %1690
        %v1692 = vmul.f32 %v1688, %v398
        %v1693 = vmul.f32 %v1691, %v398
        %v1694 = vsub.f32 %v1682, %v1692
        %v1695 = vsub.f32 %v1683, %v1692
        %v1696 = vsub.f32 %v1684, %v1693
        %v1697 = vsub.f32 %v1685, %v1693
        %v1698 = vmul.f32 %v1694, %v1694
        %v1699 = vmul.f32 %v1695, %v1695
        %v1700 = vmul.f32 %v1696, %v1696
        %v1701 = vmul.f32 %v1697, %v1697
        %v1702 = vadd.f32 %v1698, %v1699
        %1703 = vadd.xlane.f32.xlu0 %v1702
        %v1704 = vpop.xlane.xlu0 %1703
        %v1705 = vadd.f32 %v1700, %v1701
        %1706 = vadd.xlane.f32.xlu0 %v1705
        %v1707 = vpop.xlane.xlu0 %1706
        %v1708 = vmul.f32 %v1704, %v398
        %v1709 = vmul.f32 %v1707, %v398
        %v1710 = vadd.f32 %v1708, 1e-06
        %v1711 = vadd.f32 %v1709, 1e-06
        %v1712 = vrsqrt.pop %v1710
        %v1713 = vrsqrt.pop %v1711
        %v1714 = vmul.f32 %v1694, %v1712
        %v1715 = vmul.f32 %v1695, %v1712
        %v1716 = vmul.f32 %v1696, %v1713
        %v1717 = vmul.f32 %v1697, %v1713
        %v1719 = vlaneseq
        %v1720 = vshrl.u32 %v1719, 7
        %v1721 = vsub.s32 0, %v1720
        %v1722 = vrot.slane %v383, %v1721
        %v1723 = vlaneseq
        %v1724 = vshrl.u32 %v1723, 7
        %v1725 = vsub.s32 1, %v1724
        %v1726 = vrot.slane %v383, %v1725
        %v1729 = vmul.f32 %v1714, %v1722
        %v1730 = vmul.f32 %v1715, %v1726
        %v1731 = vmul.f32 %v1716, %v1722
        %v1732 = vmul.f32 %v1717, %v1726
        %v1734 = vlaneseq
        %v1735 = vshrl.u32 %v1734, 7
        %v1736 = vsub.s32 0, %v1735
        %v1737 = vrot.slane %v385, %v1736
        %v1738 = vlaneseq
        %v1739 = vshrl.u32 %v1738, 7
        %v1740 = vsub.s32 1, %v1739
        %v1741 = vrot.slane %v385, %v1740
        %v1744 = vadd.f32 %v1729, %v1737
        %v1745 = vadd.f32 %v1730, %v1741
        %v1746 = vadd.f32 %v1731, %v1737
        %v1747 = vadd.f32 %v1732, %v1741
        %v1748 = vpack.c.bf16 %v1746, %v1744
        %v1749 = vpack.c.bf16 %v1747, %v1745
        %v1751 = vlaneseq
        %v1752 = vshrl.u32 %v1751, 7
        %v1753 = vsub.s32 0, %v1752
        %v1754 = vrot.slane %v387, %v1753
        %v1755 = vlaneseq
        %v1756 = vshrl.u32 %v1755, 7
        %v1757 = vsub.s32 1, %v1756
        %v1758 = vrot.slane %v387, %v1757
        %v1761 = vadd.f32 %v1682, %v1754
        %v1762 = vadd.f32 %v1683, %v1758
        %v1763 = vadd.f32 %v1684, %v1754
        %v1764 = vadd.f32 %v1685, %v1758
        %v1765 = vld [vmem:[#allocation8] sm:$0xff]
        %v1766 = vld [vmem:[#allocation8 + $0x8] sm:$0xff]
        %v1767 = vld [vmem:[#allocation8 + $0x10] sm:$0xff]
        %v1768 = vld [vmem:[#allocation8 + $0x18] sm:$0xff]
        %v1769 = vld [vmem:[#allocation8 + $0x20] sm:$0xff]
        %v1770 = vld [vmem:[#allocation8 + $0x28] sm:$0xff]
        %v1771 = vld [vmem:[#allocation8 + $0x30] sm:$0xff]
        %v1772 = vld [vmem:[#allocation8 + $0x38] sm:$0xff]
        %v1773 = vld [vmem:[#allocation8 + $0x40] sm:$0xff]
        %v1774 = vld [vmem:[#allocation8 + $0x48] sm:$0xff]
        %v1775 = vld [vmem:[#allocation8 + $0x50] sm:$0xff]
        %v1776 = vld [vmem:[#allocation8 + $0x58] sm:$0xff]
        %v1777 = vld [vmem:[#allocation8 + $0x60] sm:$0xff]
        %v1778 = vld [vmem:[#allocation8 + $0x68] sm:$0xff]
        %v1779 = vld [vmem:[#allocation8 + $0x70] sm:$0xff]
        %v1780 = vld [vmem:[#allocation8 + $0x78] sm:$0xff]
        %v1781 = vld [vmem:[#allocation8 + $0x80] sm:$0xff]
        %v1782 = vld [vmem:[#allocation8 + $0x88] sm:$0xff]
        %v1783 = vld [vmem:[#allocation8 + $0x90] sm:$0xff]
        %v1784 = vld [vmem:[#allocation8 + $0x98] sm:$0xff]
        %v1785 = vld [vmem:[#allocation8 + $0xa0] sm:$0xff]
        %v1786 = vld [vmem:[#allocation8 + $0xa8] sm:$0xff]
        %v1787 = vld [vmem:[#allocation8 + $0xb0] sm:$0xff]
        %v1788 = vld [vmem:[#allocation8 + $0xb8] sm:$0xff]
        %v1789 = vld [vmem:[#allocation8 + $0xc0] sm:$0xff]
        %v1790 = vld [vmem:[#allocation8 + $0xc8] sm:$0xff]
        %v1791 = vld [vmem:[#allocation8 + $0xd0] sm:$0xff]
        %v1792 = vld [vmem:[#allocation8 + $0xd8] sm:$0xff]
        %v1793 = vld [vmem:[#allocation8 + $0xe0] sm:$0xff]
        %v1794 = vld [vmem:[#allocation8 + $0xe8] sm:$0xff]
        %v1795 = vld [vmem:[#allocation8 + $0xf0] sm:$0xff]
        %v1796 = vld [vmem:[#allocation8 + $0xf8] sm:$0xff]
        %v1797 = vld [vmem:[#allocation8 + $0x100] sm:$0xff]
        %v1798 = vld [vmem:[#allocation8 + $0x108] sm:$0xff]
        %v1799 = vld [vmem:[#allocation8 + $0x110] sm:$0xff]
        %v1800 = vld [vmem:[#allocation8 + $0x118] sm:$0xff]
        %v1801 = vld [vmem:[#allocation8 + $0x120] sm:$0xff]
        %v1802 = vld [vmem:[#allocation8 + $0x128] sm:$0xff]
        %v1803 = vld [vmem:[#allocation8 + $0x130] sm:$0xff]
        %v1804 = vld [vmem:[#allocation8 + $0x138] sm:$0xff]
        %v1805 = vld [vmem:[#allocation8 + $0x140] sm:$0xff]
        %v1806 = vld [vmem:[#allocation8 + $0x148] sm:$0xff]
        %v1807 = vld [vmem:[#allocation8 + $0x150] sm:$0xff]
        %v1808 = vld [vmem:[#allocation8 + $0x158] sm:$0xff]
        %v1809 = vld [vmem:[#allocation8 + $0x160] sm:$0xff]
        %v1810 = vld [vmem:[#allocation8 + $0x168] sm:$0xff]
        %v1811 = vld [vmem:[#allocation8 + $0x170] sm:$0xff]
        %v1812 = vld [vmem:[#allocation8 + $0x178] sm:$0xff]
        %v1813 = vld [vmem:[#allocation8 + $0x180] sm:$0xff]
        %v1814 = vld [vmem:[#allocation8 + $0x188] sm:$0xff]
        %v1815 = vld [vmem:[#allocation8 + $0x190] sm:$0xff]
        %v1816 = vld [vmem:[#allocation8 + $0x198] sm:$0xff]
        %v1817 = vld [vmem:[#allocation8 + $0x1a0] sm:$0xff]
        %v1818 = vld [vmem:[#allocation8 + $0x1a8] sm:$0xff]
        %v1819 = vld [vmem:[#allocation8 + $0x1b0] sm:$0xff]
        %v1820 = vld [vmem:[#allocation8 + $0x1b8] sm:$0xff]
        %v1821 = vld [vmem:[#allocation8 + $0x1c0] sm:$0xff]
        %v1822 = vld [vmem:[#allocation8 + $0x1c8] sm:$0xff]
        %v1823 = vld [vmem:[#allocation8 + $0x1d0] sm:$0xff]
        %v1824 = vld [vmem:[#allocation8 + $0x1d8] sm:$0xff]
        %v1825 = vld [vmem:[#allocation8 + $0x1e0] sm:$0xff]
        %v1826 = vld [vmem:[#allocation8 + $0x1e8] sm:$0xff]
        %v1827 = vld [vmem:[#allocation8 + $0x1f0] sm:$0xff]
        %v1828 = vld [vmem:[#allocation8 + $0x1f8] sm:$0xff]
        %v1829 = vld [vmem:[%s6] sm:$0xf]
        %v1831 = vlaneseq
        %v1832 = vshrl.u32 %v1831, 7
        %v1833 = vsub.s32 0, %v1832
        %v1834 = vrot.slane %v1829, %v1833
        %v1835 = vlaneseq
        %v1836 = vshrl.u32 %v1835, 7
        %v1837 = vsub.s32 1, %v1836
        %v1838 = vrot.slane %v1829, %v1837
        %v1839 = vlaneseq
        %v1840 = vshrl.u32 %v1839, 7
        %v1841 = vsub.s32 2, %v1840
        %v1842 = vrot.slane %v1829, %v1841
        %v1843 = vlaneseq
        %v1844 = vshrl.u32 %v1843, 7
        %v1845 = vsub.s32 3, %v1844
        %v1846 = vrot.slane %v1829, %v1845
        %v1915 = vunpack.c.l.b16 %v1765
        %v1916 = vunpack.c.h.b16 %v1765
        %v1917 = vunpack.c.l.b16 %v1766
        %v1918 = vunpack.c.h.b16 %v1766
        %v1919 = vunpack.c.l.b16 %v1767
        %v1920 = vunpack.c.h.b16 %v1767
        %v1921 = vunpack.c.l.b16 %v1768
        %v1922 = vunpack.c.h.b16 %v1768
        %v1923 = vunpack.c.l.b16 %v1769
        %v1924 = vunpack.c.h.b16 %v1769
        %v1925 = vunpack.c.l.b16 %v1770
        %v1926 = vunpack.c.h.b16 %v1770
        %v1927 = vunpack.c.l.b16 %v1771
        %v1928 = vunpack.c.h.b16 %v1771
        %v1929 = vunpack.c.l.b16 %v1772
        %v1930 = vunpack.c.h.b16 %v1772
        %v1931 = vunpack.c.l.b16 %v1773
        %v1932 = vunpack.c.h.b16 %v1773
        %v1933 = vunpack.c.l.b16 %v1774
        %v1934 = vunpack.c.h.b16 %v1774
        %v1935 = vunpack.c.l.b16 %v1775
        %v1936 = vunpack.c.h.b16 %v1775
        %v1937 = vunpack.c.l.b16 %v1776
        %v1938 = vunpack.c.h.b16 %v1776
        %v1939 = vunpack.c.l.b16 %v1777
        %v1940 = vunpack.c.h.b16 %v1777
        %v1941 = vunpack.c.l.b16 %v1778
        %v1942 = vunpack.c.h.b16 %v1778
        %v1943 = vunpack.c.l.b16 %v1779
        %v1944 = vunpack.c.h.b16 %v1779
        %v1945 = vunpack.c.l.b16 %v1780
        %v1946 = vunpack.c.h.b16 %v1780
        %v1947 = vunpack.c.l.b16 %v1781
        %v1948 = vunpack.c.h.b16 %v1781
        %v1949 = vunpack.c.l.b16 %v1782
        %v1950 = vunpack.c.h.b16 %v1782
        %v1951 = vunpack.c.l.b16 %v1783
        %v1952 = vunpack.c.h.b16 %v1783
        %v1953 = vunpack.c.l.b16 %v1784
        %v1954 = vunpack.c.h.b16 %v1784
        %v1955 = vunpack.c.l.b16 %v1785
        %v1956 = vunpack.c.h.b16 %v1785
        %v1957 = vunpack.c.l.b16 %v1786
        %v1958 = vunpack.c.h.b16 %v1786
        %v1959 = vunpack.c.l.b16 %v1787
        %v1960 = vunpack.c.h.b16 %v1787
        %v1961 = vunpack.c.l.b16 %v1788
        %v1962 = vunpack.c.h.b16 %v1788
        %v1963 = vunpack.c.l.b16 %v1789
        %v1964 = vunpack.c.h.b16 %v1789
        %v1965 = vunpack.c.l.b16 %v1790
        %v1966 = vunpack.c.h.b16 %v1790
        %v1967 = vunpack.c.l.b16 %v1791
        %v1968 = vunpack.c.h.b16 %v1791
        %v1969 = vunpack.c.l.b16 %v1792
        %v1970 = vunpack.c.h.b16 %v1792
        %v1971 = vunpack.c.l.b16 %v1793
        %v1972 = vunpack.c.h.b16 %v1793
        %v1973 = vunpack.c.l.b16 %v1794
        %v1974 = vunpack.c.h.b16 %v1794
        %v1975 = vunpack.c.l.b16 %v1795
        %v1976 = vunpack.c.h.b16 %v1795
        %v1977 = vunpack.c.l.b16 %v1796
        %v1978 = vunpack.c.h.b16 %v1796
        %v1979 = vunpack.c.l.b16 %v1797
        %v1980 = vunpack.c.h.b16 %v1797
        %v1981 = vunpack.c.l.b16 %v1798
        %v1982 = vunpack.c.h.b16 %v1798
        %v1983 = vunpack.c.l.b16 %v1799
        %v1984 = vunpack.c.h.b16 %v1799
        %v1985 = vunpack.c.l.b16 %v1800
        %v1986 = vunpack.c.h.b16 %v1800
        %v1987 = vunpack.c.l.b16 %v1801
        %v1988 = vunpack.c.h.b16 %v1801
        %v1989 = vunpack.c.l.b16 %v1802
        %v1990 = vunpack.c.h.b16 %v1802
        %v1991 = vunpack.c.l.b16 %v1803
        %v1992 = vunpack.c.h.b16 %v1803
        %v1993 = vunpack.c.l.b16 %v1804
        %v1994 = vunpack.c.h.b16 %v1804
        %v1995 = vunpack.c.l.b16 %v1805
        %v1996 = vunpack.c.h.b16 %v1805
        %v1997 = vunpack.c.l.b16 %v1806
        %v1998 = vunpack.c.h.b16 %v1806
        %v1999 = vunpack.c.l.b16 %v1807
        %v2000 = vunpack.c.h.b16 %v1807
        %v2001 = vunpack.c.l.b16 %v1808
        %v2002 = vunpack.c.h.b16 %v1808
        %v2003 = vunpack.c.l.b16 %v1809
        %v2004 = vunpack.c.h.b16 %v1809
        %v2005 = vunpack.c.l.b16 %v1810
        %v2006 = vunpack.c.h.b16 %v1810
        %v2007 = vunpack.c.l.b16 %v1811
        %v2008 = vunpack.c.h.b16 %v1811
        %v2009 = vunpack.c.l.b16 %v1812
        %v2010 = vunpack.c.h.b16 %v1812
        %v2011 = vunpack.c.l.b16 %v1813
        %v2012 = vunpack.c.h.b16 %v1813
        %v2013 = vunpack.c.l.b16 %v1814
        %v2014 = vunpack.c.h.b16 %v1814
        %v2015 = vunpack.c.l.b16 %v1815
        %v2016 = vunpack.c.h.b16 %v1815
        %v2017 = vunpack.c.l.b16 %v1816
        %v2018 = vunpack.c.h.b16 %v1816
        %v2019 = vunpack.c.l.b16 %v1817
        %v2020 = vunpack.c.h.b16 %v1817
        %v2021 = vunpack.c.l.b16 %v1818
        %v2022 = vunpack.c.h.b16 %v1818
        %v2023 = vunpack.c.l.b16 %v1819
        %v2024 = vunpack.c.h.b16 %v1819
        %v2025 = vunpack.c.l.b16 %v1820
        %v2026 = vunpack.c.h.b16 %v1820
        %v2027 = vunpack.c.l.b16 %v1821
        %v2028 = vunpack.c.h.b16 %v1821
        %v2029 = vunpack.c.l.b16 %v1822
        %v2030 = vunpack.c.h.b16 %v1822
        %v2031 = vunpack.c.l.b16 %v1823
        %v2032 = vunpack.c.h.b16 %v1823
        %v2033 = vunpack.c.l.b16 %v1824
        %v2034 = vunpack.c.h.b16 %v1824
        %v2035 = vunpack.c.l.b16 %v1825
        %v2036 = vunpack.c.h.b16 %v1825
        %v2037 = vunpack.c.l.b16 %v1826
        %v2038 = vunpack.c.h.b16 %v1826
        %v2039 = vunpack.c.l.b16 %v1827
        %v2040 = vunpack.c.h.b16 %v1827
        %v2041 = vunpack.c.l.b16 %v1828
        %v2042 = vunpack.c.h.b16 %v1828
        %v2043 = vpack.c.b16 %v1919, %v1915
        %v2044 = vpack.c.b16 %v1920, %v1916
        %v2045 = vpack.c.b16 %v1921, %v1917
        %v2046 = vpack.c.b16 %v1922, %v1918
        %v2047 = vpack.c.b16 %v1927, %v1923
        %v2048 = vpack.c.b16 %v1928, %v1924
        %v2049 = vpack.c.b16 %v1929, %v1925
        %v2050 = vpack.c.b16 %v1930, %v1926
        %v2051 = vpack.c.b16 %v1935, %v1931
        %v2052 = vpack.c.b16 %v1936, %v1932
        %v2053 = vpack.c.b16 %v1937, %v1933
        %v2054 = vpack.c.b16 %v1938, %v1934
        %v2055 = vpack.c.b16 %v1943, %v1939
        %v2056 = vpack.c.b16 %v1944, %v1940
        %v2057 = vpack.c.b16 %v1945, %v1941
        %v2058 = vpack.c.b16 %v1946, %v1942
        %v2059 = vpack.c.b16 %v1951, %v1947
        %v2060 = vpack.c.b16 %v1952, %v1948
        %v2061 = vpack.c.b16 %v1953, %v1949
        %v2062 = vpack.c.b16 %v1954, %v1950
        %v2063 = vpack.c.b16 %v1959, %v1955
        %v2064 = vpack.c.b16 %v1960, %v1956
        %v2065 = vpack.c.b16 %v1961, %v1957
        %v2066 = vpack.c.b16 %v1962, %v1958
        %v2067 = vpack.c.b16 %v1967, %v1963
        %v2068 = vpack.c.b16 %v1968, %v1964
        %v2069 = vpack.c.b16 %v1969, %v1965
        %v2070 = vpack.c.b16 %v1970, %v1966
        %v2071 = vpack.c.b16 %v1975, %v1971
        %v2072 = vpack.c.b16 %v1976, %v1972
        %v2073 = vpack.c.b16 %v1977, %v1973
        %v2074 = vpack.c.b16 %v1978, %v1974
        %v2075 = vpack.c.b16 %v1983, %v1979
        %v2076 = vpack.c.b16 %v1984, %v1980
        %v2077 = vpack.c.b16 %v1985, %v1981
        %v2078 = vpack.c.b16 %v1986, %v1982
        %v2079 = vpack.c.b16 %v1991, %v1987
        %v2080 = vpack.c.b16 %v1992, %v1988
        %v2081 = vpack.c.b16 %v1993, %v1989
        %v2082 = vpack.c.b16 %v1994, %v1990
        %v2083 = vpack.c.b16 %v1999, %v1995
        %v2084 = vpack.c.b16 %v2000, %v1996
        %v2085 = vpack.c.b16 %v2001, %v1997
        %v2086 = vpack.c.b16 %v2002, %v1998
        %v2087 = vpack.c.b16 %v2007, %v2003
        %v2088 = vpack.c.b16 %v2008, %v2004
        %v2089 = vpack.c.b16 %v2009, %v2005
        %v2090 = vpack.c.b16 %v2010, %v2006
        %v2091 = vpack.c.b16 %v2015, %v2011
        %v2092 = vpack.c.b16 %v2016, %v2012
        %v2093 = vpack.c.b16 %v2017, %v2013
        %v2094 = vpack.c.b16 %v2018, %v2014
        %v2095 = vpack.c.b16 %v2023, %v2019
        %v2096 = vpack.c.b16 %v2024, %v2020
        %v2097 = vpack.c.b16 %v2025, %v2021
        %v2098 = vpack.c.b16 %v2026, %v2022
        %v2099 = vpack.c.b16 %v2031, %v2027
        %v2100 = vpack.c.b16 %v2032, %v2028
        %v2101 = vpack.c.b16 %v2033, %v2029
        %v2102 = vpack.c.b16 %v2034, %v2030
        %v2103 = vpack.c.b16 %v2039, %v2035
        %v2104 = vpack.c.b16 %v2040, %v2036
        %v2105 = vpack.c.b16 %v2041, %v2037
        %v2106 = vpack.c.b16 %v2042, %v2038
        %2171 = vmatprep.subr.bf16.mxu0 %v2044
        %2172 = vmatpush1.bf16.msra.mxu0 %v2043
        %2173 = vmatprep.subr.bf16.mxu0 %v2048
        %2174 = vmatpush1.bf16.msra.mxu0 %v2047
        %2175 = vmatprep.subr.bf16.mxu0 %v2052
        %2176 = vmatpush1.bf16.msra.mxu0 %v2051
        %2177 = vmatprep.subr.bf16.mxu0 %v2056
        %2178 = vmatpush1.bf16.msra.mxu0 %v2055
        %2179 = vmatprep.subr.bf16.mxu0 %v2060
        %2180 = vmatpush1.bf16.msra.mxu0 %v2059
        %2181 = vmatprep.subr.bf16.mxu0 %v2064
        %2182 = vmatpush1.bf16.msra.mxu0 %v2063
        %2183 = vmatprep.subr.bf16.mxu0 %v2068
        %2184 = vmatpush1.bf16.msra.mxu0 %v2067
        %2185 = vmatprep.subr.bf16.mxu0 %v2072
        %2186 = vmatpush1.bf16.msra.mxu0 %v2071
        %2187 = vmatprep.subr.bf16.mxu0 %v2076
        %2188 = vmatpush1.bf16.msra.mxu0 %v2075
        %2189 = vmatprep.subr.bf16.mxu0 %v2080
        %2190 = vmatpush1.bf16.msra.mxu0 %v2079
        %2191 = vmatprep.subr.bf16.mxu0 %v2084
        %2192 = vmatpush1.bf16.msra.mxu0 %v2083
        %2193 = vmatprep.subr.bf16.mxu0 %v2088
        %2194 = vmatpush1.bf16.msra.mxu0 %v2087
        %2195 = vmatprep.subr.bf16.mxu0 %v2092
        %2196 = vmatpush1.bf16.msra.mxu0 %v2091
        %2197 = vmatprep.subr.bf16.mxu0 %v2096
        %2198 = vmatpush1.bf16.msra.mxu0 %v2095
        %2199 = vmatprep.subr.bf16.mxu0 %v2100
        %2200 = vmatpush1.bf16.msra.mxu0 %v2099
        %2201 = vmatprep.subr.bf16.mxu0 %v2104
        %2202 = vmatpush1.bf16.msra.mxu0 %v2103
        %2203 = vmatprep.mubr.bf16.mxu0 %v1749
        %2204 = vmatmul.mubr.bf16.gmra.mrb[0].mxu0 %v1748
        %v2205 = vpop.f32.mrb[0].mxu0
        %v2206 = vadd.f32 %v1834, %v2205
        %v2207 = vpop.f32.mrb[0].mxu0
        %v2208 = vadd.f32 %v1838, %v2207
        %v2209 = vpop.f32.mrb[0].mxu0
        %v2210 = vadd.f32 %v1834, %v2209
        %v2211 = vpop.f32.mrb[0].mxu0
        %v2212 = vadd.f32 %v1838, %v2211
        %2213 = vdwg.mxu0
        %2214 = vmatprep.subr.bf16.mxu0 %v2046
        %2215 = vmatpush1.bf16.msra.mxu0 %v2045
        %2216 = vmatprep.subr.bf16.mxu0 %v2050
        %2217 = vmatpush1.bf16.msra.mxu0 %v2049
        %2218 = vmatprep.subr.bf16.mxu0 %v2054
        %2219 = vmatpush1.bf16.msra.mxu0 %v2053
        %2220 = vmatprep.subr.bf16.mxu0 %v2058
        %2221 = vmatpush1.bf16.msra.mxu0 %v2057
        %2222 = vmatprep.subr.bf16.mxu0 %v2062
        %2223 = vmatpush1.bf16.msra.mxu0 %v2061
        %2224 = vmatprep.subr.bf16.mxu0 %v2066
        %2225 = vmatpush1.bf16.msra.mxu0 %v2065
        %2226 = vmatprep.subr.bf16.mxu0 %v2070
        %2227 = vmatpush1.bf16.msra.mxu0 %v2069
        %2228 = vmatprep.subr.bf16.mxu0 %v2074
        %2229 = vmatpush1.bf16.msra.mxu0 %v2073
        %2230 = vmatprep.subr.bf16.mxu0 %v2078
        %2231 = vmatpush1.bf16.msra.mxu0 %v2077
        %2232 = vmatprep.subr.bf16.mxu0 %v2082
        %2233 = vmatpush1.bf16.msra.mxu0 %v2081
        %2234 = vmatprep.subr.bf16.mxu0 %v2086
        %2235 = vmatpush1.bf16.msra.mxu0 %v2085
        %2236 = vmatprep.subr.bf16.mxu0 %v2090
        %2237 = vmatpush1.bf16.msra.mxu0 %v2089
        %2238 = vmatprep.subr.bf16.mxu0 %v2094
        %2239 = vmatpush1.bf16.msra.mxu0 %v2093
        %2240 = vmatprep.subr.bf16.mxu0 %v2098
        %2241 = vmatpush1.bf16.msra.mxu0 %v2097
        %2242 = vmatprep.subr.bf16.mxu0 %v2102
        %2243 = vmatpush1.bf16.msra.mxu0 %v2101
        %2244 = vmatprep.subr.bf16.mxu0 %v2106
        %2245 = vmatpush1.bf16.msra.mxu0 %v2105
        %2246 = vmatprep.mubr.bf16.mxu0 %v1749
        %2247 = vmatmul.mubr.bf16.gmra.mrb[0].mxu0 %v1748
        %v2248 = vpop.f32.mrb[0].mxu0
        %v2249 = vadd.f32 %v1842, %v2248
        %v2250 = vpop.f32.mrb[0].mxu0
        %v2251 = vadd.f32 %v1846, %v2250
        %v2252 = vpop.f32.mrb[0].mxu0
        %v2253 = vadd.f32 %v1842, %v2252
        %v2254 = vpop.f32.mrb[0].mxu0
        %v2255 = vadd.f32 %v1846, %v2254
        %2256 = vdwg.mxu0
        %v2257 = vmul.f32 %v2206, 0.5
        %v2258 = vmul.f32 %v2208, 0.5
        %v2259 = vmul.f32 %v2249, 0.5
        %v2260 = vmul.f32 %v2251, 0.5
        %v2261 = vmul.f32 %v2210, 0.5
        %v2262 = vmul.f32 %v2212, 0.5
        %v2263 = vmul.f32 %v2253, 0.5
        %v2264 = vmul.f32 %v2255, 0.5
        %v2265 = vmul.f32 %v2206, %v2206
        %v2266 = vmul.f32 %v2208, %v2208
        %v2267 = vmul.f32 %v2249, %v2249
        %v2268 = vmul.f32 %v2251, %v2251
        %v2269 = vmul.f32 %v2210, %v2210
        %v2270 = vmul.f32 %v2212, %v2212
        %v2271 = vmul.f32 %v2253, %v2253
        %v2272 = vmul.f32 %v2255, %v2255
        %v2273 = vmul.f32 %v2206, %v2265
        %v2274 = vmul.f32 %v2208, %v2266
        %v2275 = vmul.f32 %v2249, %v2267
        %v2276 = vmul.f32 %v2251, %v2268
        %v2277 = vmul.f32 %v2210, %v2269
        %v2278 = vmul.f32 %v2212, %v2270
        %v2279 = vmul.f32 %v2253, %v2271
        %v2280 = vmul.f32 %v2255, %v2272
        %v2281 = vmul.f32 %v2273, 0.044715
        %v2282 = vmul.f32 %v2274, 0.044715
        %v2283 = vmul.f32 %v2275, 0.044715
        %v2284 = vmul.f32 %v2276, 0.044715
        %v2285 = vmul.f32 %v2277, 0.044715
        %v2286 = vmul.f32 %v2278, 0.044715
        %v2287 = vmul.f32 %v2279, 0.044715
        %v2288 = vmul.f32 %v2280, 0.044715
        %v2289 = vadd.f32 %v2206, %v2281
        %v2290 = vadd.f32 %v2208, %v2282
        %v2291 = vadd.f32 %v2249, %v2283
        %v2292 = vadd.f32 %v2251, %v2284
        %v2293 = vadd.f32 %v2210, %v2285
        %v2294 = vadd.f32 %v2212, %v2286
        %v2295 = vadd.f32 %v2253, %v2287
        %v2296 = vadd.f32 %v2255, %v2288
        %v2297 = vmul.f32 %v2289, 0.7978846
        %v2298 = vmul.f32 %v2290, 0.7978846
        %v2299 = vmul.f32 %v2291, 0.7978846
        %v2300 = vmul.f32 %v2292, 0.7978846
        %v2301 = vmul.f32 %v2293, 0.7978846
        %v2302 = vmul.f32 %v2294, 0.7978846
        %v2303 = vmul.f32 %v2295, 0.7978846
        %v2304 = vmul.f32 %v2296, 0.7978846
        %v2305 = vtanh.pop %v2297
        %v2306 = vtanh.pop %v2298
        %v2307 = vtanh.pop %v2299
        %v2308 = vtanh.pop %v2300
        %v2309 = vtanh.pop %v2301
        %v2310 = vtanh.pop %v2302
        %v2311 = vtanh.pop %v2303
        %v2312 = vtanh.pop %v2304
        %v2313 = vadd.f32 %v2305, 1.0
        %v2314 = vadd.f32 %v2306, 1.0
        %v2315 = vadd.f32 %v2307, 1.0
        %v2316 = vadd.f32 %v2308, 1.0
        %v2317 = vadd.f32 %v2309, 1.0
        %v2318 = vadd.f32 %v2310, 1.0
        %v2319 = vadd.f32 %v2311, 1.0
        %v2320 = vadd.f32 %v2312, 1.0
        %v2321 = vmul.f32 %v2257, %v2313
        %v2322 = vmul.f32 %v2258, %v2314
        %v2323 = vmul.f32 %v2259, %v2315
        %v2324 = vmul.f32 %v2260, %v2316
        %v2325 = vmul.f32 %v2261, %v2317
        %v2326 = vmul.f32 %v2262, %v2318
        %v2327 = vmul.f32 %v2263, %v2319
        %v2328 = vmul.f32 %v2264, %v2320
        %v2329 = vpack.c.bf16 %v2325, %v2321
        %v2330 = vpack.c.bf16 %v2326, %v2322
        %v2331 = vpack.c.bf16 %v2327, %v2323
        %v2332 = vpack.c.bf16 %v2328, %v2324
        %v2333 = vld [vmem:[#allocation10] sm:$0xff]
        %v2334 = vld [vmem:[#allocation10 + $0x8] sm:$0xff]
        %v2335 = vld [vmem:[#allocation10 + $0x10] sm:$0xff]
        %v2336 = vld [vmem:[#allocation10 + $0x18] sm:$0xff]
        %v2337 = vld [vmem:[#allocation10 + $0x20] sm:$0xff]
        %v2338 = vld [vmem:[#allocation10 + $0x28] sm:$0xff]
        %v2339 = vld [vmem:[#allocation10 + $0x30] sm:$0xff]
        %v2340 = vld [vmem:[#allocation10 + $0x38] sm:$0xff]
        %v2341 = vld [vmem:[#allocation10 + $0x40] sm:$0xff]
        %v2342 = vld [vmem:[#allocation10 + $0x48] sm:$0xff]
        %v2343 = vld [vmem:[#allocation10 + $0x50] sm:$0xff]
        %v2344 = vld [vmem:[#allocation10 + $0x58] sm:$0xff]
        %v2345 = vld [vmem:[#allocation10 + $0x60] sm:$0xff]
        %v2346 = vld [vmem:[#allocation10 + $0x68] sm:$0xff]
        %v2347 = vld [vmem:[#allocation10 + $0x70] sm:$0xff]
        %v2348 = vld [vmem:[#allocation10 + $0x78] sm:$0xff]
        %v2349 = vld [vmem:[#allocation10 + $0x80] sm:$0xff]
        %v2350 = vld [vmem:[#allocation10 + $0x88] sm:$0xff]
        %v2351 = vld [vmem:[#allocation10 + $0x90] sm:$0xff]
        %v2352 = vld [vmem:[#allocation10 + $0x98] sm:$0xff]
        %v2353 = vld [vmem:[#allocation10 + $0xa0] sm:$0xff]
        %v2354 = vld [vmem:[#allocation10 + $0xa8] sm:$0xff]
        %v2355 = vld [vmem:[#allocation10 + $0xb0] sm:$0xff]
        %v2356 = vld [vmem:[#allocation10 + $0xb8] sm:$0xff]
        %v2357 = vld [vmem:[#allocation10 + $0xc0] sm:$0xff]
        %v2358 = vld [vmem:[#allocation10 + $0xc8] sm:$0xff]
        %v2359 = vld [vmem:[#allocation10 + $0xd0] sm:$0xff]
        %v2360 = vld [vmem:[#allocation10 + $0xd8] sm:$0xff]
        %v2361 = vld [vmem:[#allocation10 + $0xe0] sm:$0xff]
        %v2362 = vld [vmem:[#allocation10 + $0xe8] sm:$0xff]
        %v2363 = vld [vmem:[#allocation10 + $0xf0] sm:$0xff]
        %v2364 = vld [vmem:[#allocation10 + $0xf8] sm:$0xff]
        %v2365 = vld [vmem:[#allocation10 + $0x100] sm:$0xff]
        %v2366 = vld [vmem:[#allocation10 + $0x108] sm:$0xff]
        %v2367 = vld [vmem:[#allocation10 + $0x110] sm:$0xff]
        %v2368 = vld [vmem:[#allocation10 + $0x118] sm:$0xff]
        %v2369 = vld [vmem:[#allocation10 + $0x120] sm:$0xff]
        %v2370 = vld [vmem:[#allocation10 + $0x128] sm:$0xff]
        %v2371 = vld [vmem:[#allocation10 + $0x130] sm:$0xff]
        %v2372 = vld [vmem:[#allocation10 + $0x138] sm:$0xff]
        %v2373 = vld [vmem:[#allocation10 + $0x140] sm:$0xff]
        %v2374 = vld [vmem:[#allocation10 + $0x148] sm:$0xff]
        %v2375 = vld [vmem:[#allocation10 + $0x150] sm:$0xff]
        %v2376 = vld [vmem:[#allocation10 + $0x158] sm:$0xff]
        %v2377 = vld [vmem:[#allocation10 + $0x160] sm:$0xff]
        %v2378 = vld [vmem:[#allocation10 + $0x168] sm:$0xff]
        %v2379 = vld [vmem:[#allocation10 + $0x170] sm:$0xff]
        %v2380 = vld [vmem:[#allocation10 + $0x178] sm:$0xff]
        %v2381 = vld [vmem:[#allocation10 + $0x180] sm:$0xff]
        %v2382 = vld [vmem:[#allocation10 + $0x188] sm:$0xff]
        %v2383 = vld [vmem:[#allocation10 + $0x190] sm:$0xff]
        %v2384 = vld [vmem:[#allocation10 + $0x198] sm:$0xff]
        %v2385 = vld [vmem:[#allocation10 + $0x1a0] sm:$0xff]
        %v2386 = vld [vmem:[#allocation10 + $0x1a8] sm:$0xff]
        %v2387 = vld [vmem:[#allocation10 + $0x1b0] sm:$0xff]
        %v2388 = vld [vmem:[#allocation10 + $0x1b8] sm:$0xff]
        %v2389 = vld [vmem:[#allocation10 + $0x1c0] sm:$0xff]
        %v2390 = vld [vmem:[#allocation10 + $0x1c8] sm:$0xff]
        %v2391 = vld [vmem:[#allocation10 + $0x1d0] sm:$0xff]
        %v2392 = vld [vmem:[#allocation10 + $0x1d8] sm:$0xff]
        %v2393 = vld [vmem:[#allocation10 + $0x1e0] sm:$0xff]
        %v2394 = vld [vmem:[#allocation10 + $0x1e8] sm:$0xff]
        %v2395 = vld [vmem:[#allocation10 + $0x1f0] sm:$0xff]
        %v2396 = vld [vmem:[#allocation10 + $0x1f8] sm:$0xff]
        %v2461 = vunpack.c.l.b16 %v2333
        %v2462 = vunpack.c.h.b16 %v2333
        %v2463 = vunpack.c.l.b16 %v2334
        %v2464 = vunpack.c.h.b16 %v2334
        %v2465 = vunpack.c.l.b16 %v2335
        %v2466 = vunpack.c.h.b16 %v2335
        %v2467 = vunpack.c.l.b16 %v2336
        %v2468 = vunpack.c.h.b16 %v2336
        %v2469 = vunpack.c.l.b16 %v2337
        %v2470 = vunpack.c.h.b16 %v2337
        %v2471 = vunpack.c.l.b16 %v2338
        %v2472 = vunpack.c.h.b16 %v2338
        %v2473 = vunpack.c.l.b16 %v2339
        %v2474 = vunpack.c.h.b16 %v2339
        %v2475 = vunpack.c.l.b16 %v2340
        %v2476 = vunpack.c.h.b16 %v2340
        %v2477 = vunpack.c.l.b16 %v2341
        %v2478 = vunpack.c.h.b16 %v2341
        %v2479 = vunpack.c.l.b16 %v2342
        %v2480 = vunpack.c.h.b16 %v2342
        %v2481 = vunpack.c.l.b16 %v2343
        %v2482 = vunpack.c.h.b16 %v2343
        %v2483 = vunpack.c.l.b16 %v2344
        %v2484 = vunpack.c.h.b16 %v2344
        %v2485 = vunpack.c.l.b16 %v2345
        %v2486 = vunpack.c.h.b16 %v2345
        %v2487 = vunpack.c.l.b16 %v2346
        %v2488 = vunpack.c.h.b16 %v2346
        %v2489 = vunpack.c.l.b16 %v2347
        %v2490 = vunpack.c.h.b16 %v2347
        %v2491 = vunpack.c.l.b16 %v2348
        %v2492 = vunpack.c.h.b16 %v2348
        %v2493 = vunpack.c.l.b16 %v2349
        %v2494 = vunpack.c.h.b16 %v2349
        %v2495 = vunpack.c.l.b16 %v2350
        %v2496 = vunpack.c.h.b16 %v2350
        %v2497 = vunpack.c.l.b16 %v2351
        %v2498 = vunpack.c.h.b16 %v2351
        %v2499 = vunpack.c.l.b16 %v2352
        %v2500 = vunpack.c.h.b16 %v2352
        %v2501 = vunpack.c.l.b16 %v2353
        %v2502 = vunpack.c.h.b16 %v2353
        %v2503 = vunpack.c.l.b16 %v2354
        %v2504 = vunpack.c.h.b16 %v2354
        %v2505 = vunpack.c.l.b16 %v2355
        %v2506 = vunpack.c.h.b16 %v2355
        %v2507 = vunpack.c.l.b16 %v2356
        %v2508 = vunpack.c.h.b16 %v2356
        %v2509 = vunpack.c.l.b16 %v2357
        %v2510 = vunpack.c.h.b16 %v2357
        %v2511 = vunpack.c.l.b16 %v2358
        %v2512 = vunpack.c.h.b16 %v2358
        %v2513 = vunpack.c.l.b16 %v2359
        %v2514 = vunpack.c.h.b16 %v2359
        %v2515 = vunpack.c.l.b16 %v2360
        %v2516 = vunpack.c.h.b16 %v2360
        %v2517 = vunpack.c.l.b16 %v2361
        %v2518 = vunpack.c.h.b16 %v2361
        %v2519 = vunpack.c.l.b16 %v2362
        %v2520 = vunpack.c.h.b16 %v2362
        %v2521 = vunpack.c.l.b16 %v2363
        %v2522 = vunpack.c.h.b16 %v2363
        %v2523 = vunpack.c.l.b16 %v2364
        %v2524 = vunpack.c.h.b16 %v2364
        %v2525 = vunpack.c.l.b16 %v2365
        %v2526 = vunpack.c.h.b16 %v2365
        %v2527 = vunpack.c.l.b16 %v2366
        %v2528 = vunpack.c.h.b16 %v2366
        %v2529 = vunpack.c.l.b16 %v2367
        %v2530 = vunpack.c.h.b16 %v2367
        %v2531 = vunpack.c.l.b16 %v2368
        %v2532 = vunpack.c.h.b16 %v2368
        %v2533 = vunpack.c.l.b16 %v2369
        %v2534 = vunpack.c.h.b16 %v2369
        %v2535 = vunpack.c.l.b16 %v2370
        %v2536 = vunpack.c.h.b16 %v2370
        %v2537 = vunpack.c.l.b16 %v2371
        %v2538 = vunpack.c.h.b16 %v2371
        %v2539 = vunpack.c.l.b16 %v2372
        %v2540 = vunpack.c.h.b16 %v2372
        %v2541 = vunpack.c.l.b16 %v2373
        %v2542 = vunpack.c.h.b16 %v2373
        %v2543 = vunpack.c.l.b16 %v2374
        %v2544 = vunpack.c.h.b16 %v2374
        %v2545 = vunpack.c.l.b16 %v2375
        %v2546 = vunpack.c.h.b16 %v2375
        %v2547 = vunpack.c.l.b16 %v2376
        %v2548 = vunpack.c.h.b16 %v2376
        %v2549 = vunpack.c.l.b16 %v2377
        %v2550 = vunpack.c.h.b16 %v2377
        %v2551 = vunpack.c.l.b16 %v2378
        %v2552 = vunpack.c.h.b16 %v2378
        %v2553 = vunpack.c.l.b16 %v2379
        %v2554 = vunpack.c.h.b16 %v2379
        %v2555 = vunpack.c.l.b16 %v2380
        %v2556 = vunpack.c.h.b16 %v2380
        %v2557 = vunpack.c.l.b16 %v2381
        %v2558 = vunpack.c.h.b16 %v2381
        %v2559 = vunpack.c.l.b16 %v2382
        %v2560 = vunpack.c.h.b16 %v2382
        %v2561 = vunpack.c.l.b16 %v2383
        %v2562 = vunpack.c.h.b16 %v2383
        %v2563 = vunpack.c.l.b16 %v2384
        %v2564 = vunpack.c.h.b16 %v2384
        %v2565 = vunpack.c.l.b16 %v2385
        %v2566 = vunpack.c.h.b16 %v2385
        %v2567 = vunpack.c.l.b16 %v2386
        %v2568 = vunpack.c.h.b16 %v2386
        %v2569 = vunpack.c.l.b16 %v2387
        %v2570 = vunpack.c.h.b16 %v2387
        %v2571 = vunpack.c.l.b16 %v2388
        %v2572 = vunpack.c.h.b16 %v2388
        %v2573 = vunpack.c.l.b16 %v2389
        %v2574 = vunpack.c.h.b16 %v2389
        %v2575 = vunpack.c.l.b16 %v2390
        %v2576 = vunpack.c.h.b16 %v2390
        %v2577 = vunpack.c.l.b16 %v2391
        %v2578 = vunpack.c.h.b16 %v2391
        %v2579 = vunpack.c.l.b16 %v2392
        %v2580 = vunpack.c.h.b16 %v2392
        %v2581 = vunpack.c.l.b16 %v2393
        %v2582 = vunpack.c.h.b16 %v2393
        %v2583 = vunpack.c.l.b16 %v2394
        %v2584 = vunpack.c.h.b16 %v2394
        %v2585 = vunpack.c.l.b16 %v2395
        %v2586 = vunpack.c.h.b16 %v2395
        %v2587 = vunpack.c.l.b16 %v2396
        %v2588 = vunpack.c.h.b16 %v2396
        %v2589 = vpack.c.b16 %v2463, %v2461
        %v2590 = vpack.c.b16 %v2464, %v2462
        %v2591 = vpack.c.b16 %v2467, %v2465
        %v2592 = vpack.c.b16 %v2468, %v2466
        %v2593 = vpack.c.b16 %v2471, %v2469
        %v2594 = vpack.c.b16 %v2472, %v2470
        %v2595 = vpack.c.b16 %v2475, %v2473
        %v2596 = vpack.c.b16 %v2476, %v2474
        %v2597 = vpack.c.b16 %v2479, %v2477
        %v2598 = vpack.c.b16 %v2480, %v2478
        %v2599 = vpack.c.b16 %v2483, %v2481
        %v2600 = vpack.c.b16 %v2484, %v2482
        %v2601 = vpack.c.b16 %v2487, %v2485
        %v2602 = vpack.c.b16 %v2488, %v2486
        %v2603 = vpack.c.b16 %v2491, %v2489
        %v2604 = vpack.c.b16 %v2492, %v2490
        %v2605 = vpack.c.b16 %v2495, %v2493
        %v2606 = vpack.c.b16 %v2496, %v2494
        %v2607 = vpack.c.b16 %v2499, %v2497
        %v2608 = vpack.c.b16 %v2500, %v2498
        %v2609 = vpack.c.b16 %v2503, %v2501
        %v2610 = vpack.c.b16 %v2504, %v2502
        %v2611 = vpack.c.b16 %v2507, %v2505
        %v2612 = vpack.c.b16 %v2508, %v2506
        %v2613 = vpack.c.b16 %v2511, %v2509
        %v2614 = vpack.c.b16 %v2512, %v2510
        %v2615 = vpack.c.b16 %v2515, %v2513
        %v2616 = vpack.c.b16 %v2516, %v2514
        %v2617 = vpack.c.b16 %v2519, %v2517
        %v2618 = vpack.c.b16 %v2520, %v2518
        %v2619 = vpack.c.b16 %v2523, %v2521
        %v2620 = vpack.c.b16 %v2524, %v2522
        %v2621 = vpack.c.b16 %v2527, %v2525
        %v2622 = vpack.c.b16 %v2528, %v2526
        %v2623 = vpack.c.b16 %v2531, %v2529
        %v2624 = vpack.c.b16 %v2532, %v2530
        %v2625 = vpack.c.b16 %v2535, %v2533
        %v2626 = vpack.c.b16 %v2536, %v2534
        %v2627 = vpack.c.b16 %v2539, %v2537
        %v2628 = vpack.c.b16 %v2540, %v2538
        %v2629 = vpack.c.b16 %v2543, %v2541
        %v2630 = vpack.c.b16 %v2544, %v2542
        %v2631 = vpack.c.b16 %v2547, %v2545
        %v2632 = vpack.c.b16 %v2548, %v2546
        %v2633 = vpack.c.b16 %v2551, %v2549
        %v2634 = vpack.c.b16 %v2552, %v2550
        %v2635 = vpack.c.b16 %v2555, %v2553
        %v2636 = vpack.c.b16 %v2556, %v2554
        %v2637 = vpack.c.b16 %v2559, %v2557
        %v2638 = vpack.c.b16 %v2560, %v2558
        %v2639 = vpack.c.b16 %v2563, %v2561
        %v2640 = vpack.c.b16 %v2564, %v2562
        %v2641 = vpack.c.b16 %v2567, %v2565
        %v2642 = vpack.c.b16 %v2568, %v2566
        %v2643 = vpack.c.b16 %v2571, %v2569
        %v2644 = vpack.c.b16 %v2572, %v2570
        %v2645 = vpack.c.b16 %v2575, %v2573
        %v2646 = vpack.c.b16 %v2576, %v2574
        %v2647 = vpack.c.b16 %v2579, %v2577
        %v2648 = vpack.c.b16 %v2580, %v2578
        %v2649 = vpack.c.b16 %v2583, %v2581
        %v2650 = vpack.c.b16 %v2584, %v2582
        %v2651 = vpack.c.b16 %v2587, %v2585
        %v2652 = vpack.c.b16 %v2588, %v2586
        %2717 = vmatprep.subr.bf16.mxu0 %v2590
        %2718 = vmatpush1.bf16.msra.mxu0 %v2589
        %2719 = vmatprep.subr.bf16.mxu0 %v2592
        %2720 = vmatpush1.bf16.msra.mxu0 %v2591
        %2721 = vmatprep.subr.bf16.mxu0 %v2594
        %2722 = vmatpush1.bf16.msra.mxu0 %v2593
        %2723 = vmatprep.subr.bf16.mxu0 %v2596
        %2724 = vmatpush1.bf16.msra.mxu0 %v2595
        %2725 = vmatprep.subr.bf16.mxu0 %v2598
        %2726 = vmatpush1.bf16.msra.mxu0 %v2597
        %2727 = vmatprep.subr.bf16.mxu0 %v2600
        %2728 = vmatpush1.bf16.msra.mxu0 %v2599
        %2729 = vmatprep.subr.bf16.mxu0 %v2602
        %2730 = vmatpush1.bf16.msra.mxu0 %v2601
        %2731 = vmatprep.subr.bf16.mxu0 %v2604
        %2732 = vmatpush1.bf16.msra.mxu0 %v2603
        %2733 = vmatprep.subr.bf16.mxu0 %v2606
        %2734 = vmatpush1.bf16.msra.mxu0 %v2605
        %2735 = vmatprep.subr.bf16.mxu0 %v2608
        %2736 = vmatpush1.bf16.msra.mxu0 %v2607
        %2737 = vmatprep.subr.bf16.mxu0 %v2610
        %2738 = vmatpush1.bf16.msra.mxu0 %v2609
        %2739 = vmatprep.subr.bf16.mxu0 %v2612
        %2740 = vmatpush1.bf16.msra.mxu0 %v2611
        %2741 = vmatprep.subr.bf16.mxu0 %v2614
        %2742 = vmatpush1.bf16.msra.mxu0 %v2613
        %2743 = vmatprep.subr.bf16.mxu0 %v2616
        %2744 = vmatpush1.bf16.msra.mxu0 %v2615
        %2745 = vmatprep.subr.bf16.mxu0 %v2618
        %2746 = vmatpush1.bf16.msra.mxu0 %v2617
        %2747 = vmatprep.subr.bf16.mxu0 %v2620
        %2748 = vmatpush1.bf16.msra.mxu0 %v2619
        %2749 = vmatprep.mubr.bf16.mxu0 %v2330
        %2750 = vmatmul.mubr.bf16.gmra.mrb[0].mxu0 %v2329
        %v2751 = vpop.f32.mrb[0].mxu0
        %v2752 = vadd.f32 0.0, %v2751
        %v2753 = vpop.f32.mrb[0].mxu0
        %v2754 = vadd.f32 0.0, %v2753
        %v2755 = vpop.f32.mrb[0].mxu0
        %v2756 = vadd.f32 0.0, %v2755
        %v2757 = vpop.f32.mrb[0].mxu0
        %v2758 = vadd.f32 0.0, %v2757
        %2759 = vdwg.mxu0
        %2760 = vmatprep.subr.bf16.mxu0 %v2622
        %2761 = vmatpush1.bf16.msra.mxu0 %v2621
        %2762 = vmatprep.subr.bf16.mxu0 %v2624
        %2763 = vmatpush1.bf16.msra.mxu0 %v2623
        %2764 = vmatprep.subr.bf16.mxu0 %v2626
        %2765 = vmatpush1.bf16.msra.mxu0 %v2625
        %2766 = vmatprep.subr.bf16.mxu0 %v2628
        %2767 = vmatpush1.bf16.msra.mxu0 %v2627
        %2768 = vmatprep.subr.bf16.mxu0 %v2630
        %2769 = vmatpush1.bf16.msra.mxu0 %v2629
        %2770 = vmatprep.subr.bf16.mxu0 %v2632
        %2771 = vmatpush1.bf16.msra.mxu0 %v2631
        %2772 = vmatprep.subr.bf16.mxu0 %v2634
        %2773 = vmatpush1.bf16.msra.mxu0 %v2633
        %2774 = vmatprep.subr.bf16.mxu0 %v2636
        %2775 = vmatpush1.bf16.msra.mxu0 %v2635
        %2776 = vmatprep.subr.bf16.mxu0 %v2638
        %2777 = vmatpush1.bf16.msra.mxu0 %v2637
        %2778 = vmatprep.subr.bf16.mxu0 %v2640
        %2779 = vmatpush1.bf16.msra.mxu0 %v2639
        %2780 = vmatprep.subr.bf16.mxu0 %v2642
        %2781 = vmatpush1.bf16.msra.mxu0 %v2641
        %2782 = vmatprep.subr.bf16.mxu0 %v2644
        %2783 = vmatpush1.bf16.msra.mxu0 %v2643
        %2784 = vmatprep.subr.bf16.mxu0 %v2646
        %2785 = vmatpush1.bf16.msra.mxu0 %v2645
        %2786 = vmatprep.subr.bf16.mxu0 %v2648
        %2787 = vmatpush1.bf16.msra.mxu0 %v2647
        %2788 = vmatprep.subr.bf16.mxu0 %v2650
        %2789 = vmatpush1.bf16.msra.mxu0 %v2649
        %2790 = vmatprep.subr.bf16.mxu0 %v2652
        %2791 = vmatpush1.bf16.msra.mxu0 %v2651
        %2792 = vmatprep.mubr.bf16.mxu0 %v2332
        %2793 = vmatmul.mubr.bf16.gmra.mrb[0].mxu0 %v2331
        %v2794 = vpop.f32.mrb[0].mxu0
        %v2795 = vadd.f32 %v2752, %v2794
        %v2796 = vpop.f32.mrb[0].mxu0
        %v2797 = vadd.f32 %v2754, %v2796
        %v2798 = vpop.f32.mrb[0].mxu0
        %v2799 = vadd.f32 %v2756, %v2798
        %v2800 = vpop.f32.mrb[0].mxu0
        %v2801 = vadd.f32 %v2758, %v2800
        %2802 = vdwg.mxu0
        %v2803 = vadd.f32 %v1761, %v2795
        %v2804 = vadd.f32 %v1762, %v2797
        %v2805 = vadd.f32 %v1763, %v2799
        %v2806 = vadd.f32 %v1764, %v2801
        %2807 = vst [vmem:[%s369] sm:$0xff] %v2803
        %2808 = vst [vmem:[%s369 + $0x8] sm:$0xff] %v2804
        %2809 = vst [vmem:[%s369 + $0x10] sm:$0xff] %v2805
        %2810 = vst [vmem:[%s369 + $0x18] sm:$0xff] %v2806
        %s2811 = sand.u32 %s187, 1
        %s2812 = scalar_lea.sflag [#allocation4], %s2811
        %s2813 = sand.u32 %s187, 1
        %s2814 = smul.addr %s2813, 32
        %s2815 = scalar_lea.vmem [#allocation13], %s2814
        // Predicated region
        $region73: #{tpu_custom_call.1} parent=47 // pred_check
          %p2816 = pneg %p197
        $region74: #{tpu_custom_call.1} parent=47 // pred_check_branch
          %2818 = sbr.rel (%p2816) target = $region76
        $region75: #{tpu_custom_call.1} parent=47 // pred_region
          %s2820 = ssub.s32 512, 512
          %2821 = vsyncadd %s2812, %s2820
          %s2822 = smul.addr %s27, 4
          %s2823 = smul.addr %s2822, 128
          %s2824 = scalar_lea.hbm %s7, %s2823
          %s2825 = sshll.u32 %s2815, 4
          %s2826 = int_to_ptr.vmem [resolvable:$true] %s2825
          %2831 = dma.vmem_to_hbm [thread:$0]  %s2826, 512, %s2824, %s2812, 256, 256, 16
        $region76: #{tpu_custom_call.1} parent=47 // pred_fallthru
          _
      $region48: #{tpu_custom_call.1} parent=5 // pred_fallthru
        _
      %p2832 = scmp.le.s32.totalorder 2, %s22
      // Predicated region
      $region77: #{tpu_custom_call.1} parent=5 // pred_check
        %p2833 = pneg %p2832
      $region78: #{tpu_custom_call.1} parent=5 // pred_check_branch
        %2835 = sbr.rel (%p2833) target = $region80
      $region79: #{tpu_custom_call.1} parent=5 // pred_region
        %s2836 = ssub.s32 %s22, 2
        // Predicated region
        $region81: #{tpu_custom_call.1} parent=79 // pred_check
          %p2837 = pneg %p203
        $region82: #{tpu_custom_call.1} parent=79 // pred_check_branch
          %2839 = sbr.rel (%p2837) target = $region84
        $region83: #{tpu_custom_call.1} parent=79 // pred_region
          %s2840 = sand.u32 %s188, 1
          %s2841 = scalar_lea.sflag [#allocation4], %s2840
          %s2842 = sand.u32 %s188, 1
          %s2843 = smul.addr %s2842, 32
          %s2844 = scalar_lea.vmem [#allocation13], %s2843
          %2845 = dma.done %s2841, 512
        $region84: #{tpu_custom_call.1} parent=79 // pred_fallthru
          _
      $region80: #{tpu_custom_call.1} parent=5 // pred_fallthru
        _
    $region6: #{tpu_custom_call.1} parent=1 // loop_footer
      %s26 = sadd.s32 1, %s22
    $region7: #{tpu_custom_call.1} parent=1 // loop_footer_branch
      %21 = sbr.rel target = $region3
    $region8: #{tpu_custom_call.1} parent=1 // loop_exit
      _
    %2846 = vsyncpa [#allocation3], 1
    %s2847 = scalar_lea.sflag [#allocation3], 1
    %2848 = vsyncpa %s2847, 1
    %2849 = vsyncpa [#allocation6], 1
    %2850 = vsyncpa [#allocation9], 1
    %2851 = vsyncpa [#allocation12], 1
    %2852 = vsyncpa [#allocation4], 1
    %s2853 = scalar_lea.sflag [#allocation4], 1
    %2854 = vsyncpa %s2853, 1

// kernel: tpu_custom_call.1
$region0: #{tpu_custom_call.1}
  #allocation0 [shape = 'u32[]', space=smem, size = 0x4, offset = 0x4, fixed_abs, tag = 'smem constant byte address 0x4 - core index']
  #allocation1 [shape = 'u32[144,128]{1,0:T(1,128)}', space=vmem, size = 0x12000, scoped, tag = 'internal scratch']
  %s0 = inlined_call_operand.hbm [shape: f32[2,16,256], index: 0, kind: input, shape index: {}]
  %s1 = inlined_call_operand.hbm [shape: bf16[256,768], index: 1, kind: input, shape index: {}]
  %s2 = inlined_call_operand.hbm [shape: bf16[256,256], index: 2, kind: input, shape index: {}]
  %s3 = inlined_call_operand.hbm [shape: bf16[256,512], index: 3, kind: input, shape index: {}]
  %s4 = inlined_call_operand.hbm [shape: bf16[512,256], index: 4, kind: input, shape index: {}]
  %s5 = inlined_call_operand.hbm [shape: f32[9,256], index: 5, kind: input, shape index: {}]
  %s6 = inlined_call_operand.vmem [shape: f32[1,512], index: 6, kind: input, shape index: {}]
  %s7 = inlined_call_operand.hbm [shape: f32[2,16,256], index: 7, kind: output, shape index: {}]
  %s8 = sld [smem:[#allocation0]]
  $region85: #{tpu_custom_call.1} parent=0
    _
  %s10 = ssub.s32 1, %s8
  %s11 = scalar_select 0, %s10, %s8
  $region1: #{tpu_custom_call.1} parent=0
    #allocation2 [shape = 'u8[32768]{0}', space=vmem, size = 0x8000, scoped, tag = 'input window, operand 0']
    #allocation3 [shape = 's32[2]{0}', space=sflag, size = 0x8, scoped, tag = 'scoped memory for tpu_custom_call.1']
    #allocation4 [shape = 's32[2]{0}', space=sflag, size = 0x8, scoped, tag = 'scoped memory for tpu_custom_call.1']
    #allocation5 [shape = 'u8[393216]{0}', space=vmem, size = 0x60000, scoped, tag = 'input window, operand 1, single buffered']
    #allocation6 [shape = 's32[1]{0}', space=sflag, size = 0x4, scoped, tag = 'scoped memory for tpu_custom_call.1']
    #allocation7 [shape = 'u8[131072]{0}', space=vmem, size = 0x20000, scoped, tag = 'input window, operand 2, single buffered']
    #allocation8 [shape = 'u8[262144]{0}', space=vmem, size = 0x40000, scoped, tag = 'input window, operand 3, single buffered']
    #allocation9 [shape = 's32[1]{0}', space=sflag, size = 0x4, scoped, tag = 'scoped memory for tpu_custom_call.1']
    #allocation10 [shape = 'u8[262144]{0}', space=vmem, size = 0x40000, scoped, tag = 'input window, operand 4, single buffered']
    #allocation11 [shape = 'u8[16384]{0}', space=vmem, size = 0x4000, scoped, tag = 'input window, operand 5, single buffered']
    #allocation12 [shape = 's32[1]{0}', space=sflag, size = 0x4, scoped, tag = 'scoped memory for tpu_custom_call.1']
    #allocation13 [shape = 'u8[32768]{0}', space=vmem, size = 0x8000, scoped, tag = 'output window, operand 0']
    %12 = vsyncpa [#allocation3], 0
    %s13 = scalar_lea.sflag [#allocation3], 1
    %14 = vsyncpa %s13, 0
    %15 = vsyncpa [#allocation6], 0
    %16 = vsyncpa [#allocation9], 0
    %17 = vsyncpa [#allocation12], 0
    %18 = vsyncpa [#allocation4], 0
    %s19 = scalar_lea.sflag [#allocation4], 1
    %20 = vsyncpa %s19, 0
    loop: start=0, step=1, limit=4
    $region2: #{tpu_custom_call.1} parent=1 // loop_pre_header
      _
    $region3: #{tpu_custom_call.1} parent=1 // loop_header
      %s22 = sphi 0, %s26
      %p23 = scmp.ge.s32.totalorder %s22, 4
      %s32 = sphi 0, %s34
      %s35 = sphi 0, %s32
      %s36 = sphi 0, %s35
      %s52 = sphi 0, %s36
      %s56 = sphi 0, %s56
      %s58 = sphi 0, %s56
      %s59 = sphi 0, %s58
      %s73 = sphi 0, %s59
      %s77 = sphi 0, %s77
      %s79 = sphi 0, %s77
      %s80 = sphi 0, %s79
      %s94 = sphi 0, %s80
      %s98 = sphi 0, %s98
      %s100 = sphi 0, %s98
      %s101 = sphi 0, %s100
      %s115 = sphi 0, %s101
      %s119 = sphi 0, %s119
      %s121 = sphi 0, %s119
      %s122 = sphi 0, %s121
      %s136 = sphi 0, %s122
      %s140 = sphi 0, %s140
      %s142 = sphi 0, %s140
      %s143 = sphi 0, %s142
      %s157 = sphi 0, %s143
      %s161 = sphi 0, %s161
      %s163 = sphi 0, %s161
      %s164 = sphi 0, %s163
      %s178 = sphi 0, %s164
      %s184 = sphi 0, %s186
      %s187 = sphi 0, %s184
      %s188 = sphi 0, %s187
      %s204 = sphi 0, %s188
    $region4: #{tpu_custom_call.1} parent=1 // loop_header_branch
      %25 = sbr.rel (%p23) target = $region8
    $region5: #{tpu_custom_call.1} parent=1 // loop_body
      %s27 = ssub.s32 %s22, 1
      %s28 = ssub.s32 %s22, 2
      %s29 = sadd.s32 %s22, 1
      %s30 = ssub.s32 %s22, %s29
      %p31 = scmp.eq.s32.totalorder %s30, 0
      %s33 = sadd.s32 %s32, 1
      %s34 = scalar_select %p31, %s32, %s33
      %p37 = pneg %p31
      %p38 = scmp.eq.s32.totalorder %s22, 1
      %p39 = por %p37, %p38
      %p40 = scmp.ne.s32.totalorder %s32, %s35
      %p41 = scmp.eq.s32.totalorder %s22, 0
      %p42 = por %p40, %p41
      %p43 = scmp.ne.s32.totalorder %s32, %s35
      %p44 = scmp.eq.s32.totalorder %s27, 1
      %p45 = por %p43, %p44
      %p46 = scmp.ne.s32.totalorder %s35, %s36
      %p47 = scmp.eq.s32.totalorder %s27, 0
      %p48 = por %p46, %p47
      %p49 = scmp.ne.s32.totalorder %s35, %s36
      %p50 = scmp.eq.s32.totalorder %s28, 1
      %p51 = por %p49, %p50
      %p53 = scmp.ne.s32.totalorder %s36, %s52
      %p54 = scmp.eq.s32.totalorder %s28, 0
      %p55 = por %p53, %p54
      %s57 = sadd.s32 %s56, 1
      %p60 = scmp.eq.s32.totalorder %s22, 1
      %p61 = scmp.ne.s32.totalorder %s56, %s58
      %p62 = scmp.eq.s32.totalorder %s22, 0
      %p63 = por %p61, %p62
      %p64 = scmp.ne.s32.totalorder %s56, %s58
      %p65 = scmp.eq.s32.totalorder %s27, 1
      %p66 = por %p64, %p65
      %p67 = scmp.ne.s32.totalorder %s58, %s59
      %p68 = scmp.eq.s32.totalorder %s27, 0
      %p69 = por %p67, %p68
      %p70 = scmp.ne.s32.totalorder %s58, %s59
      %p71 = scmp.eq.s32.totalorder %s28, 1
      %p72 = por %p70, %p71
      %p74 = scmp.ne.s32.totalorder %s59, %s73
      %p75 = scmp.eq.s32.totalorder %s28, 0
      %p76 = por %p74, %p75
      %s78 = sadd.s32 %s77, 1
      %p81 = scmp.eq.s32.totalorder %s22, 1
      %p82 = scmp.ne.s32.totalorder %s77, %s79
      %p83 = scmp.eq.s32.totalorder %s22, 0
      %p84 = por %p82, %p83
      %p85 = scmp.ne.s32.totalorder %s77, %s79
      %p86 = scmp.eq.s32.totalorder %s27, 1
      %p87 = por %p85, %p86
      %p88 = scmp.ne.s32.totalorder %s79, %s80
      %p89 = scmp.eq.s32.totalorder %s27, 0
      %p90 = por %p88, %p89
      %p91 = scmp.ne.s32.totalorder %s79, %s80
      %p92 = scmp.eq.s32.totalorder %s28, 1
      %p93 = por %p91, %p92
      %p95 = scmp.ne.s32.totalorder %s80, %s94
      %p96 = scmp.eq.s32.totalorder %s28, 0
      %p97 = por %p95, %p96
      %s99 = sadd.s32 %s98, 1
      %p102 = scmp.eq.s32.totalorder %s22, 1
      %p103 = scmp.ne.s32.totalorder %s98, %s100
      %p104 = scmp.eq.s32.totalorder %s22, 0
      %p105 = por %p103, %p104
      %p106 = scmp.ne.s32.totalorder %s98, %s100
      %p107 = scmp.eq.s32.totalorder %s27, 1
      %p108 = por %p106, %p107
      %p109 = scmp.ne.s32.totalorder %s100, %s101
      %p110 = scmp.eq.s32.totalorder %s27, 0
      %p111 = por %p109, %p110
      %p112 = scmp.ne.s32.totalorder %s100, %s101
      %p113 = scmp.eq.s32.totalorder %s28, 1
      %p114 = por %p112, %p113
      %p116 = scmp.ne.s32.totalorder %s101, %s115
      %p117 = scmp.eq.s32.totalorder %s28, 0
      %p118 = por %p116, %p117
      %s120 = sadd.s32 %s119, 1
      %p123 = scmp.eq.s32.totalorder %s22, 1
      %p124 = scmp.ne.s32.totalorder %s119, %s121
      %p125 = scmp.eq.s32.totalorder %s22, 0
      %p126 = por %p124, %p125
      %p127 = scmp.ne.s32.totalorder %s119, %s121
      %p128 = scmp.eq.s32.totalorder %s27, 1
      %p129 = por %p127, %p128
      %p130 = scmp.ne.s32.totalorder %s121, %s122
      %p131 = scmp.eq.s32.totalorder %s27, 0
      %p132 = por %p130, %p131
      %p133 = scmp.ne.s32.totalorder %s121, %s122
      %p134 = scmp.eq.s32.totalorder %s28, 1
      %p135 = por %p133, %p134
      %p137 = scmp.ne.s32.totalorder %s122, %s136
      %p138 = scmp.eq.s32.totalorder %s28, 0
      %p139 = por %p137, %p138
      %s141 = sadd.s32 %s140, 1
      %p144 = scmp.eq.s32.totalorder %s22, 1
      %p145 = scmp.ne.s32.totalorder %s140, %s142
      %p146 = scmp.eq.s32.totalorder %s22, 0
      %p147 = por %p145, %p146
      %p148 = scmp.ne.s32.totalorder %s140, %s142
      %p149 = scmp.eq.s32.totalorder %s27, 1
      %p150 = por %p148, %p149
      %p151 = scmp.ne.s32.totalorder %s142, %s143
      %p152 = scmp.eq.s32.totalorder %s27, 0
      %p153 = por %p151, %p152
      %p154 = scmp.ne.s32.totalorder %s142, %s143
      %p155 = scmp.eq.s32.totalorder %s28, 1
      %p156 = por %p154, %p155
      %p158 = scmp.ne.s32.totalorder %s143, %s157
      %p159 = scmp.eq.s32.totalorder %s28, 0
      %p160 = por %p158, %p159
      %s162 = sadd.s32 %s161, 1
      %p165 = scmp.eq.s32.totalorder %s22, 1
      %p166 = scmp.ne.s32.totalorder %s161, %s163
      %p167 = scmp.eq.s32.totalorder %s22, 0
      %p168 = por %p166, %p167
      %p169 = scmp.ne.s32.totalorder %s161, %s163
      %p170 = scmp.eq.s32.totalorder %s27, 1
      %p171 = por %p169, %p170
      %p172 = scmp.ne.s32.totalorder %s163, %s164
      %p173 = scmp.eq.s32.totalorder %s27, 0
      %p174 = por %p172, %p173
      %p175 = scmp.ne.s32.totalorder %s163, %s164
      %p176 = scmp.eq.s32.totalorder %s28, 1
      %p177 = por %p175, %p176
      %p179 = scmp.ne.s32.totalorder %s164, %s178
      %p180 = scmp.eq.s32.totalorder %s28, 0
      %p181 = por %p179, %p180
      %s182 = ssub.s32 %s22, %s29
      %p183 = scmp.eq.s32.totalorder %s182, 0
      %s185 = sadd.s32 %s184, 1
      %s186 = scalar_select %p183, %s184, %s185
      %p189 = pneg %p183
      %p190 = scmp.eq.s32.totalorder %s22, 1
      %p191 = por %p189, %p190
      %p192 = scmp.ne.s32.totalorder %s184, %s187
      %p193 = scmp.eq.s32.totalorder %s22, 0
      %p194 = por %p192, %p193
      %p195 = scmp.ne.s32.totalorder %s184, %s187
      %p196 = scmp.eq.s32.totalorder %s27, 1
      %p197 = por %p195, %p196
      %p198 = scmp.ne.s32.totalorder %s187, %s188
      %p199 = scmp.eq.s32.totalorder %s27, 0
      %p200 = por %p198, %p199
      %p201 = scmp.ne.s32.totalorder %s187, %s188
      %p202 = scmp.eq.s32.totalorder %s28, 1
      %p203 = por %p201, %p202
      %p205 = scmp.ne.s32.totalorder %s188, %s204
      %p206 = scmp.eq.s32.totalorder %s28, 0
      %p207 = por %p205, %p206
      %p208 = scmp.le.s32.totalorder 1, %s22
      %p209 = scmp.lt.s32.totalorder %s22, 3
      %p210 = pnand %p208, %p209
      %p211 = pneg %p210
      // Predicated region
      $region9: #{tpu_custom_call.1} parent=5 // pred_check
        _
      $region10: #{tpu_custom_call.1} parent=5 // pred_check_branch
        %213 = sbr.rel (%p210) target = $region12
      $region11: #{tpu_custom_call.1} parent=5 // pred_region
        %s214 = ssub.s32 %s22, 1
        // Predicated region
        $region13: #{tpu_custom_call.1} parent=11 // pred_check
          %p215 = pneg %p69
        $region14: #{tpu_custom_call.1} parent=11 // pred_check_branch
          %217 = sbr.rel (%p215) target = $region16
        $region15: #{tpu_custom_call.1} parent=11 // pred_region
          %s219 = ssub.s32 12288, 12288
          %220 = vsyncadd [#allocation6], %s219
          %s221 = sshll.u32 [#allocation5], 4
          %s222 = int_to_ptr.vmem [resolvable:$true] %s221
          %227 = dma.hbm_to_vmem [thread:$0]  %s1, 12288, %s222, [#allocation6], 384, 384, 24
        $region16: #{tpu_custom_call.1} parent=11 // pred_fallthru
          _
        // Predicated region
        $region17: #{tpu_custom_call.1} parent=11 // pred_check
          %p228 = pneg %p90
        $region18: #{tpu_custom_call.1} parent=11 // pred_check_branch
          %230 = sbr.rel (%p228) target = $region20
        $region19: #{tpu_custom_call.1} parent=11 // pred_region
          %s232 = ssub.s32 4096, 4096
          %233 = vsyncadd [#allocation6], %s232
          %s234 = sshll.u32 [#allocation7], 4
          %s235 = int_to_ptr.vmem [resolvable:$true] %s234
          %240 = dma.hbm_to_vmem [thread:$0]  %s2, 4096, %s235, [#allocation6], 128, 128, 8
        $region20: #{tpu_custom_call.1} parent=11 // pred_fallthru
          _
        // Predicated region
        $region21: #{tpu_custom_call.1} parent=11 // pred_check
          %p241 = pneg %p111
        $region22: #{tpu_custom_call.1} parent=11 // pred_check_branch
          %243 = sbr.rel (%p241) target = $region24
        $region23: #{tpu_custom_call.1} parent=11 // pred_region
          %s245 = ssub.s32 8192, 8192
          %246 = vsyncadd [#allocation9], %s245
          %s247 = sshll.u32 [#allocation8], 4
          %s248 = int_to_ptr.vmem [resolvable:$true] %s247
          %253 = dma.hbm_to_vmem [thread:$0]  %s3, 8192, %s248, [#allocation9], 256, 256, 16
        $region24: #{tpu_custom_call.1} parent=11 // pred_fallthru
          _
        // Predicated region
        $region25: #{tpu_custom_call.1} parent=11 // pred_check
          %p254 = pneg %p132
        $region26: #{tpu_custom_call.1} parent=11 // pred_check_branch
          %256 = sbr.rel (%p254) target = $region28
        $region27: #{tpu_custom_call.1} parent=11 // pred_region
          %s258 = ssub.s32 8192, 8192
          %259 = vsyncadd [#allocation9], %s258
          %s260 = sshll.u32 [#allocation10], 4
          %s261 = int_to_ptr.vmem [resolvable:$true] %s260
          %266 = dma.hbm_to_vmem [thread:$0]  %s4, 8192, %s261, [#allocation9], 128, 128, 8
        $region28: #{tpu_custom_call.1} parent=11 // pred_fallthru
          _
        // Predicated region
        $region29: #{tpu_custom_call.1} parent=11 // pred_check
          %p267 = pneg %p153
        $region30: #{tpu_custom_call.1} parent=11 // pred_check_branch
          %269 = sbr.rel (%p267) target = $region32
        $region31: #{tpu_custom_call.1} parent=11 // pred_region
          %s271 = ssub.s32 512, 512
          %272 = vsyncadd [#allocation12], %s271
          %s273 = sshll.u32 [#allocation11], 4
          %s274 = int_to_ptr.vmem [resolvable:$true] %s273
          %279 = dma.hbm_to_vmem [thread:$0]  %s5, 512, %s274, [#allocation12], 256, 256, 16
        $region32: #{tpu_custom_call.1} parent=11 // pred_fallthru
          _
        // Predicated region
        $region33: #{tpu_custom_call.1} parent=11 // pred_check
          %p280 = pneg %p174
        $region34: #{tpu_custom_call.1} parent=11 // pred_check_branch
          %282 = sbr.rel (%p280) target = $region36
        $region35: #{tpu_custom_call.1} parent=11 // pred_region
          _
        $region36: #{tpu_custom_call.1} parent=11 // pred_fallthru
          _
      $region12: #{tpu_custom_call.1} parent=5 // pred_fallthru
        _
      %p283 = scmp.lt.s32.totalorder %s22, 2
      // Predicated region
      $region37: #{tpu_custom_call.1} parent=5 // pred_check
        %p284 = pneg %p283
      $region38: #{tpu_custom_call.1} parent=5 // pred_check_branch
        %286 = sbr.rel (%p284) target = $region40
      $region39: #{tpu_custom_call.1} parent=5 // pred_region
        // Predicated region
        $region41: #{tpu_custom_call.1} parent=39 // pred_check
          %p287 = pneg %p42
        $region42: #{tpu_custom_call.1} parent=39 // pred_check_branch
          %289 = sbr.rel (%p287) target = $region44
        $region43: #{tpu_custom_call.1} parent=39 // pred_region
          %s290 = sand.u32 %s32, 1
          %s291 = scalar_lea.sflag [#allocation3], %s290
          %s292 = sand.u32 %s32, 1
          %s293 = smul.addr %s292, 32
          %s294 = scalar_lea.vmem [#allocation2], %s293
          %s296 = ssub.s32 512, 512
          %297 = vsyncadd %s291, %s296
          %s298 = smul.addr %s22, 4
          %s299 = smul.addr %s298, 128
          %s300 = scalar_lea.hbm %s0, %s299
          %s301 = sshll.u32 %s294, 4
          %s302 = int_to_ptr.vmem [resolvable:$true] %s301
          %307 = dma.hbm_to_vmem [thread:$0]  %s300, 512, %s302, %s291, 256, 256, 16
        $region44: #{tpu_custom_call.1} parent=39 // pred_fallthru
          _
      $region40: #{tpu_custom_call.1} parent=5 // pred_fallthru
        _
      %p308 = scmp.le.s32.totalorder 1, %s22
      %p309 = scmp.lt.s32.totalorder %s22, 3
      %p310 = pnand %p308, %p309
      %p311 = pneg %p310
      // Predicated region
      $region45: #{tpu_custom_call.1} parent=5 // pred_check
        _
      $region46: #{tpu_custom_call.1} parent=5 // pred_check_branch
        %313 = sbr.rel (%p310) target = $region48
      $region47: #{tpu_custom_call.1} parent=5 // pred_region
        %s314 = ssub.s32 %s22, 1
        %s315 = sand.u32 %s35, 1
        %s316 = scalar_lea.sflag [#allocation3], %s315
        %s317 = sand.u32 %s35, 1
        %s318 = smul.addr %s317, 32
        %s319 = scalar_lea.vmem [#allocation2], %s318
        // Predicated region
        $region49: #{tpu_custom_call.1} parent=47 // pred_check
          %p320 = pneg %p48
        $region50: #{tpu_custom_call.1} parent=47 // pred_check_branch
          %322 = sbr.rel (%p320) target = $region52
        $region51: #{tpu_custom_call.1} parent=47 // pred_region
          %323 = dma.done %s316, 512
        $region52: #{tpu_custom_call.1} parent=47 // pred_fallthru
          _
        // Predicated region
        $region53: #{tpu_custom_call.1} parent=47 // pred_check
          %p324 = pneg %p69
        $region54: #{tpu_custom_call.1} parent=47 // pred_check_branch
          %326 = sbr.rel (%p324) target = $region56
        $region55: #{tpu_custom_call.1} parent=47 // pred_region
          %327 = dma.done [#allocation6], 12288
        $region56: #{tpu_custom_call.1} parent=47 // pred_fallthru
          _
        // Predicated region
        $region57: #{tpu_custom_call.1} parent=47 // pred_check
          %p328 = pneg %p90
        $region58: #{tpu_custom_call.1} parent=47 // pred_check_branch
          %330 = sbr.rel (%p328) target = $region60
        $region59: #{tpu_custom_call.1} parent=47 // pred_region
          %331 = dma.done [#allocation6], 4096
        $region60: #{tpu_custom_call.1} parent=47 // pred_fallthru
          _
        // Predicated region
        $region61: #{tpu_custom_call.1} parent=47 // pred_check
          %p332 = pneg %p111
        $region62: #{tpu_custom_call.1} parent=47 // pred_check_branch
          %334 = sbr.rel (%p332) target = $region64
        $region63: #{tpu_custom_call.1} parent=47 // pred_region
          %335 = dma.done [#allocation9], 8192
        $region64: #{tpu_custom_call.1} parent=47 // pred_fallthru
          _
        // Predicated region
        $region65: #{tpu_custom_call.1} parent=47 // pred_check
          %p336 = pneg %p132
        $region66: #{tpu_custom_call.1} parent=47 // pred_check_branch
          %338 = sbr.rel (%p336) target = $region68
        $region67: #{tpu_custom_call.1} parent=47 // pred_region
          %339 = dma.done [#allocation9], 8192
        $region68: #{tpu_custom_call.1} parent=47 // pred_fallthru
          _
        // Predicated region
        $region69: #{tpu_custom_call.1} parent=47 // pred_check
          %p340 = pneg %p153
        $region70: #{tpu_custom_call.1} parent=47 // pred_check_branch
          %342 = sbr.rel (%p340) target = $region72
        $region71: #{tpu_custom_call.1} parent=47 // pred_region
          %343 = dma.done [#allocation12], 512
        $region72: #{tpu_custom_call.1} parent=47 // pred_fallthru
          _
        %s344 = sand.u32 %s35, 1
        %s345 = scalar_lea.sflag [#allocation3], %s344
        %s346 = sand.u32 %s35, 1
        %s347 = smul.addr %s346, 32
        %s348 = scalar_lea.vmem [#allocation2], %s347
        %p349 = pneg %p48
        %p350 = pneg %p45
        %p351 = pneg %p69
        %p352 = pneg %p66
        %p353 = pneg %p90
        %p354 = pneg %p87
        %p355 = pneg %p111
        %p356 = pneg %p108
        %p357 = pneg %p132
        %p358 = pneg %p129
        %p359 = pneg %p153
        %p360 = pneg %p150
        %p361 = pneg %p174
        %p362 = pneg %p171
        %p363 = pneg %p200
        %p364 = pneg %p197
        %s365 = sand.u32 %s187, 1
        %s366 = scalar_lea.sflag [#allocation4], %s365
        %s367 = sand.u32 %s187, 1
        %s368 = smul.addr %s367, 32
        %s369 = scalar_lea.vmem [#allocation13], %s368
        %v371 = vld [vmem:[#allocation11] ss:$8 sm:$0x3]
        %s372 = scalar_lea.vmem [#allocation11], 1
        %v373 = vld [vmem:[%s372] ss:$8 sm:$0x3]
        %s374 = scalar_lea.vmem [#allocation11], 2
        %v375 = vld [vmem:[%s374] ss:$8 sm:$0x3]
        %s376 = scalar_lea.vmem [#allocation11], 3
        %v377 = vld [vmem:[%s376] ss:$8 sm:$0x3]
        %s378 = scalar_lea.vmem [#allocation11], 4
        %v379 = vld [vmem:[%s378] ss:$8 sm:$0x3]
        %s380 = scalar_lea.vmem [#allocation11], 5
        %v381 = vld [vmem:[%s380] ss:$8 sm:$0x3]
        %s382 = scalar_lea.vmem [#allocation11], 6
        %v383 = vld [vmem:[%s382] ss:$8 sm:$0x3]
        %s384 = scalar_lea.vmem [#allocation11], 7
        %v385 = vld [vmem:[%s384] ss:$8 sm:$0x3]
        %s386 = scalar_lea.vmem [#allocation11], 16
        %v387 = vld [vmem:[%s386] ss:$8 sm:$0x3]
        %v388 = vld [vmem:[%s319] sm:$0xff]
        %v389 = vld [vmem:[%s319 + $0x8] sm:$0xff]
        %v390 = vld [vmem:[%s319 + $0x10] sm:$0xff]
        %v391 = vld [vmem:[%s319 + $0x18] sm:$0xff]
        %v392 = vadd.f32 %v388, %v389
        %393 = vadd.xlane.f32.xlu0 %v392
        %v394 = vpop.xlane.xlu0 %393
        %v395 = vadd.f32 %v390, %v391
        %396 = vadd.xlane.f32.xlu0 %v395
        %v397 = vpop.xlane.xlu0 %396
        %v398 = vrcp.pop 256.0
        %v399 = vmul.f32 %v394, %v398
        %v400 = vmul.f32 %v397, %v398
        %v401 = vsub.f32 %v388, %v399
        %v402 = vsub.f32 %v389, %v399
        %v403 = vsub.f32 %v390, %v400
        %v404 = vsub.f32 %v391, %v400
        %v405 = vmul.f32 %v401, %v401
        %v406 = vmul.f32 %v402, %v402
        %v407 = vmul.f32 %v403, %v403
        %v408 = vmul.f32 %v404, %v404
        %v409 = vadd.f32 %v405, %v406
        %410 = vadd.xlane.f32.xlu0 %v409
        %v411 = vpop.xlane.xlu0 %410
        %v412 = vadd.f32 %v407, %v408
        %413 = vadd.xlane.f32.xlu0 %v412
        %v414 = vpop.xlane.xlu0 %413
        %v415 = vmul.f32 %v411, %v398
        %v416 = vmul.f32 %v414, %v398
        %v417 = vadd.f32 %v415, 1e-06
        %v418 = vadd.f32 %v416, 1e-06
        %v419 = vrsqrt.pop %v417
        %v420 = vrsqrt.pop %v418
        %v421 = vmul.f32 %v401, %v419
        %v422 = vmul.f32 %v402, %v419
        %v423 = vmul.f32 %v403, %v420
        %v424 = vmul.f32 %v404, %v420
        %v426 = vlaneseq
        %v427 = vshrl.u32 %v426, 7
        %v428 = vsub.s32 0, %v427
        %v429 = vrot.slane %v379, %v428
        %v430 = vlaneseq
        %v431 = vshrl.u32 %v430, 7
        %v432 = vsub.s32 1, %v431
        %v433 = vrot.slane %v379, %v432
        %v436 = vmul.f32 %v421, %v429
        %v437 = vmul.f32 %v422, %v433
        %v438 = vmul.f32 %v423, %v429
        %v439 = vmul.f32 %v424, %v433
        %v441 = vlaneseq
        %v442 = vshrl.u32 %v441, 7
        %v443 = vsub.s32 0, %v442
        %v444 = vrot.slane %v381, %v443
        %v445 = vlaneseq
        %v446 = vshrl.u32 %v445, 7
        %v447 = vsub.s32 1, %v446
        %v448 = vrot.slane %v381, %v447
        %v451 = vadd.f32 %v436, %v444
        %v452 = vadd.f32 %v437, %v448
        %v453 = vadd.f32 %v438, %v444
        %v454 = vadd.f32 %v439, %v448
        %v455 = vpack.c.bf16 %v453, %v451
        %v456 = vpack.c.bf16 %v454, %v452
        %v457 = vld [vmem:[#allocation5] sm:$0xff]
        %v458 = vld [vmem:[#allocation5 + $0x8] sm:$0xff]
        %v459 = vld [vmem:[#allocation5 + $0x10] sm:$0xff]
        %v460 = vld [vmem:[#allocation5 + $0x18] sm:$0xff]
        %v461 = vld [vmem:[#allocation5 + $0x20] sm:$0xff]
        %v462 = vld [vmem:[#allocation5 + $0x28] sm:$0xff]
        %v463 = vld [vmem:[#allocation5 + $0x30] sm:$0xff]
        %v464 = vld [vmem:[#allocation5 + $0x38] sm:$0xff]
        %v465 = vld [vmem:[#allocation5 + $0x40] sm:$0xff]
        %v466 = vld [vmem:[#allocation5 + $0x48] sm:$0xff]
        %v467 = vld [vmem:[#allocation5 + $0x50] sm:$0xff]
        %v468 = vld [vmem:[#allocation5 + $0x58] sm:$0xff]
        %v469 = vld [vmem:[#allocation5 + $0x60] sm:$0xff]
        %v470 = vld [vmem:[#allocation5 + $0x68] sm:$0xff]
        %v471 = vld [vmem:[#allocation5 + $0x70] sm:$0xff]
        %v472 = vld [vmem:[#allocation5 + $0x78] sm:$0xff]
        %v473 = vld [vmem:[#allocation5 + $0x80] sm:$0xff]
        %v474 = vld [vmem:[#allocation5 + $0x88] sm:$0xff]
        %v475 = vld [vmem:[#allocation5 + $0x90] sm:$0xff]
        %v476 = vld [vmem:[#allocation5 + $0x98] sm:$0xff]
        %v477 = vld [vmem:[#allocation5 + $0xa0] sm:$0xff]
        %v478 = vld [vmem:[#allocation5 + $0xa8] sm:$0xff]
        %v479 = vld [vmem:[#allocation5 + $0xb0] sm:$0xff]
        %v480 = vld [vmem:[#allocation5 + $0xb8] sm:$0xff]
        %v481 = vld [vmem:[#allocation5 + $0xc0] sm:$0xff]
        %v482 = vld [vmem:[#allocation5 + $0xc8] sm:$0xff]
        %v483 = vld [vmem:[#allocation5 + $0xd0] sm:$0xff]
        %v484 = vld [vmem:[#allocation5 + $0xd8] sm:$0xff]
        %v485 = vld [vmem:[#allocation5 + $0xe0] sm:$0xff]
        %v486 = vld [vmem:[#allocation5 + $0xe8] sm:$0xff]
        %v487 = vld [vmem:[#allocation5 + $0xf0] sm:$0xff]
        %v488 = vld [vmem:[#allocation5 + $0xf8] sm:$0xff]
        %v489 = vld [vmem:[#allocation5 + $0x100] sm:$0xff]
        %v490 = vld [vmem:[#allocation5 + $0x108] sm:$0xff]
        %v491 = vld [vmem:[#allocation5 + $0x110] sm:$0xff]
        %v492 = vld [vmem:[#allocation5 + $0x118] sm:$0xff]
        %v493 = vld [vmem:[#allocation5 + $0x120] sm:$0xff]
        %v494 = vld [vmem:[#allocation5 + $0x128] sm:$0xff]
        %v495 = vld [vmem:[#allocation5 + $0x130] sm:$0xff]
        %v496 = vld [vmem:[#allocation5 + $0x138] sm:$0xff]
        %v497 = vld [vmem:[#allocation5 + $0x140] sm:$0xff]
        %v498 = vld [vmem:[#allocation5 + $0x148] sm:$0xff]
        %v499 = vld [vmem:[#allocation5 + $0x150] sm:$0xff]
        %v500 = vld [vmem:[#allocation5 + $0x158] sm:$0xff]
        %v501 = vld [vmem:[#allocation5 + $0x160] sm:$0xff]
        %v502 = vld [vmem:[#allocation5 + $0x168] sm:$0xff]
        %v503 = vld [vmem:[#allocation5 + $0x170] sm:$0xff]
        %v504 = vld [vmem:[#allocation5 + $0x178] sm:$0xff]
        %v505 = vld [vmem:[#allocation5 + $0x180] sm:$0xff]
        %v506 = vld [vmem:[#allocation5 + $0x188] sm:$0xff]
        %v507 = vld [vmem:[#allocation5 + $0x190] sm:$0xff]
        %v508 = vld [vmem:[#allocation5 + $0x198] sm:$0xff]
        %v509 = vld [vmem:[#allocation5 + $0x1a0] sm:$0xff]
        %v510 = vld [vmem:[#allocation5 + $0x1a8] sm:$0xff]
        %v511 = vld [vmem:[#allocation5 + $0x1b0] sm:$0xff]
        %v512 = vld [vmem:[#allocation5 + $0x1b8] sm:$0xff]
        %v513 = vld [vmem:[#allocation5 + $0x1c0] sm:$0xff]
        %v514 = vld [vmem:[#allocation5 + $0x1c8] sm:$0xff]
        %v515 = vld [vmem:[#allocation5 + $0x1d0] sm:$0xff]
        %v516 = vld [vmem:[#allocation5 + $0x1d8] sm:$0xff]
        %v517 = vld [vmem:[#allocation5 + $0x1e0] sm:$0xff]
        %v518 = vld [vmem:[#allocation5 + $0x1e8] sm:$0xff]
        %v519 = vld [vmem:[#allocation5 + $0x1f0] sm:$0xff]
        %v520 = vld [vmem:[#allocation5 + $0x1f8] sm:$0xff]
        %v521 = vld [vmem:[#allocation5 + $0x200] sm:$0xff]
        %v522 = vld [vmem:[#allocation5 + $0x208] sm:$0xff]
        %v523 = vld [vmem:[#allocation5 + $0x210] sm:$0xff]
        %v524 = vld [vmem:[#allocation5 + $0x218] sm:$0xff]
        %v525 = vld [vmem:[#allocation5 + $0x220] sm:$0xff]
        %v526 = vld [vmem:[#allocation5 + $0x228] sm:$0xff]
        %v527 = vld [vmem:[#allocation5 + $0x230] sm:$0xff]
        %v528 = vld [vmem:[#allocation5 + $0x238] sm:$0xff]
        %v529 = vld [vmem:[#allocation5 + $0x240] sm:$0xff]
        %v530 = vld [vmem:[#allocation5 + $0x248] sm:$0xff]
        %v531 = vld [vmem:[#allocation5 + $0x250] sm:$0xff]
        %v532 = vld [vmem:[#allocation5 + $0x258] sm:$0xff]
        %v533 = vld [vmem:[#allocation5 + $0x260] sm:$0xff]
        %v534 = vld [vmem:[#allocation5 + $0x268] sm:$0xff]
        %v535 = vld [vmem:[#allocation5 + $0x270] sm:$0xff]
        %v536 = vld [vmem:[#allocation5 + $0x278] sm:$0xff]
        %v537 = vld [vmem:[#allocation5 + $0x280] sm:$0xff]
        %v538 = vld [vmem:[#allocation5 + $0x288] sm:$0xff]
        %v539 = vld [vmem:[#allocation5 + $0x290] sm:$0xff]
        %v540 = vld [vmem:[#allocation5 + $0x298] sm:$0xff]
        %v541 = vld [vmem:[#allocation5 + $0x2a0] sm:$0xff]
        %v542 = vld [vmem:[#allocation5 + $0x2a8] sm:$0xff]
        %v543 = vld [vmem:[#allocation5 + $0x2b0] sm:$0xff]
        %v544 = vld [vmem:[#allocation5 + $0x2b8] sm:$0xff]
        %v545 = vld [vmem:[#allocation5 + $0x2c0] sm:$0xff]
        %v546 = vld [vmem:[#allocation5 + $0x2c8] sm:$0xff]
        %v547 = vld [vmem:[#allocation5 + $0x2d0] sm:$0xff]
        %v548 = vld [vmem:[#allocation5 + $0x2d8] sm:$0xff]
        %v549 = vld [vmem:[#allocation5 + $0x2e0] sm:$0xff]
        %v550 = vld [vmem:[#allocation5 + $0x2e8] sm:$0xff]
        %v551 = vld [vmem:[#allocation5 + $0x2f0] sm:$0xff]
        %v552 = vld [vmem:[#allocation5 + $0x2f8] sm:$0xff]
        %v649 = vunpack.c.l.b16 %v457
        %v650 = vunpack.c.h.b16 %v457
        %v651 = vunpack.c.l.b16 %v458
        %v652 = vunpack.c.h.b16 %v458
        %v653 = vunpack.c.l.b16 %v459
        %v654 = vunpack.c.h.b16 %v459
        %v655 = vunpack.c.l.b16 %v460
        %v656 = vunpack.c.h.b16 %v460
        %v657 = vunpack.c.l.b16 %v461
        %v658 = vunpack.c.h.b16 %v461
        %v659 = vunpack.c.l.b16 %v462
        %v660 = vunpack.c.h.b16 %v462
        %v661 = vunpack.c.l.b16 %v463
        %v662 = vunpack.c.h.b16 %v463
        %v663 = vunpack.c.l.b16 %v464
        %v664 = vunpack.c.h.b16 %v464
        %v665 = vunpack.c.l.b16 %v465
        %v666 = vunpack.c.h.b16 %v465
        %v667 = vunpack.c.l.b16 %v466
        %v668 = vunpack.c.h.b16 %v466
        %v669 = vunpack.c.l.b16 %v467
        %v670 = vunpack.c.h.b16 %v467
        %v671 = vunpack.c.l.b16 %v468
        %v672 = vunpack.c.h.b16 %v468
        %v673 = vunpack.c.l.b16 %v469
        %v674 = vunpack.c.h.b16 %v469
        %v675 = vunpack.c.l.b16 %v470
        %v676 = vunpack.c.h.b16 %v470
        %v677 = vunpack.c.l.b16 %v471
        %v678 = vunpack.c.h.b16 %v471
        %v679 = vunpack.c.l.b16 %v472
        %v680 = vunpack.c.h.b16 %v472
        %v681 = vunpack.c.l.b16 %v473
        %v682 = vunpack.c.h.b16 %v473
        %v683 = vunpack.c.l.b16 %v474
        %v684 = vunpack.c.h.b16 %v474
        %v685 = vunpack.c.l.b16 %v475
        %v686 = vunpack.c.h.b16 %v475
        %v687 = vunpack.c.l.b16 %v476
        %v688 = vunpack.c.h.b16 %v476
        %v689 = vunpack.c.l.b16 %v477
        %v690 = vunpack.c.h.b16 %v477
        %v691 = vunpack.c.l.b16 %v478
        %v692 = vunpack.c.h.b16 %v478
        %v693 = vunpack.c.l.b16 %v479
        %v694 = vunpack.c.h.b16 %v479
        %v695 = vunpack.c.l.b16 %v480
        %v696 = vunpack.c.h.b16 %v480
        %v697 = vunpack.c.l.b16 %v481
        %v698 = vunpack.c.h.b16 %v481
        %v699 = vunpack.c.l.b16 %v482
        %v700 = vunpack.c.h.b16 %v482
        %v701 = vunpack.c.l.b16 %v483
        %v702 = vunpack.c.h.b16 %v483
        %v703 = vunpack.c.l.b16 %v484
        %v704 = vunpack.c.h.b16 %v484
        %v705 = vunpack.c.l.b16 %v485
        %v706 = vunpack.c.h.b16 %v485
        %v707 = vunpack.c.l.b16 %v486
        %v708 = vunpack.c.h.b16 %v486
        %v709 = vunpack.c.l.b16 %v487
        %v710 = vunpack.c.h.b16 %v487
        %v711 = vunpack.c.l.b16 %v488
        %v712 = vunpack.c.h.b16 %v488
        %v713 = vunpack.c.l.b16 %v489
        %v714 = vunpack.c.h.b16 %v489
        %v715 = vunpack.c.l.b16 %v490
        %v716 = vunpack.c.h.b16 %v490
        %v717 = vunpack.c.l.b16 %v491
        %v718 = vunpack.c.h.b16 %v491
        %v719 = vunpack.c.l.b16 %v492
        %v720 = vunpack.c.h.b16 %v492
        %v721 = vunpack.c.l.b16 %v493
        %v722 = vunpack.c.h.b16 %v493
        %v723 = vunpack.c.l.b16 %v494
        %v724 = vunpack.c.h.b16 %v494
        %v725 = vunpack.c.l.b16 %v495
        %v726 = vunpack.c.h.b16 %v495
        %v727 = vunpack.c.l.b16 %v496
        %v728 = vunpack.c.h.b16 %v496
        %v729 = vunpack.c.l.b16 %v497
        %v730 = vunpack.c.h.b16 %v497
        %v731 = vunpack.c.l.b16 %v498
        %v732 = vunpack.c.h.b16 %v498
        %v733 = vunpack.c.l.b16 %v499
        %v734 = vunpack.c.h.b16 %v499
        %v735 = vunpack.c.l.b16 %v500
        %v736 = vunpack.c.h.b16 %v500
        %v737 = vunpack.c.l.b16 %v501
        %v738 = vunpack.c.h.b16 %v501
        %v739 = vunpack.c.l.b16 %v502
        %v740 = vunpack.c.h.b16 %v502
        %v741 = vunpack.c.l.b16 %v503
        %v742 = vunpack.c.h.b16 %v503
        %v743 = vunpack.c.l.b16 %v504
        %v744 = vunpack.c.h.b16 %v504
        %v745 = vunpack.c.l.b16 %v505
        %v746 = vunpack.c.h.b16 %v505
        %v747 = vunpack.c.l.b16 %v506
        %v748 = vunpack.c.h.b16 %v506
        %v749 = vunpack.c.l.b16 %v507
        %v750 = vunpack.c.h.b16 %v507
        %v751 = vunpack.c.l.b16 %v508
        %v752 = vunpack.c.h.b16 %v508
        %v753 = vunpack.c.l.b16 %v509
        %v754 = vunpack.c.h.b16 %v509
        %v755 = vunpack.c.l.b16 %v510
        %v756 = vunpack.c.h.b16 %v510
        %v757 = vunpack.c.l.b16 %v511
        %v758 = vunpack.c.h.b16 %v511
        %v759 = vunpack.c.l.b16 %v512
        %v760 = vunpack.c.h.b16 %v512
        %v761 = vunpack.c.l.b16 %v513
        %v762 = vunpack.c.h.b16 %v513
        %v763 = vunpack.c.l.b16 %v514
        %v764 = vunpack.c.h.b16 %v514
        %v765 = vunpack.c.l.b16 %v515
        %v766 = vunpack.c.h.b16 %v515
        %v767 = vunpack.c.l.b16 %v516
        %v768 = vunpack.c.h.b16 %v516
        %v769 = vunpack.c.l.b16 %v517
        %v770 = vunpack.c.h.b16 %v517
        %v771 = vunpack.c.l.b16 %v518
        %v772 = vunpack.c.h.b16 %v518
        %v773 = vunpack.c.l.b16 %v519
        %v774 = vunpack.c.h.b16 %v519
        %v775 = vunpack.c.l.b16 %v520
        %v776 = vunpack.c.h.b16 %v520
        %v777 = vunpack.c.l.b16 %v521
        %v778 = vunpack.c.h.b16 %v521
        %v779 = vunpack.c.l.b16 %v522
        %v780 = vunpack.c.h.b16 %v522
        %v781 = vunpack.c.l.b16 %v523
        %v782 = vunpack.c.h.b16 %v523
        %v783 = vunpack.c.l.b16 %v524
        %v784 = vunpack.c.h.b16 %v524
        %v785 = vunpack.c.l.b16 %v525
        %v786 = vunpack.c.h.b16 %v525
        %v787 = vunpack.c.l.b16 %v526
        %v788 = vunpack.c.h.b16 %v526
        %v789 = vunpack.c.l.b16 %v527
        %v790 = vunpack.c.h.b16 %v527
        %v791 = vunpack.c.l.b16 %v528
        %v792 = vunpack.c.h.b16 %v528
        %v793 = vunpack.c.l.b16 %v529
        %v794 = vunpack.c.h.b16 %v529
        %v795 = vunpack.c.l.b16 %v530
        %v796 = vunpack.c.h.b16 %v530
        %v797 = vunpack.c.l.b16 %v531
        %v798 = vunpack.c.h.b16 %v531
        %v799 = vunpack.c.l.b16 %v532
        %v800 = vunpack.c.h.b16 %v532
        %v801 = vunpack.c.l.b16 %v533
        %v802 = vunpack.c.h.b16 %v533
        %v803 = vunpack.c.l.b16 %v534
        %v804 = vunpack.c.h.b16 %v534
        %v805 = vunpack.c.l.b16 %v535
        %v806 = vunpack.c.h.b16 %v535
        %v807 = vunpack.c.l.b16 %v536
        %v808 = vunpack.c.h.b16 %v536
        %v809 = vunpack.c.l.b16 %v537
        %v810 = vunpack.c.h.b16 %v537
        %v811 = vunpack.c.l.b16 %v538
        %v812 = vunpack.c.h.b16 %v538
        %v813 = vunpack.c.l.b16 %v539
        %v814 = vunpack.c.h.b16 %v539
        %v815 = vunpack.c.l.b16 %v540
        %v816 = vunpack.c.h.b16 %v540
        %v817 = vunpack.c.l.b16 %v541
        %v818 = vunpack.c.h.b16 %v541
        %v819 = vunpack.c.l.b16 %v542
        %v820 = vunpack.c.h.b16 %v542
        %v821 = vunpack.c.l.b16 %v543
        %v822 = vunpack.c.h.b16 %v543
        %v823 = vunpack.c.l.b16 %v544
        %v824 = vunpack.c.h.b16 %v544
        %v825 = vunpack.c.l.b16 %v545
        %v826 = vunpack.c.h.b16 %v545
        %v827 = vunpack.c.l.b16 %v546
        %v828 = vunpack.c.h.b16 %v546
        %v829 = vunpack.c.l.b16 %v547
        %v830 = vunpack.c.h.b16 %v547
        %v831 = vunpack.c.l.b16 %v548
        %v832 = vunpack.c.h.b16 %v548
        %v833 = vunpack.c.l.b16 %v549
        %v834 = vunpack.c.h.b16 %v549
        %v835 = vunpack.c.l.b16 %v550
        %v836 = vunpack.c.h.b16 %v550
        %v837 = vunpack.c.l.b16 %v551
        %v838 = vunpack.c.h.b16 %v551
        %v839 = vunpack.c.l.b16 %v552
        %v840 = vunpack.c.h.b16 %v552
        %v841 = vpack.c.b16 %v655, %v649
        %v842 = vpack.c.b16 %v656, %v650
        %v843 = vpack.c.b16 %v657, %v651
        %v844 = vpack.c.b16 %v658, %v652
        %v845 = vpack.c.b16 %v659, %v653
        %v846 = vpack.c.b16 %v660, %v654
        %v847 = vpack.c.b16 %v667, %v661
        %v848 = vpack.c.b16 %v668, %v662
        %v849 = vpack.c.b16 %v669, %v663
        %v850 = vpack.c.b16 %v670, %v664
        %v851 = vpack.c.b16 %v671, %v665
        %v852 = vpack.c.b16 %v672, %v666
        %v853 = vpack.c.b16 %v679, %v673
        %v854 = vpack.c.b16 %v680, %v674
        %v855 = vpack.c.b16 %v681, %v675
        %v856 = vpack.c.b16 %v682, %v676
        %v857 = vpack.c.b16 %v683, %v677
        %v858 = vpack.c.b16 %v684, %v678
        %v859 = vpack.c.b16 %v691, %v685
        %v860 = vpack.c.b16 %v692, %v686
        %v861 = vpack.c.b16 %v693, %v687
        %v862 = vpack.c.b16 %v694, %v688
        %v863 = vpack.c.b16 %v695, %v689
        %v864 = vpack.c.b16 %v696, %v690
        %v865 = vpack.c.b16 %v703, %v697
        %v866 = vpack.c.b16 %v704, %v698
        %v867 = vpack.c.b16 %v705, %v699
        %v868 = vpack.c.b16 %v706, %v700
        %v869 = vpack.c.b16 %v707, %v701
        %v870 = vpack.c.b16 %v708, %v702
        %v871 = vpack.c.b16 %v715, %v709
        %v872 = vpack.c.b16 %v716, %v710
        %v873 = vpack.c.b16 %v717, %v711
        %v874 = vpack.c.b16 %v718, %v712
        %v875 = vpack.c.b16 %v719, %v713
        %v876 = vpack.c.b16 %v720, %v714
        %v877 = vpack.c.b16 %v727, %v721
        %v878 = vpack.c.b16 %v728, %v722
        %v879 = vpack.c.b16 %v729, %v723
        %v880 = vpack.c.b16 %v730, %v724
        %v881 = vpack.c.b16 %v731, %v725
        %v882 = vpack.c.b16 %v732, %v726
        %v883 = vpack.c.b16 %v739, %v733
        %v884 = vpack.c.b16 %v740, %v734
        %v885 = vpack.c.b16 %v741, %v735
        %v886 = vpack.c.b16 %v742, %v736
        %v887 = vpack.c.b16 %v743, %v737
        %v888 = vpack.c.b16 %v744, %v738
        %v889 = vpack.c.b16 %v751, %v745
        %v890 = vpack.c.b16 %v752, %v746
        %v891 = vpack.c.b16 %v753, %v747
        %v892 = vpack.c.b16 %v754, %v748
        %v893 = vpack.c.b16 %v755, %v749
        %v894 = vpack.c.b16 %v756, %v750
        %v895 = vpack.c.b16 %v763, %v757
        %v896 = vpack.c.b16 %v764, %v758
        %v897 = vpack.c.b16 %v765, %v759
        %v898 = vpack.c.b16 %v766, %v760
        %v899 = vpack.c.b16 %v767, %v761
        %v900 = vpack.c.b16 %v768, %v762
        %v901 = vpack.c.b16 %v775, %v769
        %v902 = vpack.c.b16 %v776, %v770
        %v903 = vpack.c.b16 %v777, %v771
        %v904 = vpack.c.b16 %v778, %v772
        %v905 = vpack.c.b16 %v779, %v773
        %v906 = vpack.c.b16 %v780, %v774
        %v907 = vpack.c.b16 %v787, %v781
        %v908 = vpack.c.b16 %v788, %v782
        %v909 = vpack.c.b16 %v789, %v783
        %v910 = vpack.c.b16 %v790, %v784
        %v911 = vpack.c.b16 %v791, %v785
        %v912 = vpack.c.b16 %v792, %v786
        %v913 = vpack.c.b16 %v799, %v793
        %v914 = vpack.c.b16 %v800, %v794
        %v915 = vpack.c.b16 %v801, %v795
        %v916 = vpack.c.b16 %v802, %v796
        %v917 = vpack.c.b16 %v803, %v797
        %v918 = vpack.c.b16 %v804, %v798
        %v919 = vpack.c.b16 %v811, %v805
        %v920 = vpack.c.b16 %v812, %v806
        %v921 = vpack.c.b16 %v813, %v807
        %v922 = vpack.c.b16 %v814, %v808
        %v923 = vpack.c.b16 %v815, %v809
        %v924 = vpack.c.b16 %v816, %v810
        %v925 = vpack.c.b16 %v823, %v817
        %v926 = vpack.c.b16 %v824, %v818
        %v927 = vpack.c.b16 %v825, %v819
        %v928 = vpack.c.b16 %v826, %v820
        %v929 = vpack.c.b16 %v827, %v821
        %v930 = vpack.c.b16 %v828, %v822
        %v931 = vpack.c.b16 %v835, %v829
        %v932 = vpack.c.b16 %v836, %v830
        %v933 = vpack.c.b16 %v837, %v831
        %v934 = vpack.c.b16 %v838, %v832
        %v935 = vpack.c.b16 %v839, %v833
        %v936 = vpack.c.b16 %v840, %v834
        %1033 = vmatprep.subr.bf16.mxu0 %v842
        %1034 = vmatpush1.bf16.msra.mxu0 %v841
        %1035 = vmatprep.subr.bf16.mxu0 %v848
        %1036 = vmatpush1.bf16.msra.mxu0 %v847
        %1037 = vmatprep.subr.bf16.mxu0 %v854
        %1038 = vmatpush1.bf16.msra.mxu0 %v853
        %1039 = vmatprep.subr.bf16.mxu0 %v860
        %1040 = vmatpush1.bf16.msra.mxu0 %v859
        %1041 = vmatprep.subr.bf16.mxu0 %v866
        %1042 = vmatpush1.bf16.msra.mxu0 %v865
        %1043 = vmatprep.subr.bf16.mxu0 %v872
        %1044 = vmatpush1.bf16.msra.mxu0 %v871
        %1045 = vmatprep.subr.bf16.mxu0 %v878
        %1046 = vmatpush1.bf16.msra.mxu0 %v877
        %1047 = vmatprep.subr.bf16.mxu0 %v884
        %1048 = vmatpush1.bf16.msra.mxu0 %v883
        %1049 = vmatprep.subr.bf16.mxu0 %v890
        %1050 = vmatpush1.bf16.msra.mxu0 %v889
        %1051 = vmatprep.subr.bf16.mxu0 %v896
        %1052 = vmatpush1.bf16.msra.mxu0 %v895
        %1053 = vmatprep.subr.bf16.mxu0 %v902
        %1054 = vmatpush1.bf16.msra.mxu0 %v901
        %1055 = vmatprep.subr.bf16.mxu0 %v908
        %1056 = vmatpush1.bf16.msra.mxu0 %v907
        %1057 = vmatprep.subr.bf16.mxu0 %v914
        %1058 = vmatpush1.bf16.msra.mxu0 %v913
        %1059 = vmatprep.subr.bf16.mxu0 %v920
        %1060 = vmatpush1.bf16.msra.mxu0 %v919
        %1061 = vmatprep.subr.bf16.mxu0 %v926
        %1062 = vmatpush1.bf16.msra.mxu0 %v925
        %1063 = vmatprep.subr.bf16.mxu0 %v932
        %1064 = vmatpush1.bf16.msra.mxu0 %v931
        %1065 = vmatprep.mubr.bf16.mxu0 %v456
        %1066 = vmatmul.mubr.bf16.gmra.mrb[0].mxu0 %v455
        %v1067 = vpop.f32.mrb[0].mxu0
        %v1068 = vadd.f32 0.0, %v1067
        %v1069 = vpop.f32.mrb[0].mxu0
        %v1070 = vadd.f32 0.0, %v1069
        %v1071 = vpop.f32.mrb[0].mxu0
        %v1072 = vadd.f32 0.0, %v1071
        %v1073 = vpop.f32.mrb[0].mxu0
        %v1074 = vadd.f32 0.0, %v1073
        %1075 = vdwg.mxu0
        %1076 = vmatprep.subr.bf16.mxu0 %v844
        %1077 = vmatpush1.bf16.msra.mxu0 %v843
        %1078 = vmatprep.subr.bf16.mxu0 %v850
        %1079 = vmatpush1.bf16.msra.mxu0 %v849
        %1080 = vmatprep.subr.bf16.mxu0 %v856
        %1081 = vmatpush1.bf16.msra.mxu0 %v855
        %1082 = vmatprep.subr.bf16.mxu0 %v862
        %1083 = vmatpush1.bf16.msra.mxu0 %v861
        %1084 = vmatprep.subr.bf16.mxu0 %v868
        %1085 = vmatpush1.bf16.msra.mxu0 %v867
        %1086 = vmatprep.subr.bf16.mxu0 %v874
        %1087 = vmatpush1.bf16.msra.mxu0 %v873
        %1088 = vmatprep.subr.bf16.mxu0 %v880
        %1089 = vmatpush1.bf16.msra.mxu0 %v879
        %1090 = vmatprep.subr.bf16.mxu0 %v886
        %1091 = vmatpush1.bf16.msra.mxu0 %v885
        %1092 = vmatprep.subr.bf16.mxu0 %v892
        %1093 = vmatpush1.bf16.msra.mxu0 %v891
        %1094 = vmatprep.subr.bf16.mxu0 %v898
        %1095 = vmatpush1.bf16.msra.mxu0 %v897
        %1096 = vmatprep.subr.bf16.mxu0 %v904
        %1097 = vmatpush1.bf16.msra.mxu0 %v903
        %1098 = vmatprep.subr.bf16.mxu0 %v910
        %1099 = vmatpush1.bf16.msra.mxu0 %v909
        %1100 = vmatprep.subr.bf16.mxu0 %v916
        %1101 = vmatpush1.bf16.msra.mxu0 %v915
        %1102 = vmatprep.subr.bf16.mxu0 %v922
        %1103 = vmatpush1.bf16.msra.mxu0 %v921
        %1104 = vmatprep.subr.bf16.mxu0 %v928
        %1105 = vmatpush1.bf16.msra.mxu0 %v927
        %1106 = vmatprep.subr.bf16.mxu0 %v934
        %1107 = vmatpush1.bf16.msra.mxu0 %v933
        %1108 = vmatprep.mubr.bf16.mxu0 %v456
        %1109 = vmatmul.mubr.bf16.gmra.mrb[0].mxu0 %v455
        %v1110 = vpop.f32.mrb[0].mxu0
        %v1111 = vadd.f32 0.0, %v1110
        %v1112 = vpop.f32.mrb[0].mxu0
        %v1113 = vadd.f32 0.0, %v1112
        %v1114 = vpop.f32.mrb[0].mxu0
        %v1115 = vadd.f32 0.0, %v1114
        %v1116 = vpop.f32.mrb[0].mxu0
        %v1117 = vadd.f32 0.0, %v1116
        %1118 = vdwg.mxu0
        %1119 = vmatprep.subr.bf16.mxu0 %v846
        %1120 = vmatpush1.bf16.msra.mxu0 %v845
        %1121 = vmatprep.subr.bf16.mxu0 %v852
        %1122 = vmatpush1.bf16.msra.mxu0 %v851
        %1123 = vmatprep.subr.bf16.mxu0 %v858
        %1124 = vmatpush1.bf16.msra.mxu0 %v857
        %1125 = vmatprep.subr.bf16.mxu0 %v864
        %1126 = vmatpush1.bf16.msra.mxu0 %v863
        %1127 = vmatprep.subr.bf16.mxu0 %v870
        %1128 = vmatpush1.bf16.msra.mxu0 %v869
        %1129 = vmatprep.subr.bf16.mxu0 %v876
        %1130 = vmatpush1.bf16.msra.mxu0 %v875
        %1131 = vmatprep.subr.bf16.mxu0 %v882
        %1132 = vmatpush1.bf16.msra.mxu0 %v881
        %1133 = vmatprep.subr.bf16.mxu0 %v888
        %1134 = vmatpush1.bf16.msra.mxu0 %v887
        %1135 = vmatprep.subr.bf16.mxu0 %v894
        %1136 = vmatpush1.bf16.msra.mxu0 %v893
        %1137 = vmatprep.subr.bf16.mxu0 %v900
        %1138 = vmatpush1.bf16.msra.mxu0 %v899
        %1139 = vmatprep.subr.bf16.mxu0 %v906
        %1140 = vmatpush1.bf16.msra.mxu0 %v905
        %1141 = vmatprep.subr.bf16.mxu0 %v912
        %1142 = vmatpush1.bf16.msra.mxu0 %v911
        %1143 = vmatprep.subr.bf16.mxu0 %v918
        %1144 = vmatpush1.bf16.msra.mxu0 %v917
        %1145 = vmatprep.subr.bf16.mxu0 %v924
        %1146 = vmatpush1.bf16.msra.mxu0 %v923
        %1147 = vmatprep.subr.bf16.mxu0 %v930
        %1148 = vmatpush1.bf16.msra.mxu0 %v929
        %1149 = vmatprep.subr.bf16.mxu0 %v936
        %1150 = vmatpush1.bf16.msra.mxu0 %v935
        %1151 = vmatprep.mubr.bf16.mxu0 %v456
        %1152 = vmatmul.mubr.bf16.gmra.mrb[0].mxu0 %v455
        %v1153 = vpop.f32.mrb[0].mxu0
        %v1154 = vadd.f32 0.0, %v1153
        %v1155 = vpop.f32.mrb[0].mxu0
        %v1156 = vadd.f32 0.0, %v1155
        %v1157 = vpop.f32.mrb[0].mxu0
        %v1158 = vadd.f32 0.0, %v1157
        %v1159 = vpop.f32.mrb[0].mxu0
        %v1160 = vadd.f32 0.0, %v1159
        %1161 = vdwg.mxu0
        %v1163 = vlaneseq
        %v1164 = vshrl.u32 %v1163, 7
        %v1165 = vsub.s32 0, %v1164
        %v1166 = vrot.slane %v371, %v1165
        %v1167 = vlaneseq
        %v1168 = vshrl.u32 %v1167, 7
        %v1169 = vsub.s32 1, %v1168
        %v1170 = vrot.slane %v371, %v1169
        %v1173 = vadd.f32 %v1068, %v1166
        %v1174 = vadd.f32 %v1070, %v1170
        %v1175 = vadd.f32 %v1072, %v1166
        %v1176 = vadd.f32 %v1074, %v1170
        %v1178 = vlaneseq
        %v1179 = vshrl.u32 %v1178, 7
        %v1180 = vsub.s32 0, %v1179
        %v1181 = vrot.slane %v373, %v1180
        %v1182 = vlaneseq
        %v1183 = vshrl.u32 %v1182, 7
        %v1184 = vsub.s32 1, %v1183
        %v1185 = vrot.slane %v373, %v1184
        %v1188 = vadd.f32 %v1111, %v1181
        %v1189 = vadd.f32 %v1113, %v1185
        %v1190 = vadd.f32 %v1115, %v1181
        %v1191 = vadd.f32 %v1117, %v1185
        %v1193 = vlaneseq
        %v1194 = vshrl.u32 %v1193, 7
        %v1195 = vsub.s32 0, %v1194
        %v1196 = vrot.slane %v375, %v1195
        %v1197 = vlaneseq
        %v1198 = vshrl.u32 %v1197, 7
        %v1199 = vsub.s32 1, %v1198
        %v1200 = vrot.slane %v375, %v1199
        %v1203 = vadd.f32 %v1154, %v1196
        %v1204 = vadd.f32 %v1156, %v1200
        %v1205 = vadd.f32 %v1158, %v1196
        %v1206 = vadd.f32 %v1160, %v1200
        %v1207 = vmul.f32 %v1173, 0.088388346
        %v1208 = vmul.f32 %v1174, 0.088388346
        %v1209 = vmul.f32 %v1175, 0.088388346
        %v1210 = vmul.f32 %v1176, 0.088388346
        %v1211 = vpack.c.bf16 %v1209, %v1207
        %v1212 = vpack.c.bf16 %v1190, %v1188
        %v1213 = vpack.c.bf16 %v1205, %v1203
        %1214 = vmatprep.subr.bf16.mxu0 0
        %1215 = vmatpush1.bf16.xpose.msra.mxu0 %v1212
        %1216 = vmatprep.subr.bf16.mxu0 0
        %1217 = vmatpush1.bf16.xpose.msra.mxu0 0
        %1218 = vmatprep.subr.bf16.mxu0 0
        %1219 = vmatpush1.bf16.xpose.msra.mxu0 0
        %1220 = vmatprep.subr.bf16.mxu0 0
        %1221 = vmatpush1.bf16.xpose.msra.mxu0 0
        %1222 = vmatprep.subr.bf16.mxu0 0
        %1223 = vmatpush1.bf16.xpose.msra.mxu0 0
        %1224 = vmatprep.subr.bf16.mxu0 0
        %1225 = vmatpush1.bf16.xpose.msra.mxu0 0
        %1226 = vmatprep.subr.bf16.mxu0 0
        %1227 = vmatpush1.bf16.xpose.msra.mxu0 0
        %1228 = vmatprep.subr.bf16.mxu0 0
        %1229 = vmatpush1.bf16.xpose.msra.mxu0 0
        %1230 = vmatprep.subr.bf16.mxu0 0
        %1231 = vmatpush1.bf16.xpose.msra.mxu0 0
        %1232 = vmatprep.subr.bf16.mxu0 0
        %1233 = vmatpush1.bf16.xpose.msra.mxu0 0
        %1234 = vmatprep.subr.bf16.mxu0 0
        %1235 = vmatpush1.bf16.xpose.msra.mxu0 0
        %1236 = vmatprep.subr.bf16.mxu0 0
        %1237 = vmatpush1.bf16.xpose.msra.mxu0 0
        %1238 = vmatprep.subr.bf16.mxu0 0
        %1239 = vmatpush1.bf16.xpose.msra.mxu0 0
        %1240 = vmatprep.subr.bf16.mxu0 0
        %1241 = vmatpush1.bf16.xpose.msra.mxu0 0
        %1242 = vmatprep.subr.bf16.mxu0 0
        %1243 = vmatpush1.bf16.xpose.msra.mxu0 0
        %1244 = vmatprep.subr.bf16.mxu0 0
        %1245 = vmatpush1.bf16.xpose.msra.mxu0 0
        %1246 = vmatprep.mubr.bf16.mxu0 0
        %1247 = vmatmul.mubr.bf16.gmra.mrb[0].mxu0 %v1211
        %v1248 = vpop.f32.mrb[0].mxu0
        %v1249 = vadd.f32 0.0, %v1248
        %v1250 = vpop.f32.mrb[0].mxu0
        %v1251 = vpop.f32.mrb[0].mxu0
        %v1252 = vadd.f32 0.0, %v1251
        %v1253 = vpop.f32.mrb[0].mxu0
        %1254 = vdwg.mxu0
        %vm1255 = vcmask 130048
        %v1256 = vsel %vm1255, %v1249, -inf
        %1257 = vmax.xlane.f32.xlu0 %v1256
        %v1258 = vpop.xlane.xlu0 %1257
        %v1259 = vsel %vm1255, %v1252, -inf
        %1260 = vmax.xlane.f32.xlu0 %v1259
        %v1261 = vpop.xlane.xlu0 %1260
        %v1262 = vsub.f32 %v1249, %v1258
        %v1263 = vsub.f32 %v1252, %v1261
        %v1264 = vmul.f32 %v1262, 1.442695
        %v1265 = vpow.pop %v1264
        %v1266 = vmul.f32 %v1263, 1.442695
        %v1267 = vpow.pop %v1266
        %v1268 = vsel %vm1255, %v1265, 0.0
        %1269 = vadd.xlane.f32.xlu0 %v1268
        %v1270 = vpop.xlane.xlu0 %1269
        %v1271 = vsel %vm1255, %v1267, 0.0
        %1272 = vadd.xlane.f32.xlu0 %v1271
        %v1273 = vpop.xlane.xlu0 %1272
        %v1274 = vrcp.pop %v1270
        %v1275 = vrcp.pop %v1273
        %v1276 = vmul.f32 %v1265, %v1274
        %v1277 = vmul.f32 %v1267, %v1275
        %v1278 = vpack.c.bf16 %v1277, %v1276
        %v1280 = vsel %vm1255, %v1278, 0
        %1282 = vmatprep.subr.bf16.mxu0 0
        %1283 = vmatpush1.bf16.msra.mxu0 %v1213
        %1284 = vmatprep.subr.bf16.mxu0 0
        %1285 = vmatpush1.bf16.msra.mxu0 0
        %1286 = vmatprep.subr.bf16.mxu0 0
        %1287 = vmatpush1.bf16.msra.mxu0 0
        %1288 = vmatprep.subr.bf16.mxu0 0
        %1289 = vmatpush1.bf16.msra.mxu0 0
        %1290 = vmatprep.subr.bf16.mxu0 0
        %1291 = vmatpush1.bf16.msra.mxu0 0
        %1292 = vmatprep.subr.bf16.mxu0 0
        %1293 = vmatpush1.bf16.msra.mxu0 0
        %1294 = vmatprep.subr.bf16.mxu0 0
        %1295 = vmatpush1.bf16.msra.mxu0 0
        %1296 = vmatprep.subr.bf16.mxu0 0
        %1297 = vmatpush1.bf16.msra.mxu0 0
        %1298 = vmatprep.subr.bf16.mxu0 0
        %1299 = vmatpush1.bf16.msra.mxu0 0
        %1300 = vmatprep.subr.bf16.mxu0 0
        %1301 = vmatpush1.bf16.msra.mxu0 0
        %1302 = vmatprep.subr.bf16.mxu0 0
        %1303 = vmatpush1.bf16.msra.mxu0 0
        %1304 = vmatprep.subr.bf16.mxu0 0
        %1305 = vmatpush1.bf16.msra.mxu0 0
        %1306 = vmatprep.subr.bf16.mxu0 0
        %1307 = vmatpush1.bf16.msra.mxu0 0
        %1308 = vmatprep.subr.bf16.mxu0 0
        %1309 = vmatpush1.bf16.msra.mxu0 0
        %1310 = vmatprep.subr.bf16.mxu0 0
        %1311 = vmatpush1.bf16.msra.mxu0 0
        %1312 = vmatprep.subr.bf16.mxu0 0
        %1313 = vmatpush1.bf16.msra.mxu0 0
        %1314 = vmatprep.mubr.bf16.mxu0 0
        %1315 = vmatmul.mubr.bf16.gmra.mrb[0].mxu0 %v1280
        %v1316 = vpop.f32.mrb[0].mxu0
        %v1317 = vadd.f32 0.0, %v1316
        %v1318 = vpop.f32.mrb[0].mxu0
        %v1319 = vpop.f32.mrb[0].mxu0
        %v1320 = vadd.f32 0.0, %v1319
        %v1321 = vpop.f32.mrb[0].mxu0
        %1322 = vdwg.mxu0
        %v1323 = vpack.c.bf16 %v1210, %v1208
        %v1324 = vpack.c.bf16 %v1191, %v1189
        %v1325 = vpack.c.bf16 %v1206, %v1204
        %1326 = vmatprep.subr.bf16.mxu0 0
        %1327 = vmatpush1.bf16.xpose.msra.mxu0 %v1324
        %1328 = vmatprep.subr.bf16.mxu0 0
        %1329 = vmatpush1.bf16.xpose.msra.mxu0 0
        %1330 = vmatprep.subr.bf16.mxu0 0
        %1331 = vmatpush1.bf16.xpose.msra.mxu0 0
        %1332 = vmatprep.subr.bf16.mxu0 0
        %1333 = vmatpush1.bf16.xpose.msra.mxu0 0
        %1334 = vmatprep.subr.bf16.mxu0 0
        %1335 = vmatpush1.bf16.xpose.msra.mxu0 0
        %1336 = vmatprep.subr.bf16.mxu0 0
        %1337 = vmatpush1.bf16.xpose.msra.mxu0 0
        %1338 = vmatprep.subr.bf16.mxu0 0
        %1339 = vmatpush1.bf16.xpose.msra.mxu0 0
        %1340 = vmatprep.subr.bf16.mxu0 0
        %1341 = vmatpush1.bf16.xpose.msra.mxu0 0
        %1342 = vmatprep.subr.bf16.mxu0 0
        %1343 = vmatpush1.bf16.xpose.msra.mxu0 0
        %1344 = vmatprep.subr.bf16.mxu0 0
        %1345 = vmatpush1.bf16.xpose.msra.mxu0 0
        %1346 = vmatprep.subr.bf16.mxu0 0
        %1347 = vmatpush1.bf16.xpose.msra.mxu0 0
        %1348 = vmatprep.subr.bf16.mxu0 0
        %1349 = vmatpush1.bf16.xpose.msra.mxu0 0
        %1350 = vmatprep.subr.bf16.mxu0 0
        %1351 = vmatpush1.bf16.xpose.msra.mxu0 0
        %1352 = vmatprep.subr.bf16.mxu0 0
        %1353 = vmatpush1.bf16.xpose.msra.mxu0 0
        %1354 = vmatprep.subr.bf16.mxu0 0
        %1355 = vmatpush1.bf16.xpose.msra.mxu0 0
        %1356 = vmatprep.subr.bf16.mxu0 0
        %1357 = vmatpush1.bf16.xpose.msra.mxu0 0
        %1358 = vmatprep.mubr.bf16.mxu0 0
        %1359 = vmatmul.mubr.bf16.gmra.mrb[0].mxu0 %v1323
        %v1360 = vpop.f32.mrb[0].mxu0
        %v1361 = vadd.f32 0.0, %v1360
        %v1362 = vpop.f32.mrb[0].mxu0
        %v1363 = vpop.f32.mrb[0].mxu0
        %v1364 = vadd.f32 0.0, %v1363
        %v1365 = vpop.f32.mrb[0].mxu0
        %1366 = vdwg.mxu0
        %v1367 = vsel %vm1255, %v1361, -inf
        %1368 = vmax.xlane.f32.xlu0 %v1367
        %v1369 = vpop.xlane.xlu0 %1368
        %v1370 = vsel %vm1255, %v1364, -inf
        %1371 = vmax.xlane.f32.xlu0 %v1370
        %v1372 = vpop.xlane.xlu0 %1371
        %v1373 = vsub.f32 %v1361, %v1369
        %v1374 = vsub.f32 %v1364, %v1372
        %v1375 = vmul.f32 %v1373, 1.442695
        %v1376 = vpow.pop %v1375
        %v1377 = vmul.f32 %v1374, 1.442695
        %v1378 = vpow.pop %v1377
        %v1379 = vsel %vm1255, %v1376, 0.0
        %1380 = vadd.xlane.f32.xlu0 %v1379
        %v1381 = vpop.xlane.xlu0 %1380
        %v1382 = vsel %vm1255, %v1378, 0.0
        %1383 = vadd.xlane.f32.xlu0 %v1382
        %v1384 = vpop.xlane.xlu0 %1383
        %v1385 = vrcp.pop %v1381
        %v1386 = vrcp.pop %v1384
        %v1387 = vmul.f32 %v1376, %v1385
        %v1388 = vmul.f32 %v1378, %v1386
        %v1389 = vpack.c.bf16 %v1388, %v1387
        %v1391 = vsel %vm1255, %v1389, 0
        %1393 = vmatprep.subr.bf16.mxu0 0
        %1394 = vmatpush1.bf16.msra.mxu0 %v1325
        %1395 = vmatprep.subr.bf16.mxu0 0
        %1396 = vmatpush1.bf16.msra.mxu0 0
        %1397 = vmatprep.subr.bf16.mxu0 0
        %1398 = vmatpush1.bf16.msra.mxu0 0
        %1399 = vmatprep.subr.bf16.mxu0 0
        %1400 = vmatpush1.bf16.msra.mxu0 0
        %1401 = vmatprep.subr.bf16.mxu0 0
        %1402 = vmatpush1.bf16.msra.mxu0 0
        %1403 = vmatprep.subr.bf16.mxu0 0
        %1404 = vmatpush1.bf16.msra.mxu0 0
        %1405 = vmatprep.subr.bf16.mxu0 0
        %1406 = vmatpush1.bf16.msra.mxu0 0
        %1407 = vmatprep.subr.bf16.mxu0 0
        %1408 = vmatpush1.bf16.msra.mxu0 0
        %1409 = vmatprep.subr.bf16.mxu0 0
        %1410 = vmatpush1.bf16.msra.mxu0 0
        %1411 = vmatprep.subr.bf16.mxu0 0
        %1412 = vmatpush1.bf16.msra.mxu0 0
        %1413 = vmatprep.subr.bf16.mxu0 0
        %1414 = vmatpush1.bf16.msra.mxu0 0
        %1415 = vmatprep.subr.bf16.mxu0 0
        %1416 = vmatpush1.bf16.msra.mxu0 0
        %1417 = vmatprep.subr.bf16.mxu0 0
        %1418 = vmatpush1.bf16.msra.mxu0 0
        %1419 = vmatprep.subr.bf16.mxu0 0
        %1420 = vmatpush1.bf16.msra.mxu0 0
        %1421 = vmatprep.subr.bf16.mxu0 0
        %1422 = vmatpush1.bf16.msra.mxu0 0
        %1423 = vmatprep.subr.bf16.mxu0 0
        %1424 = vmatpush1.bf16.msra.mxu0 0
        %1425 = vmatprep.mubr.bf16.mxu0 0
        %1426 = vmatmul.mubr.bf16.gmra.mrb[0].mxu0 %v1391
        %v1427 = vpop.f32.mrb[0].mxu0
        %v1428 = vadd.f32 0.0, %v1427
        %v1429 = vpop.f32.mrb[0].mxu0
        %v1430 = vpop.f32.mrb[0].mxu0
        %v1431 = vadd.f32 0.0, %v1430
        %v1432 = vpop.f32.mrb[0].mxu0
        %1433 = vdwg.mxu0
        %v1434 = vpack.c.bf16 %v1320, %v1317
        %v1435 = vpack.c.bf16 %v1431, %v1428
        %v1436 = vld [vmem:[#allocation7] sm:$0xff]
        %v1437 = vld [vmem:[#allocation7 + $0x8] sm:$0xff]
        %v1438 = vld [vmem:[#allocation7 + $0x10] sm:$0xff]
        %v1439 = vld [vmem:[#allocation7 + $0x18] sm:$0xff]
        %v1440 = vld [vmem:[#allocation7 + $0x20] sm:$0xff]
        %v1441 = vld [vmem:[#allocation7 + $0x28] sm:$0xff]
        %v1442 = vld [vmem:[#allocation7 + $0x30] sm:$0xff]
        %v1443 = vld [vmem:[#allocation7 + $0x38] sm:$0xff]
        %v1444 = vld [vmem:[#allocation7 + $0x40] sm:$0xff]
        %v1445 = vld [vmem:[#allocation7 + $0x48] sm:$0xff]
        %v1446 = vld [vmem:[#allocation7 + $0x50] sm:$0xff]
        %v1447 = vld [vmem:[#allocation7 + $0x58] sm:$0xff]
        %v1448 = vld [vmem:[#allocation7 + $0x60] sm:$0xff]
        %v1449 = vld [vmem:[#allocation7 + $0x68] sm:$0xff]
        %v1450 = vld [vmem:[#allocation7 + $0x70] sm:$0xff]
        %v1451 = vld [vmem:[#allocation7 + $0x78] sm:$0xff]
        %v1452 = vld [vmem:[#allocation7 + $0x80] sm:$0xff]
        %v1453 = vld [vmem:[#allocation7 + $0x88] sm:$0xff]
        %v1454 = vld [vmem:[#allocation7 + $0x90] sm:$0xff]
        %v1455 = vld [vmem:[#allocation7 + $0x98] sm:$0xff]
        %v1456 = vld [vmem:[#allocation7 + $0xa0] sm:$0xff]
        %v1457 = vld [vmem:[#allocation7 + $0xa8] sm:$0xff]
        %v1458 = vld [vmem:[#allocation7 + $0xb0] sm:$0xff]
        %v1459 = vld [vmem:[#allocation7 + $0xb8] sm:$0xff]
        %v1460 = vld [vmem:[#allocation7 + $0xc0] sm:$0xff]
        %v1461 = vld [vmem:[#allocation7 + $0xc8] sm:$0xff]
        %v1462 = vld [vmem:[#allocation7 + $0xd0] sm:$0xff]
        %v1463 = vld [vmem:[#allocation7 + $0xd8] sm:$0xff]
        %v1464 = vld [vmem:[#allocation7 + $0xe0] sm:$0xff]
        %v1465 = vld [vmem:[#allocation7 + $0xe8] sm:$0xff]
        %v1466 = vld [vmem:[#allocation7 + $0xf0] sm:$0xff]
        %v1467 = vld [vmem:[#allocation7 + $0xf8] sm:$0xff]
        %v1469 = vlaneseq
        %v1470 = vshrl.u32 %v1469, 7
        %v1471 = vsub.s32 0, %v1470
        %v1472 = vrot.slane %v377, %v1471
        %v1473 = vlaneseq
        %v1474 = vshrl.u32 %v1473, 7
        %v1475 = vsub.s32 1, %v1474
        %v1476 = vrot.slane %v377, %v1475
        %v1511 = vunpack.c.l.b16 %v1436
        %v1512 = vunpack.c.h.b16 %v1436
        %v1513 = vunpack.c.l.b16 %v1437
        %v1514 = vunpack.c.h.b16 %v1437
        %v1515 = vunpack.c.l.b16 %v1438
        %v1516 = vunpack.c.h.b16 %v1438
        %v1517 = vunpack.c.l.b16 %v1439
        %v1518 = vunpack.c.h.b16 %v1439
        %v1519 = vunpack.c.l.b16 %v1440
        %v1520 = vunpack.c.h.b16 %v1440
        %v1521 = vunpack.c.l.b16 %v1441
        %v1522 = vunpack.c.h.b16 %v1441
        %v1523 = vunpack.c.l.b16 %v1442
        %v1524 = vunpack.c.h.b16 %v1442
        %v1525 = vunpack.c.l.b16 %v1443
        %v1526 = vunpack.c.h.b16 %v1443
        %v1527 = vunpack.c.l.b16 %v1444
        %v1528 = vunpack.c.h.b16 %v1444
        %v1529 = vunpack.c.l.b16 %v1445
        %v1530 = vunpack.c.h.b16 %v1445
        %v1531 = vunpack.c.l.b16 %v1446
        %v1532 = vunpack.c.h.b16 %v1446
        %v1533 = vunpack.c.l.b16 %v1447
        %v1534 = vunpack.c.h.b16 %v1447
        %v1535 = vunpack.c.l.b16 %v1448
        %v1536 = vunpack.c.h.b16 %v1448
        %v1537 = vunpack.c.l.b16 %v1449
        %v1538 = vunpack.c.h.b16 %v1449
        %v1539 = vunpack.c.l.b16 %v1450
        %v1540 = vunpack.c.h.b16 %v1450
        %v1541 = vunpack.c.l.b16 %v1451
        %v1542 = vunpack.c.h.b16 %v1451
        %v1543 = vunpack.c.l.b16 %v1452
        %v1544 = vunpack.c.h.b16 %v1452
        %v1545 = vunpack.c.l.b16 %v1453
        %v1546 = vunpack.c.h.b16 %v1453
        %v1547 = vunpack.c.l.b16 %v1454
        %v1548 = vunpack.c.h.b16 %v1454
        %v1549 = vunpack.c.l.b16 %v1455
        %v1550 = vunpack.c.h.b16 %v1455
        %v1551 = vunpack.c.l.b16 %v1456
        %v1552 = vunpack.c.h.b16 %v1456
        %v1553 = vunpack.c.l.b16 %v1457
        %v1554 = vunpack.c.h.b16 %v1457
        %v1555 = vunpack.c.l.b16 %v1458
        %v1556 = vunpack.c.h.b16 %v1458
        %v1557 = vunpack.c.l.b16 %v1459
        %v1558 = vunpack.c.h.b16 %v1459
        %v1559 = vunpack.c.l.b16 %v1460
        %v1560 = vunpack.c.h.b16 %v1460
        %v1561 = vunpack.c.l.b16 %v1461
        %v1562 = vunpack.c.h.b16 %v1461
        %v1563 = vunpack.c.l.b16 %v1462
        %v1564 = vunpack.c.h.b16 %v1462
        %v1565 = vunpack.c.l.b16 %v1463
        %v1566 = vunpack.c.h.b16 %v1463
        %v1567 = vunpack.c.l.b16 %v1464
        %v1568 = vunpack.c.h.b16 %v1464
        %v1569 = vunpack.c.l.b16 %v1465
        %v1570 = vunpack.c.h.b16 %v1465
        %v1571 = vunpack.c.l.b16 %v1466
        %v1572 = vunpack.c.h.b16 %v1466
        %v1573 = vunpack.c.l.b16 %v1467
        %v1574 = vunpack.c.h.b16 %v1467
        %v1575 = vpack.c.b16 %v1513, %v1511
        %v1576 = vpack.c.b16 %v1514, %v1512
        %v1577 = vpack.c.b16 %v1517, %v1515
        %v1578 = vpack.c.b16 %v1518, %v1516
        %v1579 = vpack.c.b16 %v1521, %v1519
        %v1580 = vpack.c.b16 %v1522, %v1520
        %v1581 = vpack.c.b16 %v1525, %v1523
        %v1582 = vpack.c.b16 %v1526, %v1524
        %v1583 = vpack.c.b16 %v1529, %v1527
        %v1584 = vpack.c.b16 %v1530, %v1528
        %v1585 = vpack.c.b16 %v1533, %v1531
        %v1586 = vpack.c.b16 %v1534, %v1532
        %v1587 = vpack.c.b16 %v1537, %v1535
        %v1588 = vpack.c.b16 %v1538, %v1536
        %v1589 = vpack.c.b16 %v1541, %v1539
        %v1590 = vpack.c.b16 %v1542, %v1540
        %v1591 = vpack.c.b16 %v1545, %v1543
        %v1592 = vpack.c.b16 %v1546, %v1544
        %v1593 = vpack.c.b16 %v1549, %v1547
        %v1594 = vpack.c.b16 %v1550, %v1548
        %v1595 = vpack.c.b16 %v1553, %v1551
        %v1596 = vpack.c.b16 %v1554, %v1552
        %v1597 = vpack.c.b16 %v1557, %v1555
        %v1598 = vpack.c.b16 %v1558, %v1556
        %v1599 = vpack.c.b16 %v1561, %v1559
        %v1600 = vpack.c.b16 %v1562, %v1560
        %v1601 = vpack.c.b16 %v1565, %v1563
        %v1602 = vpack.c.b16 %v1566, %v1564
        %v1603 = vpack.c.b16 %v1569, %v1567
        %v1604 = vpack.c.b16 %v1570, %v1568
        %v1605 = vpack.c.b16 %v1573, %v1571
        %v1606 = vpack.c.b16 %v1574, %v1572
        %1639 = vmatprep.subr.bf16.mxu0 %v1576
        %1640 = vmatpush1.bf16.msra.mxu0 %v1575
        %1641 = vmatprep.subr.bf16.mxu0 %v1578
        %1642 = vmatpush1.bf16.msra.mxu0 %v1577
        %1643 = vmatprep.subr.bf16.mxu0 %v1580
        %1644 = vmatpush1.bf16.msra.mxu0 %v1579
        %1645 = vmatprep.subr.bf16.mxu0 %v1582
        %1646 = vmatpush1.bf16.msra.mxu0 %v1581
        %1647 = vmatprep.subr.bf16.mxu0 %v1584
        %1648 = vmatpush1.bf16.msra.mxu0 %v1583
        %1649 = vmatprep.subr.bf16.mxu0 %v1586
        %1650 = vmatpush1.bf16.msra.mxu0 %v1585
        %1651 = vmatprep.subr.bf16.mxu0 %v1588
        %1652 = vmatpush1.bf16.msra.mxu0 %v1587
        %1653 = vmatprep.subr.bf16.mxu0 %v1590
        %1654 = vmatpush1.bf16.msra.mxu0 %v1589
        %1655 = vmatprep.subr.bf16.mxu0 %v1592
        %1656 = vmatpush1.bf16.msra.mxu0 %v1591
        %1657 = vmatprep.subr.bf16.mxu0 %v1594
        %1658 = vmatpush1.bf16.msra.mxu0 %v1593
        %1659 = vmatprep.subr.bf16.mxu0 %v1596
        %1660 = vmatpush1.bf16.msra.mxu0 %v1595
        %1661 = vmatprep.subr.bf16.mxu0 %v1598
        %1662 = vmatpush1.bf16.msra.mxu0 %v1597
        %1663 = vmatprep.subr.bf16.mxu0 %v1600
        %1664 = vmatpush1.bf16.msra.mxu0 %v1599
        %1665 = vmatprep.subr.bf16.mxu0 %v1602
        %1666 = vmatpush1.bf16.msra.mxu0 %v1601
        %1667 = vmatprep.subr.bf16.mxu0 %v1604
        %1668 = vmatpush1.bf16.msra.mxu0 %v1603
        %1669 = vmatprep.subr.bf16.mxu0 %v1606
        %1670 = vmatpush1.bf16.msra.mxu0 %v1605
        %1671 = vmatprep.mubr.bf16.mxu0 %v1435
        %1672 = vmatmul.mubr.bf16.gmra.mrb[0].mxu0 %v1434
        %v1673 = vpop.f32.mrb[0].mxu0
        %v1674 = vadd.f32 %v1472, %v1673
        %v1675 = vpop.f32.mrb[0].mxu0
        %v1676 = vadd.f32 %v1476, %v1675
        %v1677 = vpop.f32.mrb[0].mxu0
        %v1678 = vadd.f32 %v1472, %v1677
        %v1679 = vpop.f32.mrb[0].mxu0
        %v1680 = vadd.f32 %v1476, %v1679
        %1681 = vdwg.mxu0
        %v1682 = vadd.f32 %v1674, %v451
        %v1683 = vadd.f32 %v1676, %v452
        %v1684 = vadd.f32 %v1678, %v453
        %v1685 = vadd.f32 %v1680, %v454
        %v1686 = vadd.f32 %v1682, %v1683
        %1687 = vadd.xlane.f32.xlu0 %v1686
        %v1688 = vpop.xlane.xlu0 %1687
        %v1689 = vadd.f32 %v1684, %v1685
        %1690 = vadd.xlane.f32.xlu0 %v1689
        %v1691 = vpop.xlane.xlu0 %1690
        %v1692 = vmul.f32 %v1688, %v398
        %v1693 = vmul.f32 %v1691, %v398
        %v1694 = vsub.f32 %v1682, %v1692
        %v1695 = vsub.f32 %v1683, %v1692
        %v1696 = vsub.f32 %v1684, %v1693
        %v1697 = vsub.f32 %v1685, %v1693
        %v1698 = vmul.f32 %v1694, %v1694
        %v1699 = vmul.f32 %v1695, %v1695
        %v1700 = vmul.f32 %v1696, %v1696
        %v1701 = vmul.f32 %v1697, %v1697
        %v1702 = vadd.f32 %v1698, %v1699
        %1703 = vadd.xlane.f32.xlu0 %v1702
        %v1704 = vpop.xlane.xlu0 %1703
        %v1705 = vadd.f32 %v1700, %v1701
        %1706 = vadd.xlane.f32.xlu0 %v1705
        %v1707 = vpop.xlane.xlu0 %1706
        %v1708 = vmul.f32 %v1704, %v398
        %v1709 = vmul.f32 %v1707, %v398
        %v1710 = vadd.f32 %v1708, 1e-06
        %v1711 = vadd.f32 %v1709, 1e-06
        %v1712 = vrsqrt.pop %v1710
        %v1713 = vrsqrt.pop %v1711
        %v1714 = vmul.f32 %v1694, %v1712
        %v1715 = vmul.f32 %v1695, %v1712
        %v1716 = vmul.f32 %v1696, %v1713
        %v1717 = vmul.f32 %v1697, %v1713
        %v1719 = vlaneseq
        %v1720 = vshrl.u32 %v1719, 7
        %v1721 = vsub.s32 0, %v1720
        %v1722 = vrot.slane %v383, %v1721
        %v1723 = vlaneseq
        %v1724 = vshrl.u32 %v1723, 7
        %v1725 = vsub.s32 1, %v1724
        %v1726 = vrot.slane %v383, %v1725
        %v1729 = vmul.f32 %v1714, %v1722
        %v1730 = vmul.f32 %v1715, %v1726
        %v1731 = vmul.f32 %v1716, %v1722
        %v1732 = vmul.f32 %v1717, %v1726
        %v1734 = vlaneseq
        %v1735 = vshrl.u32 %v1734, 7
        %v1736 = vsub.s32 0, %v1735
        %v1737 = vrot.slane %v385, %v1736
        %v1738 = vlaneseq
        %v1739 = vshrl.u32 %v1738, 7
        %v1740 = vsub.s32 1, %v1739
        %v1741 = vrot.slane %v385, %v1740
        %v1744 = vadd.f32 %v1729, %v1737
        %v1745 = vadd.f32 %v1730, %v1741
        %v1746 = vadd.f32 %v1731, %v1737
        %v1747 = vadd.f32 %v1732, %v1741
        %v1748 = vpack.c.bf16 %v1746, %v1744
        %v1749 = vpack.c.bf16 %v1747, %v1745
        %v1751 = vlaneseq
        %v1752 = vshrl.u32 %v1751, 7
        %v1753 = vsub.s32 0, %v1752
        %v1754 = vrot.slane %v387, %v1753
        %v1755 = vlaneseq
        %v1756 = vshrl.u32 %v1755, 7
        %v1757 = vsub.s32 1, %v1756
        %v1758 = vrot.slane %v387, %v1757
        %v1761 = vadd.f32 %v1682, %v1754
        %v1762 = vadd.f32 %v1683, %v1758
        %v1763 = vadd.f32 %v1684, %v1754
        %v1764 = vadd.f32 %v1685, %v1758
        %v1765 = vld [vmem:[#allocation8] sm:$0xff]
        %v1766 = vld [vmem:[#allocation8 + $0x8] sm:$0xff]
        %v1767 = vld [vmem:[#allocation8 + $0x10] sm:$0xff]
        %v1768 = vld [vmem:[#allocation8 + $0x18] sm:$0xff]
        %v1769 = vld [vmem:[#allocation8 + $0x20] sm:$0xff]
        %v1770 = vld [vmem:[#allocation8 + $0x28] sm:$0xff]
        %v1771 = vld [vmem:[#allocation8 + $0x30] sm:$0xff]
        %v1772 = vld [vmem:[#allocation8 + $0x38] sm:$0xff]
        %v1773 = vld [vmem:[#allocation8 + $0x40] sm:$0xff]
        %v1774 = vld [vmem:[#allocation8 + $0x48] sm:$0xff]
        %v1775 = vld [vmem:[#allocation8 + $0x50] sm:$0xff]
        %v1776 = vld [vmem:[#allocation8 + $0x58] sm:$0xff]
        %v1777 = vld [vmem:[#allocation8 + $0x60] sm:$0xff]
        %v1778 = vld [vmem:[#allocation8 + $0x68] sm:$0xff]
        %v1779 = vld [vmem:[#allocation8 + $0x70] sm:$0xff]
        %v1780 = vld [vmem:[#allocation8 + $0x78] sm:$0xff]
        %v1781 = vld [vmem:[#allocation8 + $0x80] sm:$0xff]
        %v1782 = vld [vmem:[#allocation8 + $0x88] sm:$0xff]
        %v1783 = vld [vmem:[#allocation8 + $0x90] sm:$0xff]
        %v1784 = vld [vmem:[#allocation8 + $0x98] sm:$0xff]
        %v1785 = vld [vmem:[#allocation8 + $0xa0] sm:$0xff]
        %v1786 = vld [vmem:[#allocation8 + $0xa8] sm:$0xff]
        %v1787 = vld [vmem:[#allocation8 + $0xb0] sm:$0xff]
        %v1788 = vld [vmem:[#allocation8 + $0xb8] sm:$0xff]
        %v1789 = vld [vmem:[#allocation8 + $0xc0] sm:$0xff]
        %v1790 = vld [vmem:[#allocation8 + $0xc8] sm:$0xff]
        %v1791 = vld [vmem:[#allocation8 + $0xd0] sm:$0xff]
        %v1792 = vld [vmem:[#allocation8 + $0xd8] sm:$0xff]
        %v1793 = vld [vmem:[#allocation8 + $0xe0] sm:$0xff]
        %v1794 = vld [vmem:[#allocation8 + $0xe8] sm:$0xff]
        %v1795 = vld [vmem:[#allocation8 + $0xf0] sm:$0xff]
        %v1796 = vld [vmem:[#allocation8 + $0xf8] sm:$0xff]
        %v1797 = vld [vmem:[#allocation8 + $0x100] sm:$0xff]
        %v1798 = vld [vmem:[#allocation8 + $0x108] sm:$0xff]
        %v1799 = vld [vmem:[#allocation8 + $0x110] sm:$0xff]
        %v1800 = vld [vmem:[#allocation8 + $0x118] sm:$0xff]
        %v1801 = vld [vmem:[#allocation8 + $0x120] sm:$0xff]
        %v1802 = vld [vmem:[#allocation8 + $0x128] sm:$0xff]
        %v1803 = vld [vmem:[#allocation8 + $0x130] sm:$0xff]
        %v1804 = vld [vmem:[#allocation8 + $0x138] sm:$0xff]
        %v1805 = vld [vmem:[#allocation8 + $0x140] sm:$0xff]
        %v1806 = vld [vmem:[#allocation8 + $0x148] sm:$0xff]
        %v1807 = vld [vmem:[#allocation8 + $0x150] sm:$0xff]
        %v1808 = vld [vmem:[#allocation8 + $0x158] sm:$0xff]
        %v1809 = vld [vmem:[#allocation8 + $0x160] sm:$0xff]
        %v1810 = vld [vmem:[#allocation8 + $0x168] sm:$0xff]
        %v1811 = vld [vmem:[#allocation8 + $0x170] sm:$0xff]
        %v1812 = vld [vmem:[#allocation8 + $0x178] sm:$0xff]
        %v1813 = vld [vmem:[#allocation8 + $0x180] sm:$0xff]
        %v1814 = vld [vmem:[#allocation8 + $0x188] sm:$0xff]
        %v1815 = vld [vmem:[#allocation8 + $0x190] sm:$0xff]
        %v1816 = vld [vmem:[#allocation8 + $0x198] sm:$0xff]
        %v1817 = vld [vmem:[#allocation8 + $0x1a0] sm:$0xff]
        %v1818 = vld [vmem:[#allocation8 + $0x1a8] sm:$0xff]
        %v1819 = vld [vmem:[#allocation8 + $0x1b0] sm:$0xff]
        %v1820 = vld [vmem:[#allocation8 + $0x1b8] sm:$0xff]
        %v1821 = vld [vmem:[#allocation8 + $0x1c0] sm:$0xff]
        %v1822 = vld [vmem:[#allocation8 + $0x1c8] sm:$0xff]
        %v1823 = vld [vmem:[#allocation8 + $0x1d0] sm:$0xff]
        %v1824 = vld [vmem:[#allocation8 + $0x1d8] sm:$0xff]
        %v1825 = vld [vmem:[#allocation8 + $0x1e0] sm:$0xff]
        %v1826 = vld [vmem:[#allocation8 + $0x1e8] sm:$0xff]
        %v1827 = vld [vmem:[#allocation8 + $0x1f0] sm:$0xff]
        %v1828 = vld [vmem:[#allocation8 + $0x1f8] sm:$0xff]
        %v1829 = vld [vmem:[%s6] sm:$0xf]
        %v1831 = vlaneseq
        %v1832 = vshrl.u32 %v1831, 7
        %v1833 = vsub.s32 0, %v1832
        %v1834 = vrot.slane %v1829, %v1833
        %v1835 = vlaneseq
        %v1836 = vshrl.u32 %v1835, 7
        %v1837 = vsub.s32 1, %v1836
        %v1838 = vrot.slane %v1829, %v1837
        %v1839 = vlaneseq
        %v1840 = vshrl.u32 %v1839, 7
        %v1841 = vsub.s32 2, %v1840
        %v1842 = vrot.slane %v1829, %v1841
        %v1843 = vlaneseq
        %v1844 = vshrl.u32 %v1843, 7
        %v1845 = vsub.s32 3, %v1844
        %v1846 = vrot.slane %v1829, %v1845
        %v1915 = vunpack.c.l.b16 %v1765
        %v1916 = vunpack.c.h.b16 %v1765
        %v1917 = vunpack.c.l.b16 %v1766
        %v1918 = vunpack.c.h.b16 %v1766
        %v1919 = vunpack.c.l.b16 %v1767
        %v1920 = vunpack.c.h.b16 %v1767
        %v1921 = vunpack.c.l.b16 %v1768
        %v1922 = vunpack.c.h.b16 %v1768
        %v1923 = vunpack.c.l.b16 %v1769
        %v1924 = vunpack.c.h.b16 %v1769
        %v1925 = vunpack.c.l.b16 %v1770
        %v1926 = vunpack.c.h.b16 %v1770
        %v1927 = vunpack.c.l.b16 %v1771
        %v1928 = vunpack.c.h.b16 %v1771
        %v1929 = vunpack.c.l.b16 %v1772
        %v1930 = vunpack.c.h.b16 %v1772
        %v1931 = vunpack.c.l.b16 %v1773
        %v1932 = vunpack.c.h.b16 %v1773
        %v1933 = vunpack.c.l.b16 %v1774
        %v1934 = vunpack.c.h.b16 %v1774
        %v1935 = vunpack.c.l.b16 %v1775
        %v1936 = vunpack.c.h.b16 %v1775
        %v1937 = vunpack.c.l.b16 %v1776
        %v1938 = vunpack.c.h.b16 %v1776
        %v1939 = vunpack.c.l.b16 %v1777
        %v1940 = vunpack.c.h.b16 %v1777
        %v1941 = vunpack.c.l.b16 %v1778
        %v1942 = vunpack.c.h.b16 %v1778
        %v1943 = vunpack.c.l.b16 %v1779
        %v1944 = vunpack.c.h.b16 %v1779
        %v1945 = vunpack.c.l.b16 %v1780
        %v1946 = vunpack.c.h.b16 %v1780
        %v1947 = vunpack.c.l.b16 %v1781
        %v1948 = vunpack.c.h.b16 %v1781
        %v1949 = vunpack.c.l.b16 %v1782
        %v1950 = vunpack.c.h.b16 %v1782
        %v1951 = vunpack.c.l.b16 %v1783
        %v1952 = vunpack.c.h.b16 %v1783
        %v1953 = vunpack.c.l.b16 %v1784
        %v1954 = vunpack.c.h.b16 %v1784
        %v1955 = vunpack.c.l.b16 %v1785
        %v1956 = vunpack.c.h.b16 %v1785
        %v1957 = vunpack.c.l.b16 %v1786
        %v1958 = vunpack.c.h.b16 %v1786
        %v1959 = vunpack.c.l.b16 %v1787
        %v1960 = vunpack.c.h.b16 %v1787
        %v1961 = vunpack.c.l.b16 %v1788
        %v1962 = vunpack.c.h.b16 %v1788
        %v1963 = vunpack.c.l.b16 %v1789
        %v1964 = vunpack.c.h.b16 %v1789
        %v1965 = vunpack.c.l.b16 %v1790
        %v1966 = vunpack.c.h.b16 %v1790
        %v1967 = vunpack.c.l.b16 %v1791
        %v1968 = vunpack.c.h.b16 %v1791
        %v1969 = vunpack.c.l.b16 %v1792
        %v1970 = vunpack.c.h.b16 %v1792
        %v1971 = vunpack.c.l.b16 %v1793
        %v1972 = vunpack.c.h.b16 %v1793
        %v1973 = vunpack.c.l.b16 %v1794
        %v1974 = vunpack.c.h.b16 %v1794
        %v1975 = vunpack.c.l.b16 %v1795
        %v1976 = vunpack.c.h.b16 %v1795
        %v1977 = vunpack.c.l.b16 %v1796
        %v1978 = vunpack.c.h.b16 %v1796
        %v1979 = vunpack.c.l.b16 %v1797
        %v1980 = vunpack.c.h.b16 %v1797
        %v1981 = vunpack.c.l.b16 %v1798
        %v1982 = vunpack.c.h.b16 %v1798
        %v1983 = vunpack.c.l.b16 %v1799
        %v1984 = vunpack.c.h.b16 %v1799
        %v1985 = vunpack.c.l.b16 %v1800
        %v1986 = vunpack.c.h.b16 %v1800
        %v1987 = vunpack.c.l.b16 %v1801
        %v1988 = vunpack.c.h.b16 %v1801
        %v1989 = vunpack.c.l.b16 %v1802
        %v1990 = vunpack.c.h.b16 %v1802
        %v1991 = vunpack.c.l.b16 %v1803
        %v1992 = vunpack.c.h.b16 %v1803
        %v1993 = vunpack.c.l.b16 %v1804
        %v1994 = vunpack.c.h.b16 %v1804
        %v1995 = vunpack.c.l.b16 %v1805
        %v1996 = vunpack.c.h.b16 %v1805
        %v1997 = vunpack.c.l.b16 %v1806
        %v1998 = vunpack.c.h.b16 %v1806
        %v1999 = vunpack.c.l.b16 %v1807
        %v2000 = vunpack.c.h.b16 %v1807
        %v2001 = vunpack.c.l.b16 %v1808
        %v2002 = vunpack.c.h.b16 %v1808
        %v2003 = vunpack.c.l.b16 %v1809
        %v2004 = vunpack.c.h.b16 %v1809
        %v2005 = vunpack.c.l.b16 %v1810
        %v2006 = vunpack.c.h.b16 %v1810
        %v2007 = vunpack.c.l.b16 %v1811
        %v2008 = vunpack.c.h.b16 %v1811
        %v2009 = vunpack.c.l.b16 %v1812
        %v2010 = vunpack.c.h.b16 %v1812
        %v2011 = vunpack.c.l.b16 %v1813
        %v2012 = vunpack.c.h.b16 %v1813
        %v2013 = vunpack.c.l.b16 %v1814
        %v2014 = vunpack.c.h.b16 %v1814
        %v2015 = vunpack.c.l.b16 %v1815
        %v2016 = vunpack.c.h.b16 %v1815
        %v2017 = vunpack.c.l.b16 %v1816
        %v2018 = vunpack.c.h.b16 %v1816
        %v2019 = vunpack.c.l.b16 %v1817
        %v2020 = vunpack.c.h.b16 %v1817
        %v2021 = vunpack.c.l.b16 %v1818
        %v2022 = vunpack.c.h.b16 %v1818
        %v2023 = vunpack.c.l.b16 %v1819
        %v2024 = vunpack.c.h.b16 %v1819
        %v2025 = vunpack.c.l.b16 %v1820
        %v2026 = vunpack.c.h.b16 %v1820
        %v2027 = vunpack.c.l.b16 %v1821
        %v2028 = vunpack.c.h.b16 %v1821
        %v2029 = vunpack.c.l.b16 %v1822
        %v2030 = vunpack.c.h.b16 %v1822
        %v2031 = vunpack.c.l.b16 %v1823
        %v2032 = vunpack.c.h.b16 %v1823
        %v2033 = vunpack.c.l.b16 %v1824
        %v2034 = vunpack.c.h.b16 %v1824
        %v2035 = vunpack.c.l.b16 %v1825
        %v2036 = vunpack.c.h.b16 %v1825
        %v2037 = vunpack.c.l.b16 %v1826
        %v2038 = vunpack.c.h.b16 %v1826
        %v2039 = vunpack.c.l.b16 %v1827
        %v2040 = vunpack.c.h.b16 %v1827
        %v2041 = vunpack.c.l.b16 %v1828
        %v2042 = vunpack.c.h.b16 %v1828
        %v2043 = vpack.c.b16 %v1919, %v1915
        %v2044 = vpack.c.b16 %v1920, %v1916
        %v2045 = vpack.c.b16 %v1921, %v1917
        %v2046 = vpack.c.b16 %v1922, %v1918
        %v2047 = vpack.c.b16 %v1927, %v1923
        %v2048 = vpack.c.b16 %v1928, %v1924
        %v2049 = vpack.c.b16 %v1929, %v1925
        %v2050 = vpack.c.b16 %v1930, %v1926
        %v2051 = vpack.c.b16 %v1935, %v1931
        %v2052 = vpack.c.b16 %v1936, %v1932
        %v2053 = vpack.c.b16 %v1937, %v1933
        %v2054 = vpack.c.b16 %v1938, %v1934
        %v2055 = vpack.c.b16 %v1943, %v1939
        %v2056 = vpack.c.b16 %v1944, %v1940
        %v2057 = vpack.c.b16 %v1945, %v1941
        %v2058 = vpack.c.b16 %v1946, %v1942
        %v2059 = vpack.c.b16 %v1951, %v1947
        %v2060 = vpack.c.b16 %v1952, %v1948
        %v2061 = vpack.c.b16 %v1953, %v1949
        %v2062 = vpack.c.b16 %v1954, %v1950
        %v2063 = vpack.c.b16 %v1959, %v1955
        %v2064 = vpack.c.b16 %v1960, %v1956
        %v2065 = vpack.c.b16 %v1961, %v1957
        %v2066 = vpack.c.b16 %v1962, %v1958
        %v2067 = vpack.c.b16 %v1967, %v1963
        %v2068 = vpack.c.b16 %v1968, %v1964
        %v2069 = vpack.c.b16 %v1969, %v1965
        %v2070 = vpack.c.b16 %v1970, %v1966
        %v2071 = vpack.c.b16 %v1975, %v1971
        %v2072 = vpack.c.b16 %v1976, %v1972
        %v2073 = vpack.c.b16 %v1977, %v1973
        %v2074 = vpack.c.b16 %v1978, %v1974
        %v2075 = vpack.c.b16 %v1983, %v1979
        %v2076 = vpack.c.b16 %v1984, %v1980
        %v2077 = vpack.c.b16 %v1985, %v1981
        %v2078 = vpack.c.b16 %v1986, %v1982
        %v2079 = vpack.c.b16 %v1991, %v1987
        %v2080 = vpack.c.b16 %v1992, %v1988
        %v2081 = vpack.c.b16 %v1993, %v1989
        %v2082 = vpack.c.b16 %v1994, %v1990
        %v2083 = vpack.c.b16 %v1999, %v1995
        %v2084 = vpack.c.b16 %v2000, %v1996
        %v2085 = vpack.c.b16 %v2001, %v1997
        %v2086 = vpack.c.b16 %v2002, %v1998
        %v2087 = vpack.c.b16 %v2007, %v2003
        %v2088 = vpack.c.b16 %v2008, %v2004
        %v2089 = vpack.c.b16 %v2009, %v2005
        %v2090 = vpack.c.b16 %v2010, %v2006
        %v2091 = vpack.c.b16 %v2015, %v2011
        %v2092 = vpack.c.b16 %v2016, %v2012
        %v2093 = vpack.c.b16 %v2017, %v2013
        %v2094 = vpack.c.b16 %v2018, %v2014
        %v2095 = vpack.c.b16 %v2023, %v2019
        %v2096 = vpack.c.b16 %v2024, %v2020
        %v2097 = vpack.c.b16 %v2025, %v2021
        %v2098 = vpack.c.b16 %v2026, %v2022
        %v2099 = vpack.c.b16 %v2031, %v2027
        %v2100 = vpack.c.b16 %v2032, %v2028
        %v2101 = vpack.c.b16 %v2033, %v2029
        %v2102 = vpack.c.b16 %v2034, %v2030
        %v2103 = vpack.c.b16 %v2039, %v2035
        %v2104 = vpack.c.b16 %v2040, %v2036
        %v2105 = vpack.c.b16 %v2041, %v2037
        %v2106 = vpack.c.b16 %v2042, %v2038
        %2171 = vmatprep.subr.bf16.mxu0 %v2044
        %2172 = vmatpush1.bf16.msra.mxu0 %v2043
        %2173 = vmatprep.subr.bf16.mxu0 %v2048
        %2174 = vmatpush1.bf16.msra.mxu0 %v2047
        %2175 = vmatprep.subr.bf16.mxu0 %v2052
        %2176 = vmatpush1.bf16.msra.mxu0 %v2051
        %2177 = vmatprep.subr.bf16.mxu0 %v2056
        %2178 = vmatpush1.bf16.msra.mxu0 %v2055
        %2179 = vmatprep.subr.bf16.mxu0 %v2060
        %2180 = vmatpush1.bf16.msra.mxu0 %v2059
        %2181 = vmatprep.subr.bf16.mxu0 %v2064
        %2182 = vmatpush1.bf16.msra.mxu0 %v2063
        %2183 = vmatprep.subr.bf16.mxu0 %v2068
        %2184 = vmatpush1.bf16.msra.mxu0 %v2067
        %2185 = vmatprep.subr.bf16.mxu0 %v2072
        %2186 = vmatpush1.bf16.msra.mxu0 %v2071
        %2187 = vmatprep.subr.bf16.mxu0 %v2076
        %2188 = vmatpush1.bf16.msra.mxu0 %v2075
        %2189 = vmatprep.subr.bf16.mxu0 %v2080
        %2190 = vmatpush1.bf16.msra.mxu0 %v2079
        %2191 = vmatprep.subr.bf16.mxu0 %v2084
        %2192 = vmatpush1.bf16.msra.mxu0 %v2083
        %2193 = vmatprep.subr.bf16.mxu0 %v2088
        %2194 = vmatpush1.bf16.msra.mxu0 %v2087
        %2195 = vmatprep.subr.bf16.mxu0 %v2092
        %2196 = vmatpush1.bf16.msra.mxu0 %v2091
        %2197 = vmatprep.subr.bf16.mxu0 %v2096
        %2198 = vmatpush1.bf16.msra.mxu0 %v2095
        %2199 = vmatprep.subr.bf16.mxu0 %v2100
        %2200 = vmatpush1.bf16.msra.mxu0 %v2099
        %2201 = vmatprep.subr.bf16.mxu0 %v2104
        %2202 = vmatpush1.bf16.msra.mxu0 %v2103
        %2203 = vmatprep.mubr.bf16.mxu0 %v1749
        %2204 = vmatmul.mubr.bf16.gmra.mrb[0].mxu0 %v1748
        %v2205 = vpop.f32.mrb[0].mxu0
        %v2206 = vadd.f32 %v1834, %v2205
        %v2207 = vpop.f32.mrb[0].mxu0
        %v2208 = vadd.f32 %v1838, %v2207
        %v2209 = vpop.f32.mrb[0].mxu0
        %v2210 = vadd.f32 %v1834, %v2209
        %v2211 = vpop.f32.mrb[0].mxu0
        %v2212 = vadd.f32 %v1838, %v2211
        %2213 = vdwg.mxu0
        %2214 = vmatprep.subr.bf16.mxu0 %v2046
        %2215 = vmatpush1.bf16.msra.mxu0 %v2045
        %2216 = vmatprep.subr.bf16.mxu0 %v2050
        %2217 = vmatpush1.bf16.msra.mxu0 %v2049
        %2218 = vmatprep.subr.bf16.mxu0 %v2054
        %2219 = vmatpush1.bf16.msra.mxu0 %v2053
        %2220 = vmatprep.subr.bf16.mxu0 %v2058
        %2221 = vmatpush1.bf16.msra.mxu0 %v2057
        %2222 = vmatprep.subr.bf16.mxu0 %v2062
        %2223 = vmatpush1.bf16.msra.mxu0 %v2061
        %2224 = vmatprep.subr.bf16.mxu0 %v2066
        %2225 = vmatpush1.bf16.msra.mxu0 %v2065
        %2226 = vmatprep.subr.bf16.mxu0 %v2070
        %2227 = vmatpush1.bf16.msra.mxu0 %v2069
        %2228 = vmatprep.subr.bf16.mxu0 %v2074
        %2229 = vmatpush1.bf16.msra.mxu0 %v2073
        %2230 = vmatprep.subr.bf16.mxu0 %v2078
        %2231 = vmatpush1.bf16.msra.mxu0 %v2077
        %2232 = vmatprep.subr.bf16.mxu0 %v2082
        %2233 = vmatpush1.bf16.msra.mxu0 %v2081
        %2234 = vmatprep.subr.bf16.mxu0 %v2086
        %2235 = vmatpush1.bf16.msra.mxu0 %v2085
        %2236 = vmatprep.subr.bf16.mxu0 %v2090
        %2237 = vmatpush1.bf16.msra.mxu0 %v2089
        %2238 = vmatprep.subr.bf16.mxu0 %v2094
        %2239 = vmatpush1.bf16.msra.mxu0 %v2093
        %2240 = vmatprep.subr.bf16.mxu0 %v2098
        %2241 = vmatpush1.bf16.msra.mxu0 %v2097
        %2242 = vmatprep.subr.bf16.mxu0 %v2102
        %2243 = vmatpush1.bf16.msra.mxu0 %v2101
        %2244 = vmatprep.subr.bf16.mxu0 %v2106
        %2245 = vmatpush1.bf16.msra.mxu0 %v2105
        %2246 = vmatprep.mubr.bf16.mxu0 %v1749
        %2247 = vmatmul.mubr.bf16.gmra.mrb[0].mxu0 %v1748
        %v2248 = vpop.f32.mrb[0].mxu0
        %v2249 = vadd.f32 %v1842, %v2248
        %v2250 = vpop.f32.mrb[0].mxu0
        %v2251 = vadd.f32 %v1846, %v2250
        %v2252 = vpop.f32.mrb[0].mxu0
        %v2253 = vadd.f32 %v1842, %v2252
        %v2254 = vpop.f32.mrb[0].mxu0
        %v2255 = vadd.f32 %v1846, %v2254
        %2256 = vdwg.mxu0
        %v2257 = vmul.f32 %v2206, 0.5
        %v2258 = vmul.f32 %v2208, 0.5
        %v2259 = vmul.f32 %v2249, 0.5
        %v2260 = vmul.f32 %v2251, 0.5
        %v2261 = vmul.f32 %v2210, 0.5
        %v2262 = vmul.f32 %v2212, 0.5
        %v2263 = vmul.f32 %v2253, 0.5
        %v2264 = vmul.f32 %v2255, 0.5
        %v2265 = vmul.f32 %v2206, %v2206
        %v2266 = vmul.f32 %v2208, %v2208
        %v2267 = vmul.f32 %v2249, %v2249
        %v2268 = vmul.f32 %v2251, %v2251
        %v2269 = vmul.f32 %v2210, %v2210
        %v2270 = vmul.f32 %v2212, %v2212
        %v2271 = vmul.f32 %v2253, %v2253
        %v2272 = vmul.f32 %v2255, %v2255
        %v2273 = vmul.f32 %v2206, %v2265
        %v2274 = vmul.f32 %v2208, %v2266
        %v2275 = vmul.f32 %v2249, %v2267
        %v2276 = vmul.f32 %v2251, %v2268
        %v2277 = vmul.f32 %v2210, %v2269
        %v2278 = vmul.f32 %v2212, %v2270
        %v2279 = vmul.f32 %v2253, %v2271
        %v2280 = vmul.f32 %v2255, %v2272
        %v2281 = vmul.f32 %v2273, 0.044715
        %v2282 = vmul.f32 %v2274, 0.044715
        %v2283 = vmul.f32 %v2275, 0.044715
        %v2284 = vmul.f32 %v2276, 0.044715
        %v2285 = vmul.f32 %v2277, 0.044715
        %v2286 = vmul.f32 %v2278, 0.044715
        %v2287 = vmul.f32 %v2279, 0.044715
        %v2288 = vmul.f32 %v2280, 0.044715
        %v2289 = vadd.f32 %v2206, %v2281
        %v2290 = vadd.f32 %v2208, %v2282
        %v2291 = vadd.f32 %v2249, %v2283
        %v2292 = vadd.f32 %v2251, %v2284
        %v2293 = vadd.f32 %v2210, %v2285
        %v2294 = vadd.f32 %v2212, %v2286
        %v2295 = vadd.f32 %v2253, %v2287
        %v2296 = vadd.f32 %v2255, %v2288
        %v2297 = vmul.f32 %v2289, 0.7978846
        %v2298 = vmul.f32 %v2290, 0.7978846
        %v2299 = vmul.f32 %v2291, 0.7978846
        %v2300 = vmul.f32 %v2292, 0.7978846
        %v2301 = vmul.f32 %v2293, 0.7978846
        %v2302 = vmul.f32 %v2294, 0.7978846
        %v2303 = vmul.f32 %v2295, 0.7978846
        %v2304 = vmul.f32 %v2296, 0.7978846
        %v2305 = vtanh.pop %v2297
        %v2306 = vtanh.pop %v2298
        %v2307 = vtanh.pop %v2299
        %v2308 = vtanh.pop %v2300
        %v2309 = vtanh.pop %v2301
        %v2310 = vtanh.pop %v2302
        %v2311 = vtanh.pop %v2303
        %v2312 = vtanh.pop %v2304
        %v2313 = vadd.f32 %v2305, 1.0
        %v2314 = vadd.f32 %v2306, 1.0
        %v2315 = vadd.f32 %v2307, 1.0
        %v2316 = vadd.f32 %v2308, 1.0
        %v2317 = vadd.f32 %v2309, 1.0
        %v2318 = vadd.f32 %v2310, 1.0
        %v2319 = vadd.f32 %v2311, 1.0
        %v2320 = vadd.f32 %v2312, 1.0
        %v2321 = vmul.f32 %v2257, %v2313
        %v2322 = vmul.f32 %v2258, %v2314
        %v2323 = vmul.f32 %v2259, %v2315
        %v2324 = vmul.f32 %v2260, %v2316
        %v2325 = vmul.f32 %v2261, %v2317
        %v2326 = vmul.f32 %v2262, %v2318
        %v2327 = vmul.f32 %v2263, %v2319
        %v2328 = vmul.f32 %v2264, %v2320
        %v2329 = vpack.c.bf16 %v2325, %v2321
        %v2330 = vpack.c.bf16 %v2326, %v2322
        %v2331 = vpack.c.bf16 %v2327, %v2323
        %v2332 = vpack.c.bf16 %v2328, %v2324
        %v2333 = vld [vmem:[#allocation10] sm:$0xff]
        %v2334 = vld [vmem:[#allocation10 + $0x8] sm:$0xff]
        %v2335 = vld [vmem:[#allocation10 + $0x10] sm:$0xff]
        %v2336 = vld [vmem:[#allocation10 + $0x18] sm:$0xff]
        %v2337 = vld [vmem:[#allocation10 + $0x20] sm:$0xff]
        %v2338 = vld [vmem:[#allocation10 + $0x28] sm:$0xff]
        %v2339 = vld [vmem:[#allocation10 + $0x30] sm:$0xff]
        %v2340 = vld [vmem:[#allocation10 + $0x38] sm:$0xff]
        %v2341 = vld [vmem:[#allocation10 + $0x40] sm:$0xff]
        %v2342 = vld [vmem:[#allocation10 + $0x48] sm:$0xff]
        %v2343 = vld [vmem:[#allocation10 + $0x50] sm:$0xff]
        %v2344 = vld [vmem:[#allocation10 + $0x58] sm:$0xff]
        %v2345 = vld [vmem:[#allocation10 + $0x60] sm:$0xff]
        %v2346 = vld [vmem:[#allocation10 + $0x68] sm:$0xff]
        %v2347 = vld [vmem:[#allocation10 + $0x70] sm:$0xff]
        %v2348 = vld [vmem:[#allocation10 + $0x78] sm:$0xff]
        %v2349 = vld [vmem:[#allocation10 + $0x80] sm:$0xff]
        %v2350 = vld [vmem:[#allocation10 + $0x88] sm:$0xff]
        %v2351 = vld [vmem:[#allocation10 + $0x90] sm:$0xff]
        %v2352 = vld [vmem:[#allocation10 + $0x98] sm:$0xff]
        %v2353 = vld [vmem:[#allocation10 + $0xa0] sm:$0xff]
        %v2354 = vld [vmem:[#allocation10 + $0xa8] sm:$0xff]
        %v2355 = vld [vmem:[#allocation10 + $0xb0] sm:$0xff]
        %v2356 = vld [vmem:[#allocation10 + $0xb8] sm:$0xff]
        %v2357 = vld [vmem:[#allocation10 + $0xc0] sm:$0xff]
        %v2358 = vld [vmem:[#allocation10 + $0xc8] sm:$0xff]
        %v2359 = vld [vmem:[#allocation10 + $0xd0] sm:$0xff]
        %v2360 = vld [vmem:[#allocation10 + $0xd8] sm:$0xff]
        %v2361 = vld [vmem:[#allocation10 + $0xe0] sm:$0xff]
        %v2362 = vld [vmem:[#allocation10 + $0xe8] sm:$0xff]
        %v2363 = vld [vmem:[#allocation10 + $0xf0] sm:$0xff]
        %v2364 = vld [vmem:[#allocation10 + $0xf8] sm:$0xff]
        %v2365 = vld [vmem:[#allocation10 + $0x100] sm:$0xff]
        %v2366 = vld [vmem:[#allocation10 + $0x108] sm:$0xff]
        %v2367 = vld [vmem:[#allocation10 + $0x110] sm:$0xff]
        %v2368 = vld [vmem:[#allocation10 + $0x118] sm:$0xff]
        %v2369 = vld [vmem:[#allocation10 + $0x120] sm:$0xff]
        %v2370 = vld [vmem:[#allocation10 + $0x128] sm:$0xff]
        %v2371 = vld [vmem:[#allocation10 + $0x130] sm:$0xff]
        %v2372 = vld [vmem:[#allocation10 + $0x138] sm:$0xff]
        %v2373 = vld [vmem:[#allocation10 + $0x140] sm:$0xff]
        %v2374 = vld [vmem:[#allocation10 + $0x148] sm:$0xff]
        %v2375 = vld [vmem:[#allocation10 + $0x150] sm:$0xff]
        %v2376 = vld [vmem:[#allocation10 + $0x158] sm:$0xff]
        %v2377 = vld [vmem:[#allocation10 + $0x160] sm:$0xff]
        %v2378 = vld [vmem:[#allocation10 + $0x168] sm:$0xff]
        %v2379 = vld [vmem:[#allocation10 + $0x170] sm:$0xff]
        %v2380 = vld [vmem:[#allocation10 + $0x178] sm:$0xff]
        %v2381 = vld [vmem:[#allocation10 + $0x180] sm:$0xff]
        %v2382 = vld [vmem:[#allocation10 + $0x188] sm:$0xff]
        %v2383 = vld [vmem:[#allocation10 + $0x190] sm:$0xff]
        %v2384 = vld [vmem:[#allocation10 + $0x198] sm:$0xff]
        %v2385 = vld [vmem:[#allocation10 + $0x1a0] sm:$0xff]
        %v2386 = vld [vmem:[#allocation10 + $0x1a8] sm:$0xff]
        %v2387 = vld [vmem:[#allocation10 + $0x1b0] sm:$0xff]
        %v2388 = vld [vmem:[#allocation10 + $0x1b8] sm:$0xff]
        %v2389 = vld [vmem:[#allocation10 + $0x1c0] sm:$0xff]
        %v2390 = vld [vmem:[#allocation10 + $0x1c8] sm:$0xff]
        %v2391 = vld [vmem:[#allocation10 + $0x1d0] sm:$0xff]
        %v2392 = vld [vmem:[#allocation10 + $0x1d8] sm:$0xff]
        %v2393 = vld [vmem:[#allocation10 + $0x1e0] sm:$0xff]
        %v2394 = vld [vmem:[#allocation10 + $0x1e8] sm:$0xff]
        %v2395 = vld [vmem:[#allocation10 + $0x1f0] sm:$0xff]
        %v2396 = vld [vmem:[#allocation10 + $0x1f8] sm:$0xff]
        %v2461 = vunpack.c.l.b16 %v2333
        %v2462 = vunpack.c.h.b16 %v2333
        %v2463 = vunpack.c.l.b16 %v2334
        %v2464 = vunpack.c.h.b16 %v2334
        %v2465 = vunpack.c.l.b16 %v2335
        %v2466 = vunpack.c.h.b16 %v2335
        %v2467 = vunpack.c.l.b16 %v2336
        %v2468 = vunpack.c.h.b16 %v2336
        %v2469 = vunpack.c.l.b16 %v2337
        %v2470 = vunpack.c.h.b16 %v2337
        %v2471 = vunpack.c.l.b16 %v2338
        %v2472 = vunpack.c.h.b16 %v2338
        %v2473 = vunpack.c.l.b16 %v2339
        %v2474 = vunpack.c.h.b16 %v2339
        %v2475 = vunpack.c.l.b16 %v2340
        %v2476 = vunpack.c.h.b16 %v2340
        %v2477 = vunpack.c.l.b16 %v2341
        %v2478 = vunpack.c.h.b16 %v2341
        %v2479 = vunpack.c.l.b16 %v2342
        %v2480 = vunpack.c.h.b16 %v2342
        %v2481 = vunpack.c.l.b16 %v2343
        %v2482 = vunpack.c.h.b16 %v2343
        %v2483 = vunpack.c.l.b16 %v2344
        %v2484 = vunpack.c.h.b16 %v2344
        %v2485 = vunpack.c.l.b16 %v2345
        %v2486 = vunpack.c.h.b16 %v2345
        %v2487 = vunpack.c.l.b16 %v2346
        %v2488 = vunpack.c.h.b16 %v2346
        %v2489 = vunpack.c.l.b16 %v2347
        %v2490 = vunpack.c.h.b16 %v2347
        %v2491 = vunpack.c.l.b16 %v2348
        %v2492 = vunpack.c.h.b16 %v2348
        %v2493 = vunpack.c.l.b16 %v2349
        %v2494 = vunpack.c.h.b16 %v2349
        %v2495 = vunpack.c.l.b16 %v2350
        %v2496 = vunpack.c.h.b16 %v2350
        %v2497 = vunpack.c.l.b16 %v2351
        %v2498 = vunpack.c.h.b16 %v2351
        %v2499 = vunpack.c.l.b16 %v2352
        %v2500 = vunpack.c.h.b16 %v2352
        %v2501 = vunpack.c.l.b16 %v2353
        %v2502 = vunpack.c.h.b16 %v2353
        %v2503 = vunpack.c.l.b16 %v2354
        %v2504 = vunpack.c.h.b16 %v2354
        %v2505 = vunpack.c.l.b16 %v2355
        %v2506 = vunpack.c.h.b16 %v2355
        %v2507 = vunpack.c.l.b16 %v2356
        %v2508 = vunpack.c.h.b16 %v2356
        %v2509 = vunpack.c.l.b16 %v2357
        %v2510 = vunpack.c.h.b16 %v2357
        %v2511 = vunpack.c.l.b16 %v2358
        %v2512 = vunpack.c.h.b16 %v2358
        %v2513 = vunpack.c.l.b16 %v2359
        %v2514 = vunpack.c.h.b16 %v2359
        %v2515 = vunpack.c.l.b16 %v2360
        %v2516 = vunpack.c.h.b16 %v2360
        %v2517 = vunpack.c.l.b16 %v2361
        %v2518 = vunpack.c.h.b16 %v2361
        %v2519 = vunpack.c.l.b16 %v2362
        %v2520 = vunpack.c.h.b16 %v2362
        %v2521 = vunpack.c.l.b16 %v2363
        %v2522 = vunpack.c.h.b16 %v2363
        %v2523 = vunpack.c.l.b16 %v2364
        %v2524 = vunpack.c.h.b16 %v2364
        %v2525 = vunpack.c.l.b16 %v2365
        %v2526 = vunpack.c.h.b16 %v2365
        %v2527 = vunpack.c.l.b16 %v2366
        %v2528 = vunpack.c.h.b16 %v2366
        %v2529 = vunpack.c.l.b16 %v2367
        %v2530 = vunpack.c.h.b16 %v2367
        %v2531 = vunpack.c.l.b16 %v2368
        %v2532 = vunpack.c.h.b16 %v2368
        %v2533 = vunpack.c.l.b16 %v2369
        %v2534 = vunpack.c.h.b16 %v2369
        %v2535 = vunpack.c.l.b16 %v2370
        %v2536 = vunpack.c.h.b16 %v2370
        %v2537 = vunpack.c.l.b16 %v2371
        %v2538 = vunpack.c.h.b16 %v2371
        %v2539 = vunpack.c.l.b16 %v2372
        %v2540 = vunpack.c.h.b16 %v2372
        %v2541 = vunpack.c.l.b16 %v2373
        %v2542 = vunpack.c.h.b16 %v2373
        %v2543 = vunpack.c.l.b16 %v2374
        %v2544 = vunpack.c.h.b16 %v2374
        %v2545 = vunpack.c.l.b16 %v2375
        %v2546 = vunpack.c.h.b16 %v2375
        %v2547 = vunpack.c.l.b16 %v2376
        %v2548 = vunpack.c.h.b16 %v2376
        %v2549 = vunpack.c.l.b16 %v2377
        %v2550 = vunpack.c.h.b16 %v2377
        %v2551 = vunpack.c.l.b16 %v2378
        %v2552 = vunpack.c.h.b16 %v2378
        %v2553 = vunpack.c.l.b16 %v2379
        %v2554 = vunpack.c.h.b16 %v2379
        %v2555 = vunpack.c.l.b16 %v2380
        %v2556 = vunpack.c.h.b16 %v2380
        %v2557 = vunpack.c.l.b16 %v2381
        %v2558 = vunpack.c.h.b16 %v2381
        %v2559 = vunpack.c.l.b16 %v2382
        %v2560 = vunpack.c.h.b16 %v2382
        %v2561 = vunpack.c.l.b16 %v2383
        %v2562 = vunpack.c.h.b16 %v2383
        %v2563 = vunpack.c.l.b16 %v2384
        %v2564 = vunpack.c.h.b16 %v2384
        %v2565 = vunpack.c.l.b16 %v2385
        %v2566 = vunpack.c.h.b16 %v2385
        %v2567 = vunpack.c.l.b16 %v2386
        %v2568 = vunpack.c.h.b16 %v2386
        %v2569 = vunpack.c.l.b16 %v2387
        %v2570 = vunpack.c.h.b16 %v2387
        %v2571 = vunpack.c.l.b16 %v2388
        %v2572 = vunpack.c.h.b16 %v2388
        %v2573 = vunpack.c.l.b16 %v2389
        %v2574 = vunpack.c.h.b16 %v2389
        %v2575 = vunpack.c.l.b16 %v2390
        %v2576 = vunpack.c.h.b16 %v2390
        %v2577 = vunpack.c.l.b16 %v2391
        %v2578 = vunpack.c.h.b16 %v2391
        %v2579 = vunpack.c.l.b16 %v2392
        %v2580 = vunpack.c.h.b16 %v2392
        %v2581 = vunpack.c.l.b16 %v2393
        %v2582 = vunpack.c.h.b16 %v2393
        %v2583 = vunpack.c.l.b16 %v2394
        %v2584 = vunpack.c.h.b16 %v2394
        %v2585 = vunpack.c.l.b16 %v2395
        %v2586 = vunpack.c.h.b16 %v2395
        %v2587 = vunpack.c.l.b16 %v2396
        %v2588 = vunpack.c.h.b16 %v2396
        %v2589 = vpack.c.b16 %v2463, %v2461
        %v2590 = vpack.c.b16 %v2464, %v2462
        %v2591 = vpack.c.b16 %v2467, %v2465
        %v2592 = vpack.c.b16 %v2468, %v2466
        %v2593 = vpack.c.b16 %v2471, %v2469
        %v2594 = vpack.c.b16 %v2472, %v2470
        %v2595 = vpack.c.b16 %v2475, %v2473
        %v2596 = vpack.c.b16 %v2476, %v2474
        %v2597 = vpack.c.b16 %v2479, %v2477
        %v2598 = vpack.c.b16 %v2480, %v2478
        %v2599 = vpack.c.b16 %v2483, %v2481
        %v2600 = vpack.c.b16 %v2484, %v2482
        %v2601 = vpack.c.b16 %v2487, %v2485
        %v2602 = vpack.c.b16 %v2488, %v2486
        %v2603 = vpack.c.b16 %v2491, %v2489
        %v2604 = vpack.c.b16 %v2492, %v2490
        %v2605 = vpack.c.b16 %v2495, %v2493
        %v2606 = vpack.c.b16 %v2496, %v2494
        %v2607 = vpack.c.b16 %v2499, %v2497
        %v2608 = vpack.c.b16 %v2500, %v2498
        %v2609 = vpack.c.b16 %v2503, %v2501
        %v2610 = vpack.c.b16 %v2504, %v2502
        %v2611 = vpack.c.b16 %v2507, %v2505
        %v2612 = vpack.c.b16 %v2508, %v2506
        %v2613 = vpack.c.b16 %v2511, %v2509
        %v2614 = vpack.c.b16 %v2512, %v2510
        %v2615 = vpack.c.b16 %v2515, %v2513
        %v2616 = vpack.c.b16 %v2516, %v2514
        %v2617 = vpack.c.b16 %v2519, %v2517
        %v2618 = vpack.c.b16 %v2520, %v2518
        %v2619 = vpack.c.b16 %v2523, %v2521
        %v2620 = vpack.c.b16 %v2524, %v2522
        %v2621 = vpack.c.b16 %v2527, %v2525
        %v2622 = vpack.c.b16 %v2528, %v2526
        %v2623 = vpack.c.b16 %v2531, %v2529
        %v2624 = vpack.c.b16 %v2532, %v2530
        %v2625 = vpack.c.b16 %v2535, %v2533
        %v2626 = vpack.c.b16 %v2536, %v2534
        %v2627 = vpack.c.b16 %v2539, %v2537
        %v2628 = vpack.c.b16 %v2540, %v2538
        %v2629 = vpack.c.b16 %v2543, %v2541
        %v2630 = vpack.c.b16 %v2544, %v2542
        %v2631 = vpack.c.b16 %v2547, %v2545
        %v2632 = vpack.c.b16 %v2548, %v2546
        %v2633 = vpack.c.b16 %v2551, %v2549
        %v2634 = vpack.c.b16 %v2552, %v2550
        %v2635 = vpack.c.b16 %v2555, %v2553
        %v2636 = vpack.c.b16 %v2556, %v2554
        %v2637 = vpack.c.b16 %v2559, %v2557
        %v2638 = vpack.c.b16 %v2560, %v2558
        %v2639 = vpack.c.b16 %v2563, %v2561
        %v2640 = vpack.c.b16 %v2564, %v2562
        %v2641 = vpack.c.b16 %v2567, %v2565
        %v2642 = vpack.c.b16 %v2568, %v2566
        %v2643 = vpack.c.b16 %v2571, %v2569
        %v2644 = vpack.c.b16 %v2572, %v2570
        %v2645 = vpack.c.b16 %v2575, %v2573
        %v2646 = vpack.c.b16 %v2576, %v2574
        %v2647 = vpack.c.b16 %v2579, %v2577
        %v2648 = vpack.c.b16 %v2580, %v2578
        %v2649 = vpack.c.b16 %v2583, %v2581
        %v2650 = vpack.c.b16 %v2584, %v2582
        %v2651 = vpack.c.b16 %v2587, %v2585
        %v2652 = vpack.c.b16 %v2588, %v2586
        %2717 = vmatprep.subr.bf16.mxu0 %v2590
        %2718 = vmatpush1.bf16.msra.mxu0 %v2589
        %2719 = vmatprep.subr.bf16.mxu0 %v2592
        %2720 = vmatpush1.bf16.msra.mxu0 %v2591
        %2721 = vmatprep.subr.bf16.mxu0 %v2594
        %2722 = vmatpush1.bf16.msra.mxu0 %v2593
        %2723 = vmatprep.subr.bf16.mxu0 %v2596
        %2724 = vmatpush1.bf16.msra.mxu0 %v2595
        %2725 = vmatprep.subr.bf16.mxu0 %v2598
        %2726 = vmatpush1.bf16.msra.mxu0 %v2597
        %2727 = vmatprep.subr.bf16.mxu0 %v2600
        %2728 = vmatpush1.bf16.msra.mxu0 %v2599
        %2729 = vmatprep.subr.bf16.mxu0 %v2602
        %2730 = vmatpush1.bf16.msra.mxu0 %v2601
        %2731 = vmatprep.subr.bf16.mxu0 %v2604
        %2732 = vmatpush1.bf16.msra.mxu0 %v2603
        %2733 = vmatprep.subr.bf16.mxu0 %v2606
        %2734 = vmatpush1.bf16.msra.mxu0 %v2605
        %2735 = vmatprep.subr.bf16.mxu0 %v2608
        %2736 = vmatpush1.bf16.msra.mxu0 %v2607
        %2737 = vmatprep.subr.bf16.mxu0 %v2610
        %2738 = vmatpush1.bf16.msra.mxu0 %v2609
        %2739 = vmatprep.subr.bf16.mxu0 %v2612
        %2740 = vmatpush1.bf16.msra.mxu0 %v2611
        %2741 = vmatprep.subr.bf16.mxu0 %v2614
        %2742 = vmatpush1.bf16.msra.mxu0 %v2613
        %2743 = vmatprep.subr.bf16.mxu0 %v2616
        %2744 = vmatpush1.bf16.msra.mxu0 %v2615
        %2745 = vmatprep.subr.bf16.mxu0 %v2618
        %2746 = vmatpush1.bf16.msra.mxu0 %v2617
        %2747 = vmatprep.subr.bf16.mxu0 %v2620
        %2748 = vmatpush1.bf16.msra.mxu0 %v2619
        %2749 = vmatprep.mubr.bf16.mxu0 %v2330
        %2750 = vmatmul.mubr.bf16.gmra.mrb[0].mxu0 %v2329
        %v2751 = vpop.f32.mrb[0].mxu0
        %v2752 = vadd.f32 0.0, %v2751
        %v2753 = vpop.f32.mrb[0].mxu0
        %v2754 = vadd.f32 0.0, %v2753
        %v2755 = vpop.f32.mrb[0].mxu0
        %v2756 = vadd.f32 0.0, %v2755
        %v2757 = vpop.f32.mrb[0].mxu0
        %v2758 = vadd.f32 0.0, %v2757
        %2759 = vdwg.mxu0
        %2760 = vmatprep.subr.bf16.mxu0 %v2622
        %2761 = vmatpush1.bf16.msra.mxu0 %v2621
        %2762 = vmatprep.subr.bf16.mxu0 %v2624
        %2763 = vmatpush1.bf16.msra.mxu0 %v2623
        %2764 = vmatprep.subr.bf16.mxu0 %v2626
        %2765 = vmatpush1.bf16.msra.mxu0 %v2625
        %2766 = vmatprep.subr.bf16.mxu0 %v2628
        %2767 = vmatpush1.bf16.msra.mxu0 %v2627
        %2768 = vmatprep.subr.bf16.mxu0 %v2630
        %2769 = vmatpush1.bf16.msra.mxu0 %v2629
        %2770 = vmatprep.subr.bf16.mxu0 %v2632
        %2771 = vmatpush1.bf16.msra.mxu0 %v2631
        %2772 = vmatprep.subr.bf16.mxu0 %v2634
        %2773 = vmatpush1.bf16.msra.mxu0 %v2633
        %2774 = vmatprep.subr.bf16.mxu0 %v2636
        %2775 = vmatpush1.bf16.msra.mxu0 %v2635
        %2776 = vmatprep.subr.bf16.mxu0 %v2638
        %2777 = vmatpush1.bf16.msra.mxu0 %v2637
        %2778 = vmatprep.subr.bf16.mxu0 %v2640
        %2779 = vmatpush1.bf16.msra.mxu0 %v2639
        %2780 = vmatprep.subr.bf16.mxu0 %v2642
        %2781 = vmatpush1.bf16.msra.mxu0 %v2641
        %2782 = vmatprep.subr.bf16.mxu0 %v2644
        %2783 = vmatpush1.bf16.msra.mxu0 %v2643
        %2784 = vmatprep.subr.bf16.mxu0 %v2646
        %2785 = vmatpush1.bf16.msra.mxu0 %v2645
        %2786 = vmatprep.subr.bf16.mxu0 %v2648
        %2787 = vmatpush1.bf16.msra.mxu0 %v2647
        %2788 = vmatprep.subr.bf16.mxu0 %v2650
        %2789 = vmatpush1.bf16.msra.mxu0 %v2649
        %2790 = vmatprep.subr.bf16.mxu0 %v2652
        %2791 = vmatpush1.bf16.msra.mxu0 %v2651
        %2792 = vmatprep.mubr.bf16.mxu0 %v2332
        %2793 = vmatmul.mubr.bf16.gmra.mrb[0].mxu0 %v2331
        %v2794 = vpop.f32.mrb[0].mxu0
        %v2795 = vadd.f32 %v2752, %v2794
        %v2796 = vpop.f32.mrb[0].mxu0
        %v2797 = vadd.f32 %v2754, %v2796
        %v2798 = vpop.f32.mrb[0].mxu0
        %v2799 = vadd.f32 %v2756, %v2798
        %v2800 = vpop.f32.mrb[0].mxu0
        %v2801 = vadd.f32 %v2758, %v2800
        %2802 = vdwg.mxu0
        %v2803 = vadd.f32 %v1761, %v2795
        %v2804 = vadd.f32 %v1762, %v2797
        %v2805 = vadd.f32 %v1763, %v2799
        %v2806 = vadd.f32 %v1764, %v2801
        %2807 = vst [vmem:[%s369] sm:$0xff] %v2803
        %2808 = vst [vmem:[%s369 + $0x8] sm:$0xff] %v2804
        %2809 = vst [vmem:[%s369 + $0x10] sm:$0xff] %v2805
        %2810 = vst [vmem:[%s369 + $0x18] sm:$0xff] %v2806
        %s2811 = sand.u32 %s187, 1
        %s2812 = scalar_lea.sflag [#allocation4], %s2811
        %s2813 = sand.u32 %s187, 1
        %s2814 = smul.addr %s2813, 32
        %s2815 = scalar_lea.vmem [#allocation13], %s2814
        // Predicated region
        $region73: #{tpu_custom_call.1} parent=47 // pred_check
          %p2816 = pneg %p197
        $region74: #{tpu_custom_call.1} parent=47 // pred_check_branch
          %2818 = sbr.rel (%p2816) target = $region76
        $region75: #{tpu_custom_call.1} parent=47 // pred_region
          %s2820 = ssub.s32 512, 512
          %2821 = vsyncadd %s2812, %s2820
          %s2822 = smul.addr %s27, 4
          %s2823 = smul.addr %s2822, 128
          %s2824 = scalar_lea.hbm %s7, %s2823
          %s2825 = sshll.u32 %s2815, 4
          %s2826 = int_to_ptr.vmem [resolvable:$true] %s2825
          %2831 = dma.vmem_to_hbm [thread:$0]  %s2826, 512, %s2824, %s2812, 256, 256, 16
        $region76: #{tpu_custom_call.1} parent=47 // pred_fallthru
          _
      $region48: #{tpu_custom_call.1} parent=5 // pred_fallthru
        _
      %p2832 = scmp.le.s32.totalorder 2, %s22
      // Predicated region
      $region77: #{tpu_custom_call.1} parent=5 // pred_check
        %p2833 = pneg %p2832
      $region78: #{tpu_custom_call.1} parent=5 // pred_check_branch
        %2835 = sbr.rel (%p2833) target = $region80
      $region79: #{tpu_custom_call.1} parent=5 // pred_region
        %s2836 = ssub.s32 %s22, 2
        // Predicated region
        $region81: #{tpu_custom_call.1} parent=79 // pred_check
          %p2837 = pneg %p203
        $region82: #{tpu_custom_call.1} parent=79 // pred_check_branch
          %2839 = sbr.rel (%p2837) target = $region84
        $region83: #{tpu_custom_call.1} parent=79 // pred_region
          %s2840 = sand.u32 %s188, 1
          %s2841 = scalar_lea.sflag [#allocation4], %s2840
          %s2842 = sand.u32 %s188, 1
          %s2843 = smul.addr %s2842, 32
          %s2844 = scalar_lea.vmem [#allocation13], %s2843
          %2845 = dma.done %s2841, 512
        $region84: #{tpu_custom_call.1} parent=79 // pred_fallthru
          _
      $region80: #{tpu_custom_call.1} parent=5 // pred_fallthru
        _
    $region6: #{tpu_custom_call.1} parent=1 // loop_footer
      %s26 = sadd.s32 1, %s22
    $region7: #{tpu_custom_call.1} parent=1 // loop_footer_branch
      %21 = sbr.rel target = $region3
    $region8: #{tpu_custom_call.1} parent=1 // loop_exit
      _
    %2846 = vsyncpa [#allocation3], 1
    %s2847 = scalar_lea.sflag [#allocation3], 1
    %2848 = vsyncpa %s2847, 1
    %2849 = vsyncpa [#allocation6], 1
    %2850 = vsyncpa [#allocation9], 1
    %2851 = vsyncpa [#allocation12], 1
    %2852 = vsyncpa [#allocation4], 1
    %s2853 = scalar_lea.sflag [#allocation4], 1
    %2854 = vsyncpa %s2853, 1

</llo_original>
